<compile_context>
chip_gen: v7x
topology: tpu7x:2x2x1
jax: 0.10.0
libtpu: 0.0.40
codegen_flags: <defaults>
</compile_context>

<pallas_src>
import jax
import jax.numpy as jnp
from jax.experimental import pallas as pl
from jax.experimental.pallas import tpu as pltpu


def make_dcgru_kernel(B, N, Din, U, S, K):
    """Builds the fused DCGRU-cell kernel for static (batch, nodes, dims)."""
    F = Din + U
    M = S * K + 1
    BN = B * N

    def kernel(cat_ref, a_ref, wxh_ref, wch_ref, b_ref, out_ref):
        f32 = jnp.float32

        def dot_diff(A, X):
            # Diffusion matmul: f32 operands, HIGHEST precision.  The Chebyshev
            # carries compound rounding over S*K steps at single-pass precision;
            # these matmuls are tiny so the extra passes cost ~nothing.
            return jnp.dot(A, X, precision=jax.lax.Precision.HIGHEST,
                           preferred_element_type=f32)

        def dot_proj(x, w):
            # Projection matmul: bf16 operands (3x MXU throughput, half the weight
            # traffic), f32 accumulation.
            return jnp.dot(x.astype(jnp.bfloat16), w, preferred_element_type=f32)

        def diffuse(X):
            # Exact transcription of the torch diffusion loop, including the
            # carry-over of x0 across supports (x1, x0 = x2, x1).
            xs = [X]
            if K > 0:
                x0 = X
                for s in range(S):
                    A = a_ref[s]                               # (N, N)
                    x1 = dot_diff(A, x0)
                    xs.append(x1)
                    for _k in range(2, K + 1):
                        x2 = 2.0 * dot_diff(A, x1) - x0
                        xs.append(x2)
                        x1, x0 = x2, x1
            return xs                                          # M terms, (N, cols)

        def to_rows(slab, w):
            # (N, B*w), col = b*w + f   ->   (B*N, w), row = b*N + n
            return jnp.concatenate(
                [slab[:, b * w:(b + 1) * w] for b in range(B)], axis=0)

        # ---- diffusion over the fused [x | h] slab (batch on lanes) ----
        cat = cat_ref[...]                                     # (N, B*F) f32
        d_cat = diffuse(cat)                                   # M terms, (N, B*F)
        d_rows = [to_rows(d, F) for d in d_cat]                # M terms, (B*N, F)

        # ---- gates r, u and the x-feature half of the candidate ----
        # wxh_ref[m] is (F, 3U) = [W_r | W_u | W_cx]; the hidden-feature rows of
        # the W_cx columns are zero (the candidate's hidden contribution is
        # projected from diffuse(r*h) below).
        z = jnp.zeros((BN, 3 * U), f32)
        for m in range(M):
            z = z + dot_proj(d_rows[m], wxh_ref[m])
        z = z + b_ref[...]                                     # [b_r | b_u | b_c]

        r = jax.nn.sigmoid(z[:, 0 * U:1 * U])
        u = jax.nn.sigmoid(z[:, 1 * U:2 * U])
        c_pre = z[:, 2 * U:3 * U]                              # x part + b_c

        # ---- candidate: diffuse(r*h) and project its hidden-feature half ----
        h_rows = d_rows[0][:, Din:]                            # undiffused h, (B*N, U)
        rh_rows = r * h_rows
        # back to batch-on-lanes (N, B*U) for the second diffusion
        rh_slab = jnp.concatenate(
            [rh_rows[b * N:(b + 1) * N, :] for b in range(B)], axis=1)
        d_rh = diffuse(rh_slab)                                # M terms, (N, B*U)
        for m in range(M):
            c_pre = c_pre + dot_proj(to_rows(d_rh[m], U), wch_ref[m])
        c = jnp.tanh(c_pre)

        # ---- GRU blend (f32 on the VPU) ----
        out_ref[...] = u * h_rows + (1.0 - u) * c              # (B*N, U), row = b*N+n

    return kernel


def dcgru_forward(inputs, hx, supports, w_ru, b_ru, w_c, b_c,
                  *, num_nodes, num_units, max_diffusion_step):
    B = inputs.shape[0]
    N, U, K = num_nodes, num_units, max_diffusion_step
    Din = inputs.shape[1] // N
    S = supports.shape[0]
    M = S * K + 1
    F = Din + U

    # [x | h] slab with the batch folded onto the lane axis: (N, B*F), col = b*F + f.
    x3 = inputs.reshape(B, N, Din).astype(jnp.float32)
    h3 = hx.reshape(B, N, U).astype(jnp.float32)
    cat = jnp.concatenate([x3, h3], axis=2)                    # (B, N, F)
    cat_slab = jnp.transpose(cat, (1, 0, 2)).reshape(N, B * F)

    # Per-term weight blocks.  Torch row layout of the gconv weights: row = f*M + m,
    # with f < Din the input features and f >= Din the hidden features.
    w_ru3 = w_ru.reshape(F, M, 2 * U).astype(jnp.float32)      # [f, m, :]
    w_c3 = w_c.reshape(F, M, U).astype(jnp.float32)
    # [W_r | W_u | W_cx] per term; zero the hidden-feature rows of the W_cx columns
    # (that contribution comes from diffuse(r*h) via the second slab).
    w_cx = jnp.concatenate([w_c3[:Din], jnp.zeros((U, M, U), jnp.float32)], axis=0)
    wxh = jnp.transpose(jnp.concatenate([w_ru3, w_cx], axis=2), (1, 0, 2))  # (M, F, 3U)
    wch = jnp.transpose(w_c3[Din:], (1, 0, 2))                              # (M, U, U)
    wxh = wxh.astype(jnp.bfloat16)
    wch = wch.astype(jnp.bfloat16)
    b_all = jnp.concatenate([b_ru, b_c]).reshape(1, 3 * U).astype(jnp.float32)

    kernel = make_dcgru_kernel(B, N, Din, U, S, K)
    # Single grid point: the whole working set is a few KiB, far below VMEM.
    # Production: grid over timesteps ("arbitrary") x batch tiles ("parallel" for the
    # two v7x TensorCores), resident weights/supports via constant index_maps,
    # vmem_limit_bytes budgeted for 64 MiB, lane-dense (B_tile, N*U) output.
    out = pl.pallas_call(
        kernel,
        out_shape=jax.ShapeDtypeStruct((B * N, U), jnp.float32),
        in_specs=[pl.BlockSpec(memory_space=pltpu.MemorySpace.VMEM)] * 5,
        out_specs=pl.BlockSpec(memory_space=pltpu.MemorySpace.VMEM),
    )(cat_slab, supports.astype(jnp.float32), wxh, wch, b_all)

    # rows are b*N + n  ->  (B, N*U), matching the torch output layout.
    return out.reshape(B, N * U)


def dcgru_reference(inputs, hx, supports, w_ru, b_ru, w_c, b_c, N, U, K):
    """Pure-JAX transcription of the PyTorch forward (for verification).

    Mirrors the torch code exactly, including the carry-over of x0 across supports
    inside _gconv.  HIGHEST matmul precision so it tracks the f32 torch cell.
    """
    B = inputs.shape[0]
    Din = inputs.shape[1] // N
    S = supports.shape[0]
    hi = jax.lax.Precision.HIGHEST

    def gconv(state, w, b, out_size):
        xi = inputs.reshape(B, N, Din)
        st = state.reshape(B, N, -1)
        cat = jnp.concatenate([xi, st], axis=2)                  # (B, N, F)
        F = cat.shape[-1]
        x0 = jnp.transpose(cat, (1, 2, 0)).reshape(N, F * B)
        xs = [x0]
        if K > 0:
            for s in range(S):
                A = supports[s]
                x1 = jnp.dot(A, x0, precision=hi)
                xs.append(x1)
                for _k in range(2, K + 1):
                    x2 = 2.0 * jnp.dot(A, x1, precision=hi) - x0
                    xs.append(x2)
                    x1, x0 = x2, x1                              # carry-over, as in torch
        M = len(xs)
        xst = jnp.stack(xs, axis=0).reshape(M, N, F, B)
        xst = jnp.transpose(xst, (3, 1, 2, 0)).reshape(B * N, F * M)
        val = jnp.dot(xst, w, precision=hi) + b
        return val.reshape(B, N * out_size)

    value = jax.nn.sigmoid(gconv(hx, w_ru, b_ru, 2 * U)).reshape(B, N, 2 * U)
    r = value[..., :U].reshape(B, N * U)
    u = value[..., U:].reshape(B, N * U)
    c = jnp.tanh(gconv(r * hx, w_c, b_c, U))
    return u * hx + (1.0 - u) * c


if __name__ == "__main__":
    # Small, deterministic configuration (dual_random_walk -> 2 supports).
    B, N, Din, U, K, S = 2, 16, 2, 8, 2, 2
    M = S * K + 1
    F = Din + U

    key = jax.random.PRNGKey(0)
    k1, k2, k3, k4, k5 = jax.random.split(key, 5)

    inputs = jax.random.normal(k1, (B, N * Din), jnp.float32)
    hx = jax.random.normal(k2, (B, N * U), jnp.float32)

    # Dense dual-random-walk supports built from a random non-negative adjacency.
    # (torch.sparse.mm supports are densified to (N, N) -- no sparse matmul on MXU.)
    adj = jax.random.uniform(k3, (N, N), jnp.float32) + 0.1
    p_fwd = adj / jnp.sum(adj, axis=1, keepdims=True)
    p_bwd = adj.T / jnp.sum(adj.T, axis=1, keepdims=True)
    supports = jnp.stack([p_fwd.T, p_bwd.T], axis=0).astype(jnp.float32)

    # gconv params (xavier-normal weights; biases: 1.0 for r/u gate, 0.0 for candidate).
    def xavier_normal(k, shape):
        std = (2.0 / (shape[0] + shape[1])) ** 0.5
        return std * jax.random.normal(k, shape, jnp.float32)

    w_ru = xavier_normal(k4, (F * M, 2 * U))
    w_c = xavier_normal(k5, (F * M, U))
    b_ru = jnp.full((2 * U,), 1.0, jnp.float32)      # bias_start = 1.0
    b_c = jnp.zeros((U,), jnp.float32)               # bias_start = 0.0

    out = dcgru_forward(inputs, hx, supports, w_ru, b_ru, w_c, b_c,
                        num_nodes=N, num_units=U, max_diffusion_step=K)
    out = jax.block_until_ready(out)

    ref = dcgru_reference(inputs, hx, supports, w_ru, b_ru, w_c, b_c, N, U, K)

    assert out.shape == (B, N * U), out.shape
    assert bool(jnp.all(jnp.isfinite(out)))
    # Tolerance covers the bf16-operand projection matmuls (diffusion + reference
    # both run at HIGHEST / ~f32 precision, gate math is f32).
    assert bool(jnp.allclose(out, ref, atol=2e-2, rtol=2e-2)), (
        float(jnp.max(jnp.abs(out - ref))))

    print("KERNEL_OK")
</pallas_src>

<mosaic_0001>
module attributes {stable_mosaic.version = 11 : i64} {
  func.func @kernel(%arg0: memref<16x20xf32, #tpu.memory_space<vmem>>, %arg1: memref<2x16x16xf32, #tpu.memory_space<vmem>>, %arg2: memref<5x10x24xbf16, #tpu.memory_space<vmem>>, %arg3: memref<5x8x8xbf16, #tpu.memory_space<vmem>>, %arg4: memref<1x24xf32, #tpu.memory_space<vmem>>, %arg5: memref<32x8xf32, #tpu.memory_space<vmem>>) attributes {dimension_semantics = [], scalar_prefetch = 0 : i64, scratch_operands = 0 : i64, tpu.core_type = #tpu.core_type<tc>} {
    %c0 = arith.constant 0 : index
    %c0_0 = arith.constant 0 : index
    %0 = vector.load %arg0[%c0, %c0_0] : memref<16x20xf32, #tpu.memory_space<vmem>>, vector<16x20xf32>
    %c0_1 = arith.constant 0 : index
    %c0_2 = arith.constant 0 : index
    %c0_3 = arith.constant 0 : index
    %1 = vector.load %arg1[%c0_1, %c0_2, %c0_3] : memref<2x16x16xf32, #tpu.memory_space<vmem>>, vector<1x16x16xf32>
    %2 = vector.shape_cast %1 : vector<1x16x16xf32> to vector<16x16xf32>
    %cst = arith.constant dense<0.000000e+00> : vector<16x20xf32>
    %3 = tpu.matmul %2, %0, %cst {dimension_numbers = #tpu.dot_dimension_numbers<[1], [0], [0], [1], [0, 0, 1, 1], [], []>, precision = #tpu.contract_precision<fp32>} : vector<16x16xf32>, vector<16x20xf32>, vector<16x20xf32> -> vector<16x20xf32>
    %cst_4 = arith.constant dense<0.000000e+00> : vector<16x20xf32>
    %4 = tpu.matmul %2, %3, %cst_4 {dimension_numbers = #tpu.dot_dimension_numbers<[1], [0], [0], [1], [0, 0, 1, 1], [], []>, precision = #tpu.contract_precision<fp32>} : vector<16x16xf32>, vector<16x20xf32>, vector<16x20xf32> -> vector<16x20xf32>
    %cst_5 = arith.constant 2.000000e+00 : f32
    %5 = vector.broadcast %cst_5 : f32 to vector<16x20xf32>
    %6 = arith.mulf %5, %4 : vector<16x20xf32>
    %7 = arith.subf %6, %0 : vector<16x20xf32>
    %c1 = arith.constant 1 : index
    %c0_6 = arith.constant 0 : index
    %c0_7 = arith.constant 0 : index
    %8 = vector.load %arg1[%c1, %c0_6, %c0_7] : memref<2x16x16xf32, #tpu.memory_space<vmem>>, vector<1x16x16xf32>
    %9 = vector.shape_cast %8 : vector<1x16x16xf32> to vector<16x16xf32>
    %cst_8 = arith.constant dense<0.000000e+00> : vector<16x20xf32>
    %10 = tpu.matmul %9, %3, %cst_8 {dimension_numbers = #tpu.dot_dimension_numbers<[1], [0], [0], [1], [0, 0, 1, 1], [], []>, precision = #tpu.contract_precision<fp32>} : vector<16x16xf32>, vector<16x20xf32>, vector<16x20xf32> -> vector<16x20xf32>
    %cst_9 = arith.constant dense<0.000000e+00> : vector<16x20xf32>
    %11 = tpu.matmul %9, %10, %cst_9 {dimension_numbers = #tpu.dot_dimension_numbers<[1], [0], [0], [1], [0, 0, 1, 1], [], []>, precision = #tpu.contract_precision<fp32>} : vector<16x16xf32>, vector<16x20xf32>, vector<16x20xf32> -> vector<16x20xf32>
    %cst_10 = arith.constant 2.000000e+00 : f32
    %12 = vector.broadcast %cst_10 : f32 to vector<16x20xf32>
    %13 = arith.mulf %12, %11 : vector<16x20xf32>
    %14 = arith.subf %13, %3 : vector<16x20xf32>
    %15 = vector.extract_strided_slice %0 {offsets = [0, 0], sizes = [16, 10], strides = [1, 1]} : vector<16x20xf32> to vector<16x10xf32>
    %16 = vector.extract_strided_slice %0 {offsets = [0, 10], sizes = [16, 10], strides = [1, 1]} : vector<16x20xf32> to vector<16x10xf32>
    %17 = tpu.concatenate %15, %16 in 0 : vector<16x10xf32>, vector<16x10xf32> -> vector<32x10xf32>
    %18 = vector.extract_strided_slice %3 {offsets = [0, 0], sizes = [16, 10], strides = [1, 1]} : vector<16x20xf32> to vector<16x10xf32>
    %19 = vector.extract_strided_slice %3 {offsets = [0, 10], sizes = [16, 10], strides = [1, 1]} : vector<16x20xf32> to vector<16x10xf32>
    %20 = tpu.concatenate %18, %19 in 0 : vector<16x10xf32>, vector<16x10xf32> -> vector<32x10xf32>
    %21 = vector.extract_strided_slice %7 {offsets = [0, 0], sizes = [16, 10], strides = [1, 1]} : vector<16x20xf32> to vector<16x10xf32>
    %22 = vector.extract_strided_slice %7 {offsets = [0, 10], sizes = [16, 10], strides = [1, 1]} : vector<16x20xf32> to vector<16x10xf32>
    %23 = tpu.concatenate %21, %22 in 0 : vector<16x10xf32>, vector<16x10xf32> -> vector<32x10xf32>
    %24 = vector.extract_strided_slice %10 {offsets = [0, 0], sizes = [16, 10], strides = [1, 1]} : vector<16x20xf32> to vector<16x10xf32>
    %25 = vector.extract_strided_slice %10 {offsets = [0, 10], sizes = [16, 10], strides = [1, 1]} : vector<16x20xf32> to vector<16x10xf32>
    %26 = tpu.concatenate %24, %25 in 0 : vector<16x10xf32>, vector<16x10xf32> -> vector<32x10xf32>
    %27 = vector.extract_strided_slice %14 {offsets = [0, 0], sizes = [16, 10], strides = [1, 1]} : vector<16x20xf32> to vector<16x10xf32>
    %28 = vector.extract_strided_slice %14 {offsets = [0, 10], sizes = [16, 10], strides = [1, 1]} : vector<16x20xf32> to vector<16x10xf32>
    %29 = tpu.concatenate %27, %28 in 0 : vector<16x10xf32>, vector<16x10xf32> -> vector<32x10xf32>
    %cst_11 = arith.constant 0.000000e+00 : f32
    %30 = vector.broadcast %cst_11 : f32 to vector<32x24xf32>
    %c0_12 = arith.constant 0 : index
    %c0_13 = arith.constant 0 : index
    %c0_14 = arith.constant 0 : index
    %31 = vector.load %arg2[%c0_12, %c0_13, %c0_14] : memref<5x10x24xbf16, #tpu.memory_space<vmem>>, vector<1x10x24xbf16>
    %32 = vector.shape_cast %31 : vector<1x10x24xbf16> to vector<10x24xbf16>
    %33 = arith.truncf %17 : vector<32x10xf32> to vector<32x10xbf16>
    %cst_15 = arith.constant dense<0.000000e+00> : vector<32x24xf32>
    %34 = tpu.matmul %33, %32, %cst_15 {dimension_numbers = #tpu.dot_dimension_numbers<[1], [0], [0], [1], [0, 0, 1, 1], [], []>} : vector<32x10xbf16>, vector<10x24xbf16>, vector<32x24xf32> -> vector<32x24xf32>
    %35 = arith.addf %30, %34 : vector<32x24xf32>
    %c1_16 = arith.constant 1 : index
    %c0_17 = arith.constant 0 : index
    %c0_18 = arith.constant 0 : index
    %36 = vector.load %arg2[%c1_16, %c0_17, %c0_18] : memref<5x10x24xbf16, #tpu.memory_space<vmem>>, vector<1x10x24xbf16>
    %37 = vector.shape_cast %36 : vector<1x10x24xbf16> to vector<10x24xbf16>
    %38 = arith.truncf %20 : vector<32x10xf32> to vector<32x10xbf16>
    %cst_19 = arith.constant dense<0.000000e+00> : vector<32x24xf32>
    %39 = tpu.matmul %38, %37, %cst_19 {dimension_numbers = #tpu.dot_dimension_numbers<[1], [0], [0], [1], [0, 0, 1, 1], [], []>} : vector<32x10xbf16>, vector<10x24xbf16>, vector<32x24xf32> -> vector<32x24xf32>
    %40 = arith.addf %35, %39 : vector<32x24xf32>
    %c2 = arith.constant 2 : index
    %c0_20 = arith.constant 0 : index
    %c0_21 = arith.constant 0 : index
    %41 = vector.load %arg2[%c2, %c0_20, %c0_21] : memref<5x10x24xbf16, #tpu.memory_space<vmem>>, vector<1x10x24xbf16>
    %42 = vector.shape_cast %41 : vector<1x10x24xbf16> to vector<10x24xbf16>
    %43 = arith.truncf %23 : vector<32x10xf32> to vector<32x10xbf16>
    %cst_22 = arith.constant dense<0.000000e+00> : vector<32x24xf32>
    %44 = tpu.matmul %43, %42, %cst_22 {dimension_numbers = #tpu.dot_dimension_numbers<[1], [0], [0], [1], [0, 0, 1, 1], [], []>} : vector<32x10xbf16>, vector<10x24xbf16>, vector<32x24xf32> -> vector<32x24xf32>
    %45 = arith.addf %40, %44 : vector<32x24xf32>
    %c3 = arith.constant 3 : index
    %c0_23 = arith.constant 0 : index
    %c0_24 = arith.constant 0 : index
    %46 = vector.load %arg2[%c3, %c0_23, %c0_24] : memref<5x10x24xbf16, #tpu.memory_space<vmem>>, vector<1x10x24xbf16>
    %47 = vector.shape_cast %46 : vector<1x10x24xbf16> to vector<10x24xbf16>
    %48 = arith.truncf %26 : vector<32x10xf32> to vector<32x10xbf16>
    %cst_25 = arith.constant dense<0.000000e+00> : vector<32x24xf32>
    %49 = tpu.matmul %48, %47, %cst_25 {dimension_numbers = #tpu.dot_dimension_numbers<[1], [0], [0], [1], [0, 0, 1, 1], [], []>} : vector<32x10xbf16>, vector<10x24xbf16>, vector<32x24xf32> -> vector<32x24xf32>
    %50 = arith.addf %45, %49 : vector<32x24xf32>
    %c4 = arith.constant 4 : index
    %c0_26 = arith.constant 0 : index
    %c0_27 = arith.constant 0 : index
    %51 = vector.load %arg2[%c4, %c0_26, %c0_27] : memref<5x10x24xbf16, #tpu.memory_space<vmem>>, vector<1x10x24xbf16>
    %52 = vector.shape_cast %51 : vector<1x10x24xbf16> to vector<10x24xbf16>
    %53 = arith.truncf %29 : vector<32x10xf32> to vector<32x10xbf16>
    %cst_28 = arith.constant dense<0.000000e+00> : vector<32x24xf32>
    %54 = tpu.matmul %53, %52, %cst_28 {dimension_numbers = #tpu.dot_dimension_numbers<[1], [0], [0], [1], [0, 0, 1, 1], [], []>} : vector<32x10xbf16>, vector<10x24xbf16>, vector<32x24xf32> -> vector<32x24xf32>
    %55 = arith.addf %50, %54 : vector<32x24xf32>
    %c0_29 = arith.constant 0 : index
    %c0_30 = arith.constant 0 : index
    %56 = vector.load %arg4[%c0_29, %c0_30] : memref<1x24xf32, #tpu.memory_space<vmem>>, vector<1x24xf32>
    %57 = vector.broadcast %56 : vector<1x24xf32> to vector<32x24xf32>
    %58 = arith.addf %55, %57 : vector<32x24xf32>
    %59 = vector.extract_strided_slice %58 {offsets = [0, 0], sizes = [32, 8], strides = [1, 1]} : vector<32x24xf32> to vector<32x8xf32>
    %60 = arith.negf %59 : vector<32x8xf32>
    %61 = math.exp %60 : vector<32x8xf32>
    %cst_31 = arith.constant 1.000000e+00 : f32
    %62 = vector.broadcast %cst_31 : f32 to vector<32x8xf32>
    %63 = arith.addf %62, %61 : vector<32x8xf32>
    %64 = arith.divf %62, %63 : vector<32x8xf32>
    %65 = vector.extract_strided_slice %58 {offsets = [0, 8], sizes = [32, 8], strides = [1, 1]} : vector<32x24xf32> to vector<32x8xf32>
    %66 = arith.negf %65 : vector<32x8xf32>
    %67 = math.exp %66 : vector<32x8xf32>
    %cst_32 = arith.constant 1.000000e+00 : f32
    %68 = vector.broadcast %cst_32 : f32 to vector<32x8xf32>
    %69 = arith.addf %68, %67 : vector<32x8xf32>
    %70 = arith.divf %68, %69 : vector<32x8xf32>
    %71 = vector.extract_strided_slice %58 {offsets = [0, 16], sizes = [32, 8], strides = [1, 1]} : vector<32x24xf32> to vector<32x8xf32>
    %72 = vector.extract_strided_slice %17 {offsets = [0, 2], sizes = [32, 8], strides = [1, 1]} : vector<32x10xf32> to vector<32x8xf32>
    %73 = arith.mulf %64, %72 : vector<32x8xf32>
    %74 = vector.extract_strided_slice %73 {offsets = [0, 0], sizes = [16, 8], strides = [1, 1]} : vector<32x8xf32> to vector<16x8xf32>
    %75 = vector.extract_strided_slice %73 {offsets = [16, 0], sizes = [16, 8], strides = [1, 1]} : vector<32x8xf32> to vector<16x8xf32>
    %76 = tpu.concatenate %74, %75 in 1 : vector<16x8xf32>, vector<16x8xf32> -> vector<16x16xf32>
    %c0_33 = arith.constant 0 : index
    %c0_34 = arith.constant 0 : index
    %c0_35 = arith.constant 0 : index
    %77 = vector.load %arg1[%c0_33, %c0_34, %c0_35] : memref<2x16x16xf32, #tpu.memory_space<vmem>>, vector<1x16x16xf32>
    %78 = vector.shape_cast %77 : vector<1x16x16xf32> to vector<16x16xf32>
    %cst_36 = arith.constant dense<0.000000e+00> : vector<16x16xf32>
    %79 = tpu.matmul %78, %76, %cst_36 {dimension_numbers = #tpu.dot_dimension_numbers<[1], [0], [0], [1], [0, 0, 1, 1], [], []>, precision = #tpu.contract_precision<fp32>} : vector<16x16xf32>, vector<16x16xf32>, vector<16x16xf32> -> vector<16x16xf32>
    %cst_37 = arith.constant dense<0.000000e+00> : vector<16x16xf32>
    %80 = tpu.matmul %78, %79, %cst_37 {dimension_numbers = #tpu.dot_dimension_numbers<[1], [0], [0], [1], [0, 0, 1, 1], [], []>, precision = #tpu.contract_precision<fp32>} : vector<16x16xf32>, vector<16x16xf32>, vector<16x16xf32> -> vector<16x16xf32>
    %cst_38 = arith.constant 2.000000e+00 : f32
    %81 = vector.broadcast %cst_38 : f32 to vector<16x16xf32>
    %82 = arith.mulf %81, %80 : vector<16x16xf32>
    %83 = arith.subf %82, %76 : vector<16x16xf32>
    %c1_39 = arith.constant 1 : index
    %c0_40 = arith.constant 0 : index
    %c0_41 = arith.constant 0 : index
    %84 = vector.load %arg1[%c1_39, %c0_40, %c0_41] : memref<2x16x16xf32, #tpu.memory_space<vmem>>, vector<1x16x16xf32>
    %85 = vector.shape_cast %84 : vector<1x16x16xf32> to vector<16x16xf32>
    %cst_42 = arith.constant dense<0.000000e+00> : vector<16x16xf32>
    %86 = tpu.matmul %85, %79, %cst_42 {dimension_numbers = #tpu.dot_dimension_numbers<[1], [0], [0], [1], [0, 0, 1, 1], [], []>, precision = #tpu.contract_precision<fp32>} : vector<16x16xf32>, vector<16x16xf32>, vector<16x16xf32> -> vector<16x16xf32>
    %cst_43 = arith.constant dense<0.000000e+00> : vector<16x16xf32>
    %87 = tpu.matmul %85, %86, %cst_43 {dimension_numbers = #tpu.dot_dimension_numbers<[1], [0], [0], [1], [0, 0, 1, 1], [], []>, precision = #tpu.contract_precision<fp32>} : vector<16x16xf32>, vector<16x16xf32>, vector<16x16xf32> -> vector<16x16xf32>
    %cst_44 = arith.constant 2.000000e+00 : f32
    %88 = vector.broadcast %cst_44 : f32 to vector<16x16xf32>
    %89 = arith.mulf %88, %87 : vector<16x16xf32>
    %90 = arith.subf %89, %79 : vector<16x16xf32>
    %91 = vector.extract_strided_slice %76 {offsets = [0, 0], sizes = [16, 8], strides = [1, 1]} : vector<16x16xf32> to vector<16x8xf32>
    %92 = vector.extract_strided_slice %76 {offsets = [0, 8], sizes = [16, 8], strides = [1, 1]} : vector<16x16xf32> to vector<16x8xf32>
    %93 = tpu.concatenate %91, %92 in 0 : vector<16x8xf32>, vector<16x8xf32> -> vector<32x8xf32>
    %c0_45 = arith.constant 0 : index
    %c0_46 = arith.constant 0 : index
    %c0_47 = arith.constant 0 : index
    %94 = vector.load %arg3[%c0_45, %c0_46, %c0_47] : memref<5x8x8xbf16, #tpu.memory_space<vmem>>, vector<1x8x8xbf16>
    %95 = vector.shape_cast %94 : vector<1x8x8xbf16> to vector<8x8xbf16>
    %96 = arith.truncf %93 : vector<32x8xf32> to vector<32x8xbf16>
    %cst_48 = arith.constant dense<0.000000e+00> : vector<32x8xf32>
    %97 = tpu.matmul %96, %95, %cst_48 {dimension_numbers = #tpu.dot_dimension_numbers<[1], [0], [0], [1], [0, 0, 1, 1], [], []>} : vector<32x8xbf16>, vector<8x8xbf16>, vector<32x8xf32> -> vector<32x8xf32>
    %98 = arith.addf %71, %97 : vector<32x8xf32>
    %99 = vector.extract_strided_slice %79 {offsets = [0, 0], sizes = [16, 8], strides = [1, 1]} : vector<16x16xf32> to vector<16x8xf32>
    %100 = vector.extract_strided_slice %79 {offsets = [0, 8], sizes = [16, 8], strides = [1, 1]} : vector<16x16xf32> to vector<16x8xf32>
    %101 = tpu.concatenate %99, %100 in 0 : vector<16x8xf32>, vector<16x8xf32> -> vector<32x8xf32>
    %c1_49 = arith.constant 1 : index
    %c0_50 = arith.constant 0 : index
    %c0_51 = arith.constant 0 : index
    %102 = vector.load %arg3[%c1_49, %c0_50, %c0_51] : memref<5x8x8xbf16, #tpu.memory_space<vmem>>, vector<1x8x8xbf16>
    %103 = vector.shape_cast %102 : vector<1x8x8xbf16> to vector<8x8xbf16>
    %104 = arith.truncf %101 : vector<32x8xf32> to vector<32x8xbf16>
    %cst_52 = arith.constant dense<0.000000e+00> : vector<32x8xf32>
    %105 = tpu.matmul %104, %103, %cst_52 {dimension_numbers = #tpu.dot_dimension_numbers<[1], [0], [0], [1], [0, 0, 1, 1], [], []>} : vector<32x8xbf16>, vector<8x8xbf16>, vector<32x8xf32> -> vector<32x8xf32>
    %106 = arith.addf %98, %105 : vector<32x8xf32>
    %107 = vector.extract_strided_slice %83 {offsets = [0, 0], sizes = [16, 8], strides = [1, 1]} : vector<16x16xf32> to vector<16x8xf32>
    %108 = vector.extract_strided_slice %83 {offsets = [0, 8], sizes = [16, 8], strides = [1, 1]} : vector<16x16xf32> to vector<16x8xf32>
    %109 = tpu.concatenate %107, %108 in 0 : vector<16x8xf32>, vector<16x8xf32> -> vector<32x8xf32>
    %c2_53 = arith.constant 2 : index
    %c0_54 = arith.constant 0 : index
    %c0_55 = arith.constant 0 : index
    %110 = vector.load %arg3[%c2_53, %c0_54, %c0_55] : memref<5x8x8xbf16, #tpu.memory_space<vmem>>, vector<1x8x8xbf16>
    %111 = vector.shape_cast %110 : vector<1x8x8xbf16> to vector<8x8xbf16>
    %112 = arith.truncf %109 : vector<32x8xf32> to vector<32x8xbf16>
    %cst_56 = arith.constant dense<0.000000e+00> : vector<32x8xf32>
    %113 = tpu.matmul %112, %111, %cst_56 {dimension_numbers = #tpu.dot_dimension_numbers<[1], [0], [0], [1], [0, 0, 1, 1], [], []>} : vector<32x8xbf16>, vector<8x8xbf16>, vector<32x8xf32> -> vector<32x8xf32>
    %114 = arith.addf %106, %113 : vector<32x8xf32>
    %115 = vector.extract_strided_slice %86 {offsets = [0, 0], sizes = [16, 8], strides = [1, 1]} : vector<16x16xf32> to vector<16x8xf32>
    %116 = vector.extract_strided_slice %86 {offsets = [0, 8], sizes = [16, 8], strides = [1, 1]} : vector<16x16xf32> to vector<16x8xf32>
    %117 = tpu.concatenate %115, %116 in 0 : vector<16x8xf32>, vector<16x8xf32> -> vector<32x8xf32>
    %c3_57 = arith.constant 3 : index
    %c0_58 = arith.constant 0 : index
    %c0_59 = arith.constant 0 : index
    %118 = vector.load %arg3[%c3_57, %c0_58, %c0_59] : memref<5x8x8xbf16, #tpu.memory_space<vmem>>, vector<1x8x8xbf16>
    %119 = vector.shape_cast %118 : vector<1x8x8xbf16> to vector<8x8xbf16>
    %120 = arith.truncf %117 : vector<32x8xf32> to vector<32x8xbf16>
    %cst_60 = arith.constant dense<0.000000e+00> : vector<32x8xf32>
    %121 = tpu.matmul %120, %119, %cst_60 {dimension_numbers = #tpu.dot_dimension_numbers<[1], [0], [0], [1], [0, 0, 1, 1], [], []>} : vector<32x8xbf16>, vector<8x8xbf16>, vector<32x8xf32> -> vector<32x8xf32>
    %122 = arith.addf %114, %121 : vector<32x8xf32>
    %123 = vector.extract_strided_slice %90 {offsets = [0, 0], sizes = [16, 8], strides = [1, 1]} : vector<16x16xf32> to vector<16x8xf32>
    %124 = vector.extract_strided_slice %90 {offsets = [0, 8], sizes = [16, 8], strides = [1, 1]} : vector<16x16xf32> to vector<16x8xf32>
    %125 = tpu.concatenate %123, %124 in 0 : vector<16x8xf32>, vector<16x8xf32> -> vector<32x8xf32>
    %c4_61 = arith.constant 4 : index
    %c0_62 = arith.constant 0 : index
    %c0_63 = arith.constant 0 : index
    %126 = vector.load %arg3[%c4_61, %c0_62, %c0_63] : memref<5x8x8xbf16, #tpu.memory_space<vmem>>, vector<1x8x8xbf16>
    %127 = vector.shape_cast %126 : vector<1x8x8xbf16> to vector<8x8xbf16>
    %128 = arith.truncf %125 : vector<32x8xf32> to vector<32x8xbf16>
    %cst_64 = arith.constant dense<0.000000e+00> : vector<32x8xf32>
    %129 = tpu.matmul %128, %127, %cst_64 {dimension_numbers = #tpu.dot_dimension_numbers<[1], [0], [0], [1], [0, 0, 1, 1], [], []>} : vector<32x8xbf16>, vector<8x8xbf16>, vector<32x8xf32> -> vector<32x8xf32>
    %130 = arith.addf %122, %129 : vector<32x8xf32>
    %131 = math.tanh %130 : vector<32x8xf32>
    %132 = arith.mulf %70, %72 : vector<32x8xf32>
    %cst_65 = arith.constant 1.000000e+00 : f32
    %133 = vector.broadcast %cst_65 : f32 to vector<32x8xf32>
    %134 = arith.subf %133, %70 : vector<32x8xf32>
    %135 = arith.mulf %134, %131 : vector<32x8xf32>
    %136 = arith.addf %132, %135 : vector<32x8xf32>
    %c0_66 = arith.constant 0 : index
    %c0_67 = arith.constant 0 : index
    %137 = vector.load %arg5[%c0_66, %c0_67] : memref<32x8xf32, #tpu.memory_space<vmem>>, vector<32x8xf32>
    tpu.vector_store %arg5[%c0_66, %c0_67], %136 {strides = array<i32>} : memref<32x8xf32, #tpu.memory_space<vmem>>, vector<32x8xf32>,
    return
  }
}

</mosaic_0001>

<llo_original>
// kernel: tpu_custom_call.1
$region0: #{tpu_custom_call.1}
  #allocation0 [shape = 'u32[]', space=smem, size = 0x4, offset = 0x4, fixed_abs, tag = 'smem constant byte address 0x4 - core index']
  #allocation1 [shape = 'u32[144,128]{1,0:T(1,128)}', space=vmem, size = 0x12000, scoped, tag = 'internal scratch']
  %s0 = inlined_call_operand.hbm [shape: f32[16,20], index: 0, kind: input, shape index: {}]
  %s1 = inlined_call_operand.hbm [shape: f32[2,16,16], index: 1, kind: input, shape index: {}]
  %s2 = inlined_call_operand.hbm [shape: bf16[5,10,24], index: 2, kind: input, shape index: {}]
  %s3 = inlined_call_operand.hbm [shape: bf16[5,8,8], index: 3, kind: input, shape index: {}]
  %s4 = inlined_call_operand.vmem [shape: f32[1,24], index: 4, kind: input, shape index: {}]
  %s5 = inlined_call_operand.vmem [shape: f32[32,8], index: 5, kind: output, shape index: {}]
  %s6 = sld [smem:[#allocation0]]
  $region46: #{tpu_custom_call.1} parent=0
    _
  %s8 = ssub.s32 1, %s6
  %s9 = scalar_select 0, %s8, %s6
  $region1: #{tpu_custom_call.1} parent=0
    #allocation2 [shape = 'u8[8192]{0}', space=vmem, size = 0x2000, scoped, tag = 'input window, operand 0, single buffered']
    #allocation3 [shape = 's32[1]{0}', space=sflag, size = 0x4, scoped, tag = 'scoped memory for tpu_custom_call.1']
    #allocation4 [shape = 'u8[16384]{0}', space=vmem, size = 0x4000, scoped, tag = 'input window, operand 1, single buffered']
    #allocation5 [shape = 's32[1]{0}', space=sflag, size = 0x4, scoped, tag = 'scoped memory for tpu_custom_call.1']
    #allocation6 [shape = 'u8[20480]{0}', space=vmem, size = 0x5000, scoped, tag = 'input window, operand 2, single buffered']
    #allocation7 [shape = 'u8[10240]{0}', space=vmem, size = 0x2800, scoped, tag = 'input window, operand 3, single buffered']
    #allocation8 [shape = 's32[1]{0}', space=sflag, size = 0x4, scoped, tag = 'scoped memory for tpu_custom_call.1']
    %10 = vsyncpa [#allocation3], 0
    %11 = vsyncpa [#allocation5], 0
    %12 = vsyncpa [#allocation8], 0
    // Predicated region
    $region2: #{tpu_custom_call.1} parent=1 // pred_check
      _
    $region3: #{tpu_custom_call.1} parent=1 // pred_check_branch
      %14 = sbr.rel (0) target = $region5
    $region4: #{tpu_custom_call.1} parent=1 // pred_region
      %s16 = ssub.s32 256, 256
      %17 = vsyncadd [#allocation3], %s16
      %s18 = sshll.u32 [#allocation2], 4
      %s19 = int_to_ptr.vmem [resolvable:$true] %s18
      %24 = dma.hbm_to_vmem [thread:$0]  %s0, 256, %s19, [#allocation3], 128, 128, 8
    $region5: #{tpu_custom_call.1} parent=1 // pred_fallthru
      _
    // Predicated region
    $region6: #{tpu_custom_call.1} parent=1 // pred_check
      _
    $region7: #{tpu_custom_call.1} parent=1 // pred_check_branch
      %26 = sbr.rel (0) target = $region9
    $region8: #{tpu_custom_call.1} parent=1 // pred_region
      %s28 = ssub.s32 512, 512
      %29 = vsyncadd [#allocation5], %s28
      %s30 = sshll.u32 [#allocation4], 4
      %s31 = int_to_ptr.vmem [resolvable:$true] %s30
      %36 = dma.hbm_to_vmem [thread:$0]  %s1, 512, %s31, [#allocation5], 128, 128, 8
    $region9: #{tpu_custom_call.1} parent=1 // pred_fallthru
      _
    // Predicated region
    $region10: #{tpu_custom_call.1} parent=1 // pred_check
      _
    $region11: #{tpu_custom_call.1} parent=1 // pred_check_branch
      %38 = sbr.rel (0) target = $region13
    $region12: #{tpu_custom_call.1} parent=1 // pred_region
      %s40 = ssub.s32 640, 640
      %41 = vsyncadd [#allocation5], %s40
      %s42 = sshll.u32 [#allocation6], 4
      %s43 = int_to_ptr.vmem [resolvable:$true] %s42
      %48 = dma.hbm_to_vmem [thread:$0]  %s2, 640, %s43, [#allocation5], 64, 64, 4
    $region13: #{tpu_custom_call.1} parent=1 // pred_fallthru
      _
    // Predicated region
    $region14: #{tpu_custom_call.1} parent=1 // pred_check
      _
    $region15: #{tpu_custom_call.1} parent=1 // pred_check_branch
      %50 = sbr.rel (0) target = $region17
    $region16: #{tpu_custom_call.1} parent=1 // pred_region
      %s52 = ssub.s32 320, 320
      %53 = vsyncadd [#allocation8], %s52
      %s54 = sshll.u32 [#allocation7], 4
      %s55 = int_to_ptr.vmem [resolvable:$true] %s54
      %60 = dma.hbm_to_vmem [thread:$0]  %s3, 320, %s55, [#allocation8], 64, 64, 4
    $region17: #{tpu_custom_call.1} parent=1 // pred_fallthru
      _
    // Predicated region
    $region18: #{tpu_custom_call.1} parent=1 // pred_check
      _
    $region19: #{tpu_custom_call.1} parent=1 // pred_check_branch
      %62 = sbr.rel (0) target = $region21
    $region20: #{tpu_custom_call.1} parent=1 // pred_region
      _
    $region21: #{tpu_custom_call.1} parent=1 // pred_fallthru
      _
    // Predicated region
    $region22: #{tpu_custom_call.1} parent=1 // pred_check
      _
    $region23: #{tpu_custom_call.1} parent=1 // pred_check_branch
      %64 = sbr.rel (0) target = $region25
    $region24: #{tpu_custom_call.1} parent=1 // pred_region
      %65 = dma.done [#allocation3], 256
    $region25: #{tpu_custom_call.1} parent=1 // pred_fallthru
      _
    // Predicated region
    $region26: #{tpu_custom_call.1} parent=1 // pred_check
      _
    $region27: #{tpu_custom_call.1} parent=1 // pred_check_branch
      %67 = sbr.rel (0) target = $region29
    $region28: #{tpu_custom_call.1} parent=1 // pred_region
      %68 = dma.done [#allocation5], 512
    $region29: #{tpu_custom_call.1} parent=1 // pred_fallthru
      _
    // Predicated region
    $region30: #{tpu_custom_call.1} parent=1 // pred_check
      _
    $region31: #{tpu_custom_call.1} parent=1 // pred_check_branch
      %70 = sbr.rel (0) target = $region33
    $region32: #{tpu_custom_call.1} parent=1 // pred_region
      %71 = dma.done [#allocation5], 640
    $region33: #{tpu_custom_call.1} parent=1 // pred_fallthru
      _
    // Predicated region
    $region34: #{tpu_custom_call.1} parent=1 // pred_check
      _
    $region35: #{tpu_custom_call.1} parent=1 // pred_check_branch
      %73 = sbr.rel (0) target = $region37
    $region36: #{tpu_custom_call.1} parent=1 // pred_region
      %74 = dma.done [#allocation8], 320
    $region37: #{tpu_custom_call.1} parent=1 // pred_fallthru
      _
    %v76 = vld [vmem:[#allocation2] sm:$0xff]
    %v77 = vld [vmem:[#allocation2 + $0x8] sm:$0xff]
    %v78 = vld [vmem:[#allocation4] sm:$0xff]
    %v79 = vld [vmem:[#allocation4 + $0x8] sm:$0xff]
    %vm80 = vcmask 130048
    %v82 = vsel %vm80, %v78, 0
    %v85 = vsel %vm80, %v79, 0
    %87 = vmatprep.subr.mxu0 0.0
    %v88 = vand.u32 %v76, 4294901760
    %89 = vmatpush1.msra.mxu0 %v88
    %90 = vmatprep.subr.mxu0 0.0
    %v91 = vand.u32 %v77, 4294901760
    %92 = vmatpush1.msra.mxu0 %v91
    %93 = vmatprep.subr.mxu0 0.0
    %94 = vmatpush1.msra.mxu0 0.0
    %95 = vmatprep.subr.mxu0 0.0
    %96 = vmatpush1.msra.mxu0 0.0
    %97 = vmatprep.subr.mxu0 0.0
    %98 = vmatpush1.msra.mxu0 0.0
    %99 = vmatprep.subr.mxu0 0.0
    %100 = vmatpush1.msra.mxu0 0.0
    %101 = vmatprep.subr.mxu0 0.0
    %102 = vmatpush1.msra.mxu0 0.0
    %103 = vmatprep.subr.mxu0 0.0
    %104 = vmatpush1.msra.mxu0 0.0
    %105 = vmatprep.subr.mxu0 0.0
    %106 = vmatpush1.msra.mxu0 0.0
    %107 = vmatprep.subr.mxu0 0.0
    %108 = vmatpush1.msra.mxu0 0.0
    %109 = vmatprep.subr.mxu0 0.0
    %110 = vmatpush1.msra.mxu0 0.0
    %111 = vmatprep.subr.mxu0 0.0
    %112 = vmatpush1.msra.mxu0 0.0
    %113 = vmatprep.subr.mxu0 0.0
    %114 = vmatpush1.msra.mxu0 0.0
    %115 = vmatprep.subr.mxu0 0.0
    %116 = vmatpush1.msra.mxu0 0.0
    %117 = vmatprep.subr.mxu0 0.0
    %118 = vmatpush1.msra.mxu0 0.0
    %119 = vmatprep.subr.mxu0 0.0
    %120 = vmatpush1.msra.mxu0 0.0
    %121 = vmatprep.subr.mxu0 0.0
    %122 = vmatpush1.msra.mxu0 0.0
    %123 = vmatprep.subr.mxu0 0.0
    %124 = vmatpush1.msra.mxu0 0.0
    %125 = vmatprep.subr.mxu0 0.0
    %126 = vmatpush1.msra.mxu0 0.0
    %127 = vmatprep.subr.mxu0 0.0
    %128 = vmatpush1.msra.mxu0 0.0
    %129 = vmatprep.subr.mxu0 0.0
    %130 = vmatpush1.msra.mxu0 0.0
    %131 = vmatprep.subr.mxu0 0.0
    %132 = vmatpush1.msra.mxu0 0.0
    %133 = vmatprep.subr.mxu0 0.0
    %134 = vmatpush1.msra.mxu0 0.0
    %135 = vmatprep.subr.mxu0 0.0
    %136 = vmatpush1.msra.mxu0 0.0
    %137 = vmatprep.subr.mxu0 0.0
    %138 = vmatpush1.msra.mxu0 0.0
    %139 = vmatprep.subr.mxu0 0.0
    %140 = vmatpush1.msra.mxu0 0.0
    %141 = vmatprep.subr.mxu0 0.0
    %142 = vmatpush1.msra.mxu0 0.0
    %143 = vmatprep.subr.mxu0 0.0
    %144 = vmatpush1.msra.mxu0 0.0
    %145 = vmatprep.subr.mxu0 0.0
    %146 = vmatpush1.msra.mxu0 0.0
    %147 = vmatprep.subr.mxu0 0.0
    %148 = vmatpush1.msra.mxu0 0.0
    %149 = vmatprep.subr.mxu0 0.0
    %150 = vmatpush1.msra.mxu0 0.0
    %151 = vmatprep.subr.mxu0 0.0
    %152 = vmatpush1.msra.mxu0 0.0
    %153 = vmatprep.mubr.f32.mxu0 0.0
    %v154 = vand.u32 %v82, 4294901760
    %v155 = vsub.f32 %v82, %v154
    %v156 = vand.u32 %v155, 4294901760
    %v157 = vsub.f32 %v155, %v156
    %v158 = vand.u32 %v157, 4294901760
    %159 = vmatmul.mubr.f32.gmra.mrb[0].mxu0 %v158
    %v160 = vpop.f32.mrb[0].mxu0
    %v161 = vadd.f32 0.0, %v160
    %v162 = vpop.f32.mrb[0].mxu0
    %163 = vmatprep.mubr.f32.mxu0 0.0
    %v164 = vand.u32 %v85, 4294901760
    %v165 = vsub.f32 %v85, %v164
    %v166 = vand.u32 %v165, 4294901760
    %v167 = vsub.f32 %v165, %v166
    %v168 = vand.u32 %v167, 4294901760
    %169 = vmatmul.mubr.f32.gmra.mrb[0].mxu0 %v168
    %v170 = vpop.f32.mrb[0].mxu0
    %v171 = vadd.f32 0.0, %v170
    %v172 = vpop.f32.mrb[0].mxu0
    %173 = vdwg.mxu0
    %174 = vmatprep.subr.mxu0 0.0
    %v175 = vand.u32 %v76, 4294901760
    %v176 = vsub.f32 %v76, %v175
    %v177 = vand.u32 %v176, 4294901760
    %v178 = vsub.f32 %v176, %v177
    %v179 = vand.u32 %v178, 4294901760
    %180 = vmatpush1.msra.mxu0 %v179
    %181 = vmatprep.subr.mxu0 0.0
    %v182 = vand.u32 %v77, 4294901760
    %v183 = vsub.f32 %v77, %v182
    %v184 = vand.u32 %v183, 4294901760
    %v185 = vsub.f32 %v183, %v184
    %v186 = vand.u32 %v185, 4294901760
    %187 = vmatpush1.msra.mxu0 %v186
    %188 = vmatprep.subr.mxu0 0.0
    %189 = vmatpush1.msra.mxu0 0.0
    %190 = vmatprep.subr.mxu0 0.0
    %191 = vmatpush1.msra.mxu0 0.0
    %192 = vmatprep.subr.mxu0 0.0
    %193 = vmatpush1.msra.mxu0 0.0
    %194 = vmatprep.subr.mxu0 0.0
    %195 = vmatpush1.msra.mxu0 0.0
    %196 = vmatprep.subr.mxu0 0.0
    %197 = vmatpush1.msra.mxu0 0.0
    %198 = vmatprep.subr.mxu0 0.0
    %199 = vmatpush1.msra.mxu0 0.0
    %200 = vmatprep.subr.mxu0 0.0
    %201 = vmatpush1.msra.mxu0 0.0
    %202 = vmatprep.subr.mxu0 0.0
    %203 = vmatpush1.msra.mxu0 0.0
    %204 = vmatprep.subr.mxu0 0.0
    %205 = vmatpush1.msra.mxu0 0.0
    %206 = vmatprep.subr.mxu0 0.0
    %207 = vmatpush1.msra.mxu0 0.0
    %208 = vmatprep.subr.mxu0 0.0
    %209 = vmatpush1.msra.mxu0 0.0
    %210 = vmatprep.subr.mxu0 0.0
    %211 = vmatpush1.msra.mxu0 0.0
    %212 = vmatprep.subr.mxu0 0.0
    %213 = vmatpush1.msra.mxu0 0.0
    %214 = vmatprep.subr.mxu0 0.0
    %215 = vmatpush1.msra.mxu0 0.0
    %216 = vmatprep.subr.mxu0 0.0
    %217 = vmatpush1.msra.mxu0 0.0
    %218 = vmatprep.subr.mxu0 0.0
    %219 = vmatpush1.msra.mxu0 0.0
    %220 = vmatprep.subr.mxu0 0.0
    %221 = vmatpush1.msra.mxu0 0.0
    %222 = vmatprep.subr.mxu0 0.0
    %223 = vmatpush1.msra.mxu0 0.0
    %224 = vmatprep.subr.mxu0 0.0
    %225 = vmatpush1.msra.mxu0 0.0
    %226 = vmatprep.subr.mxu0 0.0
    %227 = vmatpush1.msra.mxu0 0.0
    %228 = vmatprep.subr.mxu0 0.0
    %229 = vmatpush1.msra.mxu0 0.0
    %230 = vmatprep.subr.mxu0 0.0
    %231 = vmatpush1.msra.mxu0 0.0
    %232 = vmatprep.subr.mxu0 0.0
    %233 = vmatpush1.msra.mxu0 0.0
    %234 = vmatprep.subr.mxu0 0.0
    %235 = vmatpush1.msra.mxu0 0.0
    %236 = vmatprep.subr.mxu0 0.0
    %237 = vmatpush1.msra.mxu0 0.0
    %238 = vmatprep.subr.mxu0 0.0
    %239 = vmatpush1.msra.mxu0 0.0
    %240 = vmatprep.subr.mxu0 0.0
    %241 = vmatpush1.msra.mxu0 0.0
    %242 = vmatprep.subr.mxu0 0.0
    %243 = vmatpush1.msra.mxu0 0.0
    %244 = vmatprep.subr.mxu0 0.0
    %245 = vmatpush1.msra.mxu0 0.0
    %246 = vmatprep.subr.mxu0 0.0
    %247 = vmatpush1.msra.mxu0 0.0
    %248 = vmatprep.mubr.f32.mxu0 0.0
    %v249 = vand.u32 %v82, 4294901760
    %250 = vmatmul.mubr.f32.gmra.mrb[0].mxu0 %v249
    %v251 = vpop.f32.mrb[0].mxu0
    %v252 = vadd.f32 %v161, %v251
    %v253 = vpop.f32.mrb[0].mxu0
    %254 = vmatprep.mubr.f32.mxu0 0.0
    %v255 = vand.u32 %v85, 4294901760
    %256 = vmatmul.mubr.f32.gmra.mrb[0].mxu0 %v255
    %v257 = vpop.f32.mrb[0].mxu0
    %v258 = vadd.f32 %v171, %v257
    %v259 = vpop.f32.mrb[0].mxu0
    %260 = vdwg.mxu0
    %261 = vmatprep.subr.mxu0 0.0
    %v262 = vand.u32 %v76, 4294901760
    %v263 = vsub.f32 %v76, %v262
    %264 = vmatpush1.msra.mxu0 %v263
    %265 = vmatprep.subr.mxu0 0.0
    %v266 = vand.u32 %v77, 4294901760
    %v267 = vsub.f32 %v77, %v266
    %268 = vmatpush1.msra.mxu0 %v267
    %269 = vmatprep.subr.mxu0 0.0
    %270 = vmatpush1.msra.mxu0 0.0
    %271 = vmatprep.subr.mxu0 0.0
    %272 = vmatpush1.msra.mxu0 0.0
    %273 = vmatprep.subr.mxu0 0.0
    %274 = vmatpush1.msra.mxu0 0.0
    %275 = vmatprep.subr.mxu0 0.0
    %276 = vmatpush1.msra.mxu0 0.0
    %277 = vmatprep.subr.mxu0 0.0
    %278 = vmatpush1.msra.mxu0 0.0
    %279 = vmatprep.subr.mxu0 0.0
    %280 = vmatpush1.msra.mxu0 0.0
    %281 = vmatprep.subr.mxu0 0.0
    %282 = vmatpush1.msra.mxu0 0.0
    %283 = vmatprep.subr.mxu0 0.0
    %284 = vmatpush1.msra.mxu0 0.0
    %285 = vmatprep.subr.mxu0 0.0
    %286 = vmatpush1.msra.mxu0 0.0
    %287 = vmatprep.subr.mxu0 0.0
    %288 = vmatpush1.msra.mxu0 0.0
    %289 = vmatprep.subr.mxu0 0.0
    %290 = vmatpush1.msra.mxu0 0.0
    %291 = vmatprep.subr.mxu0 0.0
    %292 = vmatpush1.msra.mxu0 0.0
    %293 = vmatprep.subr.mxu0 0.0
    %294 = vmatpush1.msra.mxu0 0.0
    %295 = vmatprep.subr.mxu0 0.0
    %296 = vmatpush1.msra.mxu0 0.0
    %297 = vmatprep.subr.mxu0 0.0
    %298 = vmatpush1.msra.mxu0 0.0
    %299 = vmatprep.subr.mxu0 0.0
    %300 = vmatpush1.msra.mxu0 0.0
    %301 = vmatprep.subr.mxu0 0.0
    %302 = vmatpush1.msra.mxu0 0.0
    %303 = vmatprep.subr.mxu0 0.0
    %304 = vmatpush1.msra.mxu0 0.0
    %305 = vmatprep.subr.mxu0 0.0
    %306 = vmatpush1.msra.mxu0 0.0
    %307 = vmatprep.subr.mxu0 0.0
    %308 = vmatpush1.msra.mxu0 0.0
    %309 = vmatprep.subr.mxu0 0.0
    %310 = vmatpush1.msra.mxu0 0.0
    %311 = vmatprep.subr.mxu0 0.0
    %312 = vmatpush1.msra.mxu0 0.0
    %313 = vmatprep.subr.mxu0 0.0
    %314 = vmatpush1.msra.mxu0 0.0
    %315 = vmatprep.subr.mxu0 0.0
    %316 = vmatpush1.msra.mxu0 0.0
    %317 = vmatprep.subr.mxu0 0.0
    %318 = vmatpush1.msra.mxu0 0.0
    %319 = vmatprep.subr.mxu0 0.0
    %320 = vmatpush1.msra.mxu0 0.0
    %321 = vmatprep.subr.mxu0 0.0
    %322 = vmatpush1.msra.mxu0 0.0
    %323 = vmatprep.subr.mxu0 0.0
    %324 = vmatpush1.msra.mxu0 0.0
    %325 = vmatprep.subr.mxu0 0.0
    %326 = vmatpush1.msra.mxu0 0.0
    %327 = vmatprep.subr.mxu0 0.0
    %328 = vmatpush1.msra.mxu0 0.0
    %329 = vmatprep.mubr.f32.mxu0 0.0
    %v330 = vand.u32 %v82, 4294901760
    %v331 = vsub.f32 %v82, %v330
    %332 = vmatmul.mubr.f32.gmra.mrb[0].mxu0 %v331
    %v333 = vpop.f32.mrb[0].mxu0
    %v334 = vadd.f32 %v252, %v333
    %v335 = vpop.f32.mrb[0].mxu0
    %336 = vmatprep.mubr.f32.mxu0 0.0
    %v337 = vand.u32 %v85, 4294901760
    %v338 = vsub.f32 %v85, %v337
    %339 = vmatmul.mubr.f32.gmra.mrb[0].mxu0 %v338
    %v340 = vpop.f32.mrb[0].mxu0
    %v341 = vadd.f32 %v258, %v340
    %v342 = vpop.f32.mrb[0].mxu0
    %343 = vdwg.mxu0
    %344 = vmatprep.subr.mxu0 0.0
    %v345 = vand.u32 %v76, 4294901760
    %346 = vmatpush1.msra.mxu0 %v345
    %347 = vmatprep.subr.mxu0 0.0
    %v348 = vand.u32 %v77, 4294901760
    %349 = vmatpush1.msra.mxu0 %v348
    %350 = vmatprep.subr.mxu0 0.0
    %351 = vmatpush1.msra.mxu0 0.0
    %352 = vmatprep.subr.mxu0 0.0
    %353 = vmatpush1.msra.mxu0 0.0
    %354 = vmatprep.subr.mxu0 0.0
    %355 = vmatpush1.msra.mxu0 0.0
    %356 = vmatprep.subr.mxu0 0.0
    %357 = vmatpush1.msra.mxu0 0.0
    %358 = vmatprep.subr.mxu0 0.0
    %359 = vmatpush1.msra.mxu0 0.0
    %360 = vmatprep.subr.mxu0 0.0
    %361 = vmatpush1.msra.mxu0 0.0
    %362 = vmatprep.subr.mxu0 0.0
    %363 = vmatpush1.msra.mxu0 0.0
    %364 = vmatprep.subr.mxu0 0.0
    %365 = vmatpush1.msra.mxu0 0.0
    %366 = vmatprep.subr.mxu0 0.0
    %367 = vmatpush1.msra.mxu0 0.0
    %368 = vmatprep.subr.mxu0 0.0
    %369 = vmatpush1.msra.mxu0 0.0
    %370 = vmatprep.subr.mxu0 0.0
    %371 = vmatpush1.msra.mxu0 0.0
    %372 = vmatprep.subr.mxu0 0.0
    %373 = vmatpush1.msra.mxu0 0.0
    %374 = vmatprep.subr.mxu0 0.0
    %375 = vmatpush1.msra.mxu0 0.0
    %376 = vmatprep.subr.mxu0 0.0
    %377 = vmatpush1.msra.mxu0 0.0
    %378 = vmatprep.subr.mxu0 0.0
    %379 = vmatpush1.msra.mxu0 0.0
    %380 = vmatprep.subr.mxu0 0.0
    %381 = vmatpush1.msra.mxu0 0.0
    %382 = vmatprep.subr.mxu0 0.0
    %383 = vmatpush1.msra.mxu0 0.0
    %384 = vmatprep.subr.mxu0 0.0
    %385 = vmatpush1.msra.mxu0 0.0
    %386 = vmatprep.subr.mxu0 0.0
    %387 = vmatpush1.msra.mxu0 0.0
    %388 = vmatprep.subr.mxu0 0.0
    %389 = vmatpush1.msra.mxu0 0.0
    %390 = vmatprep.subr.mxu0 0.0
    %391 = vmatpush1.msra.mxu0 0.0
    %392 = vmatprep.subr.mxu0 0.0
    %393 = vmatpush1.msra.mxu0 0.0
    %394 = vmatprep.subr.mxu0 0.0
    %395 = vmatpush1.msra.mxu0 0.0
    %396 = vmatprep.subr.mxu0 0.0
    %397 = vmatpush1.msra.mxu0 0.0
    %398 = vmatprep.subr.mxu0 0.0
    %399 = vmatpush1.msra.mxu0 0.0
    %400 = vmatprep.subr.mxu0 0.0
    %401 = vmatpush1.msra.mxu0 0.0
    %402 = vmatprep.subr.mxu0 0.0
    %403 = vmatpush1.msra.mxu0 0.0
    %404 = vmatprep.subr.mxu0 0.0
    %405 = vmatpush1.msra.mxu0 0.0
    %406 = vmatprep.subr.mxu0 0.0
    %407 = vmatpush1.msra.mxu0 0.0
    %408 = vmatprep.subr.mxu0 0.0
    %409 = vmatpush1.msra.mxu0 0.0
    %410 = vmatprep.mubr.f32.mxu0 0.0
    %v411 = vand.u32 %v82, 4294901760
    %v412 = vsub.f32 %v82, %v411
    %v413 = vand.u32 %v412, 4294901760
    %414 = vmatmul.mubr.f32.gmra.mrb[0].mxu0 %v413
    %v415 = vpop.f32.mrb[0].mxu0
    %v416 = vadd.f32 %v334, %v415
    %v417 = vpop.f32.mrb[0].mxu0
    %418 = vmatprep.mubr.f32.mxu0 0.0
    %v419 = vand.u32 %v85, 4294901760
    %v420 = vsub.f32 %v85, %v419
    %v421 = vand.u32 %v420, 4294901760
    %422 = vmatmul.mubr.f32.gmra.mrb[0].mxu0 %v421
    %v423 = vpop.f32.mrb[0].mxu0
    %v424 = vadd.f32 %v341, %v423
    %v425 = vpop.f32.mrb[0].mxu0
    %426 = vdwg.mxu0
    %427 = vmatprep.subr.mxu0 0.0
    %v428 = vand.u32 %v76, 4294901760
    %v429 = vsub.f32 %v76, %v428
    %v430 = vand.u32 %v429, 4294901760
    %431 = vmatpush1.msra.mxu0 %v430
    %432 = vmatprep.subr.mxu0 0.0
    %v433 = vand.u32 %v77, 4294901760
    %v434 = vsub.f32 %v77, %v433
    %v435 = vand.u32 %v434, 4294901760
    %436 = vmatpush1.msra.mxu0 %v435
    %437 = vmatprep.subr.mxu0 0.0
    %438 = vmatpush1.msra.mxu0 0.0
    %439 = vmatprep.subr.mxu0 0.0
    %440 = vmatpush1.msra.mxu0 0.0
    %441 = vmatprep.subr.mxu0 0.0
    %442 = vmatpush1.msra.mxu0 0.0
    %443 = vmatprep.subr.mxu0 0.0
    %444 = vmatpush1.msra.mxu0 0.0
    %445 = vmatprep.subr.mxu0 0.0
    %446 = vmatpush1.msra.mxu0 0.0
    %447 = vmatprep.subr.mxu0 0.0
    %448 = vmatpush1.msra.mxu0 0.0
    %449 = vmatprep.subr.mxu0 0.0
    %450 = vmatpush1.msra.mxu0 0.0
    %451 = vmatprep.subr.mxu0 0.0
    %452 = vmatpush1.msra.mxu0 0.0
    %453 = vmatprep.subr.mxu0 0.0
    %454 = vmatpush1.msra.mxu0 0.0
    %455 = vmatprep.subr.mxu0 0.0
    %456 = vmatpush1.msra.mxu0 0.0
    %457 = vmatprep.subr.mxu0 0.0
    %458 = vmatpush1.msra.mxu0 0.0
    %459 = vmatprep.subr.mxu0 0.0
    %460 = vmatpush1.msra.mxu0 0.0
    %461 = vmatprep.subr.mxu0 0.0
    %462 = vmatpush1.msra.mxu0 0.0
    %463 = vmatprep.subr.mxu0 0.0
    %464 = vmatpush1.msra.mxu0 0.0
    %465 = vmatprep.subr.mxu0 0.0
    %466 = vmatpush1.msra.mxu0 0.0
    %467 = vmatprep.subr.mxu0 0.0
    %468 = vmatpush1.msra.mxu0 0.0
    %469 = vmatprep.subr.mxu0 0.0
    %470 = vmatpush1.msra.mxu0 0.0
    %471 = vmatprep.subr.mxu0 0.0
    %472 = vmatpush1.msra.mxu0 0.0
    %473 = vmatprep.subr.mxu0 0.0
    %474 = vmatpush1.msra.mxu0 0.0
    %475 = vmatprep.subr.mxu0 0.0
    %476 = vmatpush1.msra.mxu0 0.0
    %477 = vmatprep.subr.mxu0 0.0
    %478 = vmatpush1.msra.mxu0 0.0
    %479 = vmatprep.subr.mxu0 0.0
    %480 = vmatpush1.msra.mxu0 0.0
    %481 = vmatprep.subr.mxu0 0.0
    %482 = vmatpush1.msra.mxu0 0.0
    %483 = vmatprep.subr.mxu0 0.0
    %484 = vmatpush1.msra.mxu0 0.0
    %485 = vmatprep.subr.mxu0 0.0
    %486 = vmatpush1.msra.mxu0 0.0
    %487 = vmatprep.subr.mxu0 0.0
    %488 = vmatpush1.msra.mxu0 0.0
    %489 = vmatprep.subr.mxu0 0.0
    %490 = vmatpush1.msra.mxu0 0.0
    %491 = vmatprep.subr.mxu0 0.0
    %492 = vmatpush1.msra.mxu0 0.0
    %493 = vmatprep.subr.mxu0 0.0
    %494 = vmatpush1.msra.mxu0 0.0
    %495 = vmatprep.subr.mxu0 0.0
    %496 = vmatpush1.msra.mxu0 0.0
    %497 = vmatprep.mubr.f32.mxu0 0.0
    %v498 = vand.u32 %v82, 4294901760
    %499 = vmatmul.mubr.f32.gmra.mrb[0].mxu0 %v498
    %v500 = vpop.f32.mrb[0].mxu0
    %v501 = vadd.f32 %v416, %v500
    %v502 = vpop.f32.mrb[0].mxu0
    %503 = vmatprep.mubr.f32.mxu0 0.0
    %v504 = vand.u32 %v85, 4294901760
    %505 = vmatmul.mubr.f32.gmra.mrb[0].mxu0 %v504
    %v506 = vpop.f32.mrb[0].mxu0
    %v507 = vadd.f32 %v424, %v506
    %v508 = vpop.f32.mrb[0].mxu0
    %509 = vdwg.mxu0
    %510 = vmatprep.subr.mxu0 0.0
    %v511 = vand.u32 %v76, 4294901760
    %512 = vmatpush1.msra.mxu0 %v511
    %513 = vmatprep.subr.mxu0 0.0
    %v514 = vand.u32 %v77, 4294901760
    %515 = vmatpush1.msra.mxu0 %v514
    %516 = vmatprep.subr.mxu0 0.0
    %517 = vmatpush1.msra.mxu0 0.0
    %518 = vmatprep.subr.mxu0 0.0
    %519 = vmatpush1.msra.mxu0 0.0
    %520 = vmatprep.subr.mxu0 0.0
    %521 = vmatpush1.msra.mxu0 0.0
    %522 = vmatprep.subr.mxu0 0.0
    %523 = vmatpush1.msra.mxu0 0.0
    %524 = vmatprep.subr.mxu0 0.0
    %525 = vmatpush1.msra.mxu0 0.0
    %526 = vmatprep.subr.mxu0 0.0
    %527 = vmatpush1.msra.mxu0 0.0
    %528 = vmatprep.subr.mxu0 0.0
    %529 = vmatpush1.msra.mxu0 0.0
    %530 = vmatprep.subr.mxu0 0.0
    %531 = vmatpush1.msra.mxu0 0.0
    %532 = vmatprep.subr.mxu0 0.0
    %533 = vmatpush1.msra.mxu0 0.0
    %534 = vmatprep.subr.mxu0 0.0
    %535 = vmatpush1.msra.mxu0 0.0
    %536 = vmatprep.subr.mxu0 0.0
    %537 = vmatpush1.msra.mxu0 0.0
    %538 = vmatprep.subr.mxu0 0.0
    %539 = vmatpush1.msra.mxu0 0.0
    %540 = vmatprep.subr.mxu0 0.0
    %541 = vmatpush1.msra.mxu0 0.0
    %542 = vmatprep.subr.mxu0 0.0
    %543 = vmatpush1.msra.mxu0 0.0
    %544 = vmatprep.subr.mxu0 0.0
    %545 = vmatpush1.msra.mxu0 0.0
    %546 = vmatprep.subr.mxu0 0.0
    %547 = vmatpush1.msra.mxu0 0.0
    %548 = vmatprep.subr.mxu0 0.0
    %549 = vmatpush1.msra.mxu0 0.0
    %550 = vmatprep.subr.mxu0 0.0
    %551 = vmatpush1.msra.mxu0 0.0
    %552 = vmatprep.subr.mxu0 0.0
    %553 = vmatpush1.msra.mxu0 0.0
    %554 = vmatprep.subr.mxu0 0.0
    %555 = vmatpush1.msra.mxu0 0.0
    %556 = vmatprep.subr.mxu0 0.0
    %557 = vmatpush1.msra.mxu0 0.0
    %558 = vmatprep.subr.mxu0 0.0
    %559 = vmatpush1.msra.mxu0 0.0
    %560 = vmatprep.subr.mxu0 0.0
    %561 = vmatpush1.msra.mxu0 0.0
    %562 = vmatprep.subr.mxu0 0.0
    %563 = vmatpush1.msra.mxu0 0.0
    %564 = vmatprep.subr.mxu0 0.0
    %565 = vmatpush1.msra.mxu0 0.0
    %566 = vmatprep.subr.mxu0 0.0
    %567 = vmatpush1.msra.mxu0 0.0
    %568 = vmatprep.subr.mxu0 0.0
    %569 = vmatpush1.msra.mxu0 0.0
    %570 = vmatprep.subr.mxu0 0.0
    %571 = vmatpush1.msra.mxu0 0.0
    %572 = vmatprep.subr.mxu0 0.0
    %573 = vmatpush1.msra.mxu0 0.0
    %574 = vmatprep.subr.mxu0 0.0
    %575 = vmatpush1.msra.mxu0 0.0
    %576 = vmatprep.mubr.f32.mxu0 0.0
    %v577 = vand.u32 %v82, 4294901760
    %578 = vmatmul.mubr.f32.gmra.mrb[0].mxu0 %v577
    %v579 = vpop.f32.mrb[0].mxu0
    %v580 = vadd.f32 %v501, %v579
    %v581 = vpop.f32.mrb[0].mxu0
    %582 = vmatprep.mubr.f32.mxu0 0.0
    %v583 = vand.u32 %v85, 4294901760
    %584 = vmatmul.mubr.f32.gmra.mrb[0].mxu0 %v583
    %v585 = vpop.f32.mrb[0].mxu0
    %v586 = vadd.f32 %v507, %v585
    %v587 = vpop.f32.mrb[0].mxu0
    %588 = vdwg.mxu0
    %589 = vmatprep.subr.mxu0 0.0
    %v590 = vand.u32 %v580, 4294901760
    %591 = vmatpush1.msra.mxu0 %v590
    %592 = vmatprep.subr.mxu0 0.0
    %v593 = vand.u32 %v586, 4294901760
    %594 = vmatpush1.msra.mxu0 %v593
    %595 = vmatprep.subr.mxu0 0.0
    %596 = vmatpush1.msra.mxu0 0.0
    %597 = vmatprep.subr.mxu0 0.0
    %598 = vmatpush1.msra.mxu0 0.0
    %599 = vmatprep.subr.mxu0 0.0
    %600 = vmatpush1.msra.mxu0 0.0
    %601 = vmatprep.subr.mxu0 0.0
    %602 = vmatpush1.msra.mxu0 0.0
    %603 = vmatprep.subr.mxu0 0.0
    %604 = vmatpush1.msra.mxu0 0.0
    %605 = vmatprep.subr.mxu0 0.0
    %606 = vmatpush1.msra.mxu0 0.0
    %607 = vmatprep.subr.mxu0 0.0
    %608 = vmatpush1.msra.mxu0 0.0
    %609 = vmatprep.subr.mxu0 0.0
    %610 = vmatpush1.msra.mxu0 0.0
    %611 = vmatprep.subr.mxu0 0.0
    %612 = vmatpush1.msra.mxu0 0.0
    %613 = vmatprep.subr.mxu0 0.0
    %614 = vmatpush1.msra.mxu0 0.0
    %615 = vmatprep.subr.mxu0 0.0
    %616 = vmatpush1.msra.mxu0 0.0
    %617 = vmatprep.subr.mxu0 0.0
    %618 = vmatpush1.msra.mxu0 0.0
    %619 = vmatprep.subr.mxu0 0.0
    %620 = vmatpush1.msra.mxu0 0.0
    %621 = vmatprep.subr.mxu0 0.0
    %622 = vmatpush1.msra.mxu0 0.0
    %623 = vmatprep.subr.mxu0 0.0
    %624 = vmatpush1.msra.mxu0 0.0
    %625 = vmatprep.subr.mxu0 0.0
    %626 = vmatpush1.msra.mxu0 0.0
    %627 = vmatprep.subr.mxu0 0.0
    %628 = vmatpush1.msra.mxu0 0.0
    %629 = vmatprep.subr.mxu0 0.0
    %630 = vmatpush1.msra.mxu0 0.0
    %631 = vmatprep.subr.mxu0 0.0
    %632 = vmatpush1.msra.mxu0 0.0
    %633 = vmatprep.subr.mxu0 0.0
    %634 = vmatpush1.msra.mxu0 0.0
    %635 = vmatprep.subr.mxu0 0.0
    %636 = vmatpush1.msra.mxu0 0.0
    %637 = vmatprep.subr.mxu0 0.0
    %638 = vmatpush1.msra.mxu0 0.0
    %639 = vmatprep.subr.mxu0 0.0
    %640 = vmatpush1.msra.mxu0 0.0
    %641 = vmatprep.subr.mxu0 0.0
    %642 = vmatpush1.msra.mxu0 0.0
    %643 = vmatprep.subr.mxu0 0.0
    %644 = vmatpush1.msra.mxu0 0.0
    %645 = vmatprep.subr.mxu0 0.0
    %646 = vmatpush1.msra.mxu0 0.0
    %647 = vmatprep.subr.mxu0 0.0
    %648 = vmatpush1.msra.mxu0 0.0
    %649 = vmatprep.subr.mxu0 0.0
    %650 = vmatpush1.msra.mxu0 0.0
    %651 = vmatprep.subr.mxu0 0.0
    %652 = vmatpush1.msra.mxu0 0.0
    %653 = vmatprep.subr.mxu0 0.0
    %654 = vmatpush1.msra.mxu0 0.0
    %655 = vmatprep.mubr.f32.mxu0 0.0
    %v656 = vand.u32 %v82, 4294901760
    %v657 = vsub.f32 %v82, %v656
    %v658 = vand.u32 %v657, 4294901760
    %v659 = vsub.f32 %v657, %v658
    %v660 = vand.u32 %v659, 4294901760
    %661 = vmatmul.mubr.f32.gmra.mrb[0].mxu0 %v660
    %v662 = vpop.f32.mrb[0].mxu0
    %v663 = vadd.f32 0.0, %v662
    %v664 = vpop.f32.mrb[0].mxu0
    %665 = vmatprep.mubr.f32.mxu0 0.0
    %v666 = vand.u32 %v85, 4294901760
    %v667 = vsub.f32 %v85, %v666
    %v668 = vand.u32 %v667, 4294901760
    %v669 = vsub.f32 %v667, %v668
    %v670 = vand.u32 %v669, 4294901760
    %671 = vmatmul.mubr.f32.gmra.mrb[0].mxu0 %v670
    %v672 = vpop.f32.mrb[0].mxu0
    %v673 = vadd.f32 0.0, %v672
    %v674 = vpop.f32.mrb[0].mxu0
    %675 = vdwg.mxu0
    %676 = vmatprep.subr.mxu0 0.0
    %v677 = vand.u32 %v580, 4294901760
    %v678 = vsub.f32 %v580, %v677
    %v679 = vand.u32 %v678, 4294901760
    %v680 = vsub.f32 %v678, %v679
    %v681 = vand.u32 %v680, 4294901760
    %682 = vmatpush1.msra.mxu0 %v681
    %683 = vmatprep.subr.mxu0 0.0
    %v684 = vand.u32 %v586, 4294901760
    %v685 = vsub.f32 %v586, %v684
    %v686 = vand.u32 %v685, 4294901760
    %v687 = vsub.f32 %v685, %v686
    %v688 = vand.u32 %v687, 4294901760
    %689 = vmatpush1.msra.mxu0 %v688
    %690 = vmatprep.subr.mxu0 0.0
    %691 = vmatpush1.msra.mxu0 0.0
    %692 = vmatprep.subr.mxu0 0.0
    %693 = vmatpush1.msra.mxu0 0.0
    %694 = vmatprep.subr.mxu0 0.0
    %695 = vmatpush1.msra.mxu0 0.0
    %696 = vmatprep.subr.mxu0 0.0
    %697 = vmatpush1.msra.mxu0 0.0
    %698 = vmatprep.subr.mxu0 0.0
    %699 = vmatpush1.msra.mxu0 0.0
    %700 = vmatprep.subr.mxu0 0.0
    %701 = vmatpush1.msra.mxu0 0.0
    %702 = vmatprep.subr.mxu0 0.0
    %703 = vmatpush1.msra.mxu0 0.0
    %704 = vmatprep.subr.mxu0 0.0
    %705 = vmatpush1.msra.mxu0 0.0
    %706 = vmatprep.subr.mxu0 0.0
    %707 = vmatpush1.msra.mxu0 0.0
    %708 = vmatprep.subr.mxu0 0.0
    %709 = vmatpush1.msra.mxu0 0.0
    %710 = vmatprep.subr.mxu0 0.0
    %711 = vmatpush1.msra.mxu0 0.0
    %712 = vmatprep.subr.mxu0 0.0
    %713 = vmatpush1.msra.mxu0 0.0
    %714 = vmatprep.subr.mxu0 0.0
    %715 = vmatpush1.msra.mxu0 0.0
    %716 = vmatprep.subr.mxu0 0.0
    %717 = vmatpush1.msra.mxu0 0.0
    %718 = vmatprep.subr.mxu0 0.0
    %719 = vmatpush1.msra.mxu0 0.0
    %720 = vmatprep.subr.mxu0 0.0
    %721 = vmatpush1.msra.mxu0 0.0
    %722 = vmatprep.subr.mxu0 0.0
    %723 = vmatpush1.msra.mxu0 0.0
    %724 = vmatprep.subr.mxu0 0.0
    %725 = vmatpush1.msra.mxu0 0.0
    %726 = vmatprep.subr.mxu0 0.0
    %727 = vmatpush1.msra.mxu0 0.0
    %728 = vmatprep.subr.mxu0 0.0
    %729 = vmatpush1.msra.mxu0 0.0
    %730 = vmatprep.subr.mxu0 0.0
    %731 = vmatpush1.msra.mxu0 0.0
    %732 = vmatprep.subr.mxu0 0.0
    %733 = vmatpush1.msra.mxu0 0.0
    %734 = vmatprep.subr.mxu0 0.0
    %735 = vmatpush1.msra.mxu0 0.0
    %736 = vmatprep.subr.mxu0 0.0
    %737 = vmatpush1.msra.mxu0 0.0
    %738 = vmatprep.subr.mxu0 0.0
    %739 = vmatpush1.msra.mxu0 0.0
    %740 = vmatprep.subr.mxu0 0.0
    %741 = vmatpush1.msra.mxu0 0.0
    %742 = vmatprep.subr.mxu0 0.0
    %743 = vmatpush1.msra.mxu0 0.0
    %744 = vmatprep.subr.mxu0 0.0
    %745 = vmatpush1.msra.mxu0 0.0
    %746 = vmatprep.subr.mxu0 0.0
    %747 = vmatpush1.msra.mxu0 0.0
    %748 = vmatprep.subr.mxu0 0.0
    %749 = vmatpush1.msra.mxu0 0.0
    %750 = vmatprep.mubr.f32.mxu0 0.0
    %v751 = vand.u32 %v82, 4294901760
    %752 = vmatmul.mubr.f32.gmra.mrb[0].mxu0 %v751
    %v753 = vpop.f32.mrb[0].mxu0
    %v754 = vadd.f32 %v663, %v753
    %v755 = vpop.f32.mrb[0].mxu0
    %756 = vmatprep.mubr.f32.mxu0 0.0
    %v757 = vand.u32 %v85, 4294901760
    %758 = vmatmul.mubr.f32.gmra.mrb[0].mxu0 %v757
    %v759 = vpop.f32.mrb[0].mxu0
    %v760 = vadd.f32 %v673, %v759
    %v761 = vpop.f32.mrb[0].mxu0
    %762 = vdwg.mxu0
    %763 = vmatprep.subr.mxu0 0.0
    %v764 = vand.u32 %v580, 4294901760
    %v765 = vsub.f32 %v580, %v764
    %766 = vmatpush1.msra.mxu0 %v765
    %767 = vmatprep.subr.mxu0 0.0
    %v768 = vand.u32 %v586, 4294901760
    %v769 = vsub.f32 %v586, %v768
    %770 = vmatpush1.msra.mxu0 %v769
    %771 = vmatprep.subr.mxu0 0.0
    %772 = vmatpush1.msra.mxu0 0.0
    %773 = vmatprep.subr.mxu0 0.0
    %774 = vmatpush1.msra.mxu0 0.0
    %775 = vmatprep.subr.mxu0 0.0
    %776 = vmatpush1.msra.mxu0 0.0
    %777 = vmatprep.subr.mxu0 0.0
    %778 = vmatpush1.msra.mxu0 0.0
    %779 = vmatprep.subr.mxu0 0.0
    %780 = vmatpush1.msra.mxu0 0.0
    %781 = vmatprep.subr.mxu0 0.0
    %782 = vmatpush1.msra.mxu0 0.0
    %783 = vmatprep.subr.mxu0 0.0
    %784 = vmatpush1.msra.mxu0 0.0
    %785 = vmatprep.subr.mxu0 0.0
    %786 = vmatpush1.msra.mxu0 0.0
    %787 = vmatprep.subr.mxu0 0.0
    %788 = vmatpush1.msra.mxu0 0.0
    %789 = vmatprep.subr.mxu0 0.0
    %790 = vmatpush1.msra.mxu0 0.0
    %791 = vmatprep.subr.mxu0 0.0
    %792 = vmatpush1.msra.mxu0 0.0
    %793 = vmatprep.subr.mxu0 0.0
    %794 = vmatpush1.msra.mxu0 0.0
    %795 = vmatprep.subr.mxu0 0.0
    %796 = vmatpush1.msra.mxu0 0.0
    %797 = vmatprep.subr.mxu0 0.0
    %798 = vmatpush1.msra.mxu0 0.0
    %799 = vmatprep.subr.mxu0 0.0
    %800 = vmatpush1.msra.mxu0 0.0
    %801 = vmatprep.subr.mxu0 0.0
    %802 = vmatpush1.msra.mxu0 0.0
    %803 = vmatprep.subr.mxu0 0.0
    %804 = vmatpush1.msra.mxu0 0.0
    %805 = vmatprep.subr.mxu0 0.0
    %806 = vmatpush1.msra.mxu0 0.0
    %807 = vmatprep.subr.mxu0 0.0
    %808 = vmatpush1.msra.mxu0 0.0
    %809 = vmatprep.subr.mxu0 0.0
    %810 = vmatpush1.msra.mxu0 0.0
    %811 = vmatprep.subr.mxu0 0.0
    %812 = vmatpush1.msra.mxu0 0.0
    %813 = vmatprep.subr.mxu0 0.0
    %814 = vmatpush1.msra.mxu0 0.0
    %815 = vmatprep.subr.mxu0 0.0
    %816 = vmatpush1.msra.mxu0 0.0
    %817 = vmatprep.subr.mxu0 0.0
    %818 = vmatpush1.msra.mxu0 0.0
    %819 = vmatprep.subr.mxu0 0.0
    %820 = vmatpush1.msra.mxu0 0.0
    %821 = vmatprep.subr.mxu0 0.0
    %822 = vmatpush1.msra.mxu0 0.0
    %823 = vmatprep.subr.mxu0 0.0
    %824 = vmatpush1.msra.mxu0 0.0
    %825 = vmatprep.subr.mxu0 0.0
    %826 = vmatpush1.msra.mxu0 0.0
    %827 = vmatprep.subr.mxu0 0.0
    %828 = vmatpush1.msra.mxu0 0.0
    %829 = vmatprep.subr.mxu0 0.0
    %830 = vmatpush1.msra.mxu0 0.0
    %831 = vmatprep.mubr.f32.mxu0 0.0
    %v832 = vand.u32 %v82, 4294901760
    %v833 = vsub.f32 %v82, %v832
    %834 = vmatmul.mubr.f32.gmra.mrb[0].mxu0 %v833
    %v835 = vpop.f32.mrb[0].mxu0
    %v836 = vadd.f32 %v754, %v835
    %v837 = vpop.f32.mrb[0].mxu0
    %838 = vmatprep.mubr.f32.mxu0 0.0
    %v839 = vand.u32 %v85, 4294901760
    %v840 = vsub.f32 %v85, %v839
    %841 = vmatmul.mubr.f32.gmra.mrb[0].mxu0 %v840
    %v842 = vpop.f32.mrb[0].mxu0
    %v843 = vadd.f32 %v760, %v842
    %v844 = vpop.f32.mrb[0].mxu0
    %845 = vdwg.mxu0
    %846 = vmatprep.subr.mxu0 0.0
    %v847 = vand.u32 %v580, 4294901760
    %848 = vmatpush1.msra.mxu0 %v847
    %849 = vmatprep.subr.mxu0 0.0
    %v850 = vand.u32 %v586, 4294901760
    %851 = vmatpush1.msra.mxu0 %v850
    %852 = vmatprep.subr.mxu0 0.0
    %853 = vmatpush1.msra.mxu0 0.0
    %854 = vmatprep.subr.mxu0 0.0
    %855 = vmatpush1.msra.mxu0 0.0
    %856 = vmatprep.subr.mxu0 0.0
    %857 = vmatpush1.msra.mxu0 0.0
    %858 = vmatprep.subr.mxu0 0.0
    %859 = vmatpush1.msra.mxu0 0.0
    %860 = vmatprep.subr.mxu0 0.0
    %861 = vmatpush1.msra.mxu0 0.0
    %862 = vmatprep.subr.mxu0 0.0
    %863 = vmatpush1.msra.mxu0 0.0
    %864 = vmatprep.subr.mxu0 0.0
    %865 = vmatpush1.msra.mxu0 0.0
    %866 = vmatprep.subr.mxu0 0.0
    %867 = vmatpush1.msra.mxu0 0.0
    %868 = vmatprep.subr.mxu0 0.0
    %869 = vmatpush1.msra.mxu0 0.0
    %870 = vmatprep.subr.mxu0 0.0
    %871 = vmatpush1.msra.mxu0 0.0
    %872 = vmatprep.subr.mxu0 0.0
    %873 = vmatpush1.msra.mxu0 0.0
    %874 = vmatprep.subr.mxu0 0.0
    %875 = vmatpush1.msra.mxu0 0.0
    %876 = vmatprep.subr.mxu0 0.0
    %877 = vmatpush1.msra.mxu0 0.0
    %878 = vmatprep.subr.mxu0 0.0
    %879 = vmatpush1.msra.mxu0 0.0
    %880 = vmatprep.subr.mxu0 0.0
    %881 = vmatpush1.msra.mxu0 0.0
    %882 = vmatprep.subr.mxu0 0.0
    %883 = vmatpush1.msra.mxu0 0.0
    %884 = vmatprep.subr.mxu0 0.0
    %885 = vmatpush1.msra.mxu0 0.0
    %886 = vmatprep.subr.mxu0 0.0
    %887 = vmatpush1.msra.mxu0 0.0
    %888 = vmatprep.subr.mxu0 0.0
    %889 = vmatpush1.msra.mxu0 0.0
    %890 = vmatprep.subr.mxu0 0.0
    %891 = vmatpush1.msra.mxu0 0.0
    %892 = vmatprep.subr.mxu0 0.0
    %893 = vmatpush1.msra.mxu0 0.0
    %894 = vmatprep.subr.mxu0 0.0
    %895 = vmatpush1.msra.mxu0 0.0
    %896 = vmatprep.subr.mxu0 0.0
    %897 = vmatpush1.msra.mxu0 0.0
    %898 = vmatprep.subr.mxu0 0.0
    %899 = vmatpush1.msra.mxu0 0.0
    %900 = vmatprep.subr.mxu0 0.0
    %901 = vmatpush1.msra.mxu0 0.0
    %902 = vmatprep.subr.mxu0 0.0
    %903 = vmatpush1.msra.mxu0 0.0
    %904 = vmatprep.subr.mxu0 0.0
    %905 = vmatpush1.msra.mxu0 0.0
    %906 = vmatprep.subr.mxu0 0.0
    %907 = vmatpush1.msra.mxu0 0.0
    %908 = vmatprep.subr.mxu0 0.0
    %909 = vmatpush1.msra.mxu0 0.0
    %910 = vmatprep.subr.mxu0 0.0
    %911 = vmatpush1.msra.mxu0 0.0
    %912 = vmatprep.mubr.f32.mxu0 0.0
    %v913 = vand.u32 %v82, 4294901760
    %v914 = vsub.f32 %v82, %v913
    %v915 = vand.u32 %v914, 4294901760
    %916 = vmatmul.mubr.f32.gmra.mrb[0].mxu0 %v915
    %v917 = vpop.f32.mrb[0].mxu0
    %v918 = vadd.f32 %v836, %v917
    %v919 = vpop.f32.mrb[0].mxu0
    %920 = vmatprep.mubr.f32.mxu0 0.0
    %v921 = vand.u32 %v85, 4294901760
    %v922 = vsub.f32 %v85, %v921
    %v923 = vand.u32 %v922, 4294901760
    %924 = vmatmul.mubr.f32.gmra.mrb[0].mxu0 %v923
    %v925 = vpop.f32.mrb[0].mxu0
    %v926 = vadd.f32 %v843, %v925
    %v927 = vpop.f32.mrb[0].mxu0
    %928 = vdwg.mxu0
    %929 = vmatprep.subr.mxu0 0.0
    %v930 = vand.u32 %v580, 4294901760
    %v931 = vsub.f32 %v580, %v930
    %v932 = vand.u32 %v931, 4294901760
    %933 = vmatpush1.msra.mxu0 %v932
    %934 = vmatprep.subr.mxu0 0.0
    %v935 = vand.u32 %v586, 4294901760
    %v936 = vsub.f32 %v586, %v935
    %v937 = vand.u32 %v936, 4294901760
    %938 = vmatpush1.msra.mxu0 %v937
    %939 = vmatprep.subr.mxu0 0.0
    %940 = vmatpush1.msra.mxu0 0.0
    %941 = vmatprep.subr.mxu0 0.0
    %942 = vmatpush1.msra.mxu0 0.0
    %943 = vmatprep.subr.mxu0 0.0
    %944 = vmatpush1.msra.mxu0 0.0
    %945 = vmatprep.subr.mxu0 0.0
    %946 = vmatpush1.msra.mxu0 0.0
    %947 = vmatprep.subr.mxu0 0.0
    %948 = vmatpush1.msra.mxu0 0.0
    %949 = vmatprep.subr.mxu0 0.0
    %950 = vmatpush1.msra.mxu0 0.0
    %951 = vmatprep.subr.mxu0 0.0
    %952 = vmatpush1.msra.mxu0 0.0
    %953 = vmatprep.subr.mxu0 0.0
    %954 = vmatpush1.msra.mxu0 0.0
    %955 = vmatprep.subr.mxu0 0.0
    %956 = vmatpush1.msra.mxu0 0.0
    %957 = vmatprep.subr.mxu0 0.0
    %958 = vmatpush1.msra.mxu0 0.0
    %959 = vmatprep.subr.mxu0 0.0
    %960 = vmatpush1.msra.mxu0 0.0
    %961 = vmatprep.subr.mxu0 0.0
    %962 = vmatpush1.msra.mxu0 0.0
    %963 = vmatprep.subr.mxu0 0.0
    %964 = vmatpush1.msra.mxu0 0.0
    %965 = vmatprep.subr.mxu0 0.0
    %966 = vmatpush1.msra.mxu0 0.0
    %967 = vmatprep.subr.mxu0 0.0
    %968 = vmatpush1.msra.mxu0 0.0
    %969 = vmatprep.subr.mxu0 0.0
    %970 = vmatpush1.msra.mxu0 0.0
    %971 = vmatprep.subr.mxu0 0.0
    %972 = vmatpush1.msra.mxu0 0.0
    %973 = vmatprep.subr.mxu0 0.0
    %974 = vmatpush1.msra.mxu0 0.0
    %975 = vmatprep.subr.mxu0 0.0
    %976 = vmatpush1.msra.mxu0 0.0
    %977 = vmatprep.subr.mxu0 0.0
    %978 = vmatpush1.msra.mxu0 0.0
    %979 = vmatprep.subr.mxu0 0.0
    %980 = vmatpush1.msra.mxu0 0.0
    %981 = vmatprep.subr.mxu0 0.0
    %982 = vmatpush1.msra.mxu0 0.0
    %983 = vmatprep.subr.mxu0 0.0
    %984 = vmatpush1.msra.mxu0 0.0
    %985 = vmatprep.subr.mxu0 0.0
    %986 = vmatpush1.msra.mxu0 0.0
    %987 = vmatprep.subr.mxu0 0.0
    %988 = vmatpush1.msra.mxu0 0.0
    %989 = vmatprep.subr.mxu0 0.0
    %990 = vmatpush1.msra.mxu0 0.0
    %991 = vmatprep.subr.mxu0 0.0
    %992 = vmatpush1.msra.mxu0 0.0
    %993 = vmatprep.subr.mxu0 0.0
    %994 = vmatpush1.msra.mxu0 0.0
    %995 = vmatprep.subr.mxu0 0.0
    %996 = vmatpush1.msra.mxu0 0.0
    %997 = vmatprep.subr.mxu0 0.0
    %998 = vmatpush1.msra.mxu0 0.0
    %999 = vmatprep.mubr.f32.mxu0 0.0
    %v1000 = vand.u32 %v82, 4294901760
    %1001 = vmatmul.mubr.f32.gmra.mrb[0].mxu0 %v1000
    %v1002 = vpop.f32.mrb[0].mxu0
    %v1003 = vadd.f32 %v918, %v1002
    %v1004 = vpop.f32.mrb[0].mxu0
    %1005 = vmatprep.mubr.f32.mxu0 0.0
    %v1006 = vand.u32 %v85, 4294901760
    %1007 = vmatmul.mubr.f32.gmra.mrb[0].mxu0 %v1006
    %v1008 = vpop.f32.mrb[0].mxu0
    %v1009 = vadd.f32 %v926, %v1008
    %v1010 = vpop.f32.mrb[0].mxu0
    %1011 = vdwg.mxu0
    %1012 = vmatprep.subr.mxu0 0.0
    %v1013 = vand.u32 %v580, 4294901760
    %1014 = vmatpush1.msra.mxu0 %v1013
    %1015 = vmatprep.subr.mxu0 0.0
    %v1016 = vand.u32 %v586, 4294901760
    %1017 = vmatpush1.msra.mxu0 %v1016
    %1018 = vmatprep.subr.mxu0 0.0
    %1019 = vmatpush1.msra.mxu0 0.0
    %1020 = vmatprep.subr.mxu0 0.0
    %1021 = vmatpush1.msra.mxu0 0.0
    %1022 = vmatprep.subr.mxu0 0.0
    %1023 = vmatpush1.msra.mxu0 0.0
    %1024 = vmatprep.subr.mxu0 0.0
    %1025 = vmatpush1.msra.mxu0 0.0
    %1026 = vmatprep.subr.mxu0 0.0
    %1027 = vmatpush1.msra.mxu0 0.0
    %1028 = vmatprep.subr.mxu0 0.0
    %1029 = vmatpush1.msra.mxu0 0.0
    %1030 = vmatprep.subr.mxu0 0.0
    %1031 = vmatpush1.msra.mxu0 0.0
    %1032 = vmatprep.subr.mxu0 0.0
    %1033 = vmatpush1.msra.mxu0 0.0
    %1034 = vmatprep.subr.mxu0 0.0
    %1035 = vmatpush1.msra.mxu0 0.0
    %1036 = vmatprep.subr.mxu0 0.0
    %1037 = vmatpush1.msra.mxu0 0.0
    %1038 = vmatprep.subr.mxu0 0.0
    %1039 = vmatpush1.msra.mxu0 0.0
    %1040 = vmatprep.subr.mxu0 0.0
    %1041 = vmatpush1.msra.mxu0 0.0
    %1042 = vmatprep.subr.mxu0 0.0
    %1043 = vmatpush1.msra.mxu0 0.0
    %1044 = vmatprep.subr.mxu0 0.0
    %1045 = vmatpush1.msra.mxu0 0.0
    %1046 = vmatprep.subr.mxu0 0.0
    %1047 = vmatpush1.msra.mxu0 0.0
    %1048 = vmatprep.subr.mxu0 0.0
    %1049 = vmatpush1.msra.mxu0 0.0
    %1050 = vmatprep.subr.mxu0 0.0
    %1051 = vmatpush1.msra.mxu0 0.0
    %1052 = vmatprep.subr.mxu0 0.0
    %1053 = vmatpush1.msra.mxu0 0.0
    %1054 = vmatprep.subr.mxu0 0.0
    %1055 = vmatpush1.msra.mxu0 0.0
    %1056 = vmatprep.subr.mxu0 0.0
    %1057 = vmatpush1.msra.mxu0 0.0
    %1058 = vmatprep.subr.mxu0 0.0
    %1059 = vmatpush1.msra.mxu0 0.0
    %1060 = vmatprep.subr.mxu0 0.0
    %1061 = vmatpush1.msra.mxu0 0.0
    %1062 = vmatprep.subr.mxu0 0.0
    %1063 = vmatpush1.msra.mxu0 0.0
    %1064 = vmatprep.subr.mxu0 0.0
    %1065 = vmatpush1.msra.mxu0 0.0
    %1066 = vmatprep.subr.mxu0 0.0
    %1067 = vmatpush1.msra.mxu0 0.0
    %1068 = vmatprep.subr.mxu0 0.0
    %1069 = vmatpush1.msra.mxu0 0.0
    %1070 = vmatprep.subr.mxu0 0.0
    %1071 = vmatpush1.msra.mxu0 0.0
    %1072 = vmatprep.subr.mxu0 0.0
    %1073 = vmatpush1.msra.mxu0 0.0
    %1074 = vmatprep.subr.mxu0 0.0
    %1075 = vmatpush1.msra.mxu0 0.0
    %1076 = vmatprep.subr.mxu0 0.0
    %1077 = vmatpush1.msra.mxu0 0.0
    %1078 = vmatprep.mubr.f32.mxu0 0.0
    %v1079 = vand.u32 %v82, 4294901760
    %1080 = vmatmul.mubr.f32.gmra.mrb[0].mxu0 %v1079
    %v1081 = vpop.f32.mrb[0].mxu0
    %v1082 = vadd.f32 %v1003, %v1081
    %v1083 = vpop.f32.mrb[0].mxu0
    %1084 = vmatprep.mubr.f32.mxu0 0.0
    %v1085 = vand.u32 %v85, 4294901760
    %1086 = vmatmul.mubr.f32.gmra.mrb[0].mxu0 %v1085
    %v1087 = vpop.f32.mrb[0].mxu0
    %v1088 = vadd.f32 %v1009, %v1087
    %v1089 = vpop.f32.mrb[0].mxu0
    %1090 = vdwg.mxu0
    %v1091 = vmul.f32 %v1082, 2.0
    %v1092 = vmul.f32 %v1088, 2.0
    %v1093 = vsub.f32 %v1091, %v76
    %v1094 = vsub.f32 %v1092, %v77
    %s1095 = scalar_lea.vmem [#allocation4], 16
    %v1096 = vld [vmem:[%s1095] sm:$0xff]
    %v1097 = vld [vmem:[%s1095 + $0x8] sm:$0xff]
    %v1099 = vsel %vm80, %v1096, 0
    %v1102 = vsel %vm80, %v1097, 0
    %1104 = vmatprep.subr.mxu0 0.0
    %v1105 = vand.u32 %v580, 4294901760
    %1106 = vmatpush1.msra.mxu0 %v1105
    %1107 = vmatprep.subr.mxu0 0.0
    %v1108 = vand.u32 %v586, 4294901760
    %1109 = vmatpush1.msra.mxu0 %v1108
    %1110 = vmatprep.subr.mxu0 0.0
    %1111 = vmatpush1.msra.mxu0 0.0
    %1112 = vmatprep.subr.mxu0 0.0
    %1113 = vmatpush1.msra.mxu0 0.0
    %1114 = vmatprep.subr.mxu0 0.0
    %1115 = vmatpush1.msra.mxu0 0.0
    %1116 = vmatprep.subr.mxu0 0.0
    %1117 = vmatpush1.msra.mxu0 0.0
    %1118 = vmatprep.subr.mxu0 0.0
    %1119 = vmatpush1.msra.mxu0 0.0
    %1120 = vmatprep.subr.mxu0 0.0
    %1121 = vmatpush1.msra.mxu0 0.0
    %1122 = vmatprep.subr.mxu0 0.0
    %1123 = vmatpush1.msra.mxu0 0.0
    %1124 = vmatprep.subr.mxu0 0.0
    %1125 = vmatpush1.msra.mxu0 0.0
    %1126 = vmatprep.subr.mxu0 0.0
    %1127 = vmatpush1.msra.mxu0 0.0
    %1128 = vmatprep.subr.mxu0 0.0
    %1129 = vmatpush1.msra.mxu0 0.0
    %1130 = vmatprep.subr.mxu0 0.0
    %1131 = vmatpush1.msra.mxu0 0.0
    %1132 = vmatprep.subr.mxu0 0.0
    %1133 = vmatpush1.msra.mxu0 0.0
    %1134 = vmatprep.subr.mxu0 0.0
    %1135 = vmatpush1.msra.mxu0 0.0
    %1136 = vmatprep.subr.mxu0 0.0
    %1137 = vmatpush1.msra.mxu0 0.0
    %1138 = vmatprep.subr.mxu0 0.0
    %1139 = vmatpush1.msra.mxu0 0.0
    %1140 = vmatprep.subr.mxu0 0.0
    %1141 = vmatpush1.msra.mxu0 0.0
    %1142 = vmatprep.subr.mxu0 0.0
    %1143 = vmatpush1.msra.mxu0 0.0
    %1144 = vmatprep.subr.mxu0 0.0
    %1145 = vmatpush1.msra.mxu0 0.0
    %1146 = vmatprep.subr.mxu0 0.0
    %1147 = vmatpush1.msra.mxu0 0.0
    %1148 = vmatprep.subr.mxu0 0.0
    %1149 = vmatpush1.msra.mxu0 0.0
    %1150 = vmatprep.subr.mxu0 0.0
    %1151 = vmatpush1.msra.mxu0 0.0
    %1152 = vmatprep.subr.mxu0 0.0
    %1153 = vmatpush1.msra.mxu0 0.0
    %1154 = vmatprep.subr.mxu0 0.0
    %1155 = vmatpush1.msra.mxu0 0.0
    %1156 = vmatprep.subr.mxu0 0.0
    %1157 = vmatpush1.msra.mxu0 0.0
    %1158 = vmatprep.subr.mxu0 0.0
    %1159 = vmatpush1.msra.mxu0 0.0
    %1160 = vmatprep.subr.mxu0 0.0
    %1161 = vmatpush1.msra.mxu0 0.0
    %1162 = vmatprep.subr.mxu0 0.0
    %1163 = vmatpush1.msra.mxu0 0.0
    %1164 = vmatprep.subr.mxu0 0.0
    %1165 = vmatpush1.msra.mxu0 0.0
    %1166 = vmatprep.subr.mxu0 0.0
    %1167 = vmatpush1.msra.mxu0 0.0
    %1168 = vmatprep.subr.mxu0 0.0
    %1169 = vmatpush1.msra.mxu0 0.0
    %1170 = vmatprep.mubr.f32.mxu0 0.0
    %v1171 = vand.u32 %v1099, 4294901760
    %v1172 = vsub.f32 %v1099, %v1171
    %v1173 = vand.u32 %v1172, 4294901760
    %v1174 = vsub.f32 %v1172, %v1173
    %v1175 = vand.u32 %v1174, 4294901760
    %1176 = vmatmul.mubr.f32.gmra.mrb[0].mxu0 %v1175
    %v1177 = vpop.f32.mrb[0].mxu0
    %v1178 = vadd.f32 0.0, %v1177
    %v1179 = vpop.f32.mrb[0].mxu0
    %1180 = vmatprep.mubr.f32.mxu0 0.0
    %v1181 = vand.u32 %v1102, 4294901760
    %v1182 = vsub.f32 %v1102, %v1181
    %v1183 = vand.u32 %v1182, 4294901760
    %v1184 = vsub.f32 %v1182, %v1183
    %v1185 = vand.u32 %v1184, 4294901760
    %1186 = vmatmul.mubr.f32.gmra.mrb[0].mxu0 %v1185
    %v1187 = vpop.f32.mrb[0].mxu0
    %v1188 = vadd.f32 0.0, %v1187
    %v1189 = vpop.f32.mrb[0].mxu0
    %1190 = vdwg.mxu0
    %1191 = vmatprep.subr.mxu0 0.0
    %v1192 = vand.u32 %v580, 4294901760
    %v1193 = vsub.f32 %v580, %v1192
    %v1194 = vand.u32 %v1193, 4294901760
    %v1195 = vsub.f32 %v1193, %v1194
    %v1196 = vand.u32 %v1195, 4294901760
    %1197 = vmatpush1.msra.mxu0 %v1196
    %1198 = vmatprep.subr.mxu0 0.0
    %v1199 = vand.u32 %v586, 4294901760
    %v1200 = vsub.f32 %v586, %v1199
    %v1201 = vand.u32 %v1200, 4294901760
    %v1202 = vsub.f32 %v1200, %v1201
    %v1203 = vand.u32 %v1202, 4294901760
    %1204 = vmatpush1.msra.mxu0 %v1203
    %1205 = vmatprep.subr.mxu0 0.0
    %1206 = vmatpush1.msra.mxu0 0.0
    %1207 = vmatprep.subr.mxu0 0.0
    %1208 = vmatpush1.msra.mxu0 0.0
    %1209 = vmatprep.subr.mxu0 0.0
    %1210 = vmatpush1.msra.mxu0 0.0
    %1211 = vmatprep.subr.mxu0 0.0
    %1212 = vmatpush1.msra.mxu0 0.0
    %1213 = vmatprep.subr.mxu0 0.0
    %1214 = vmatpush1.msra.mxu0 0.0
    %1215 = vmatprep.subr.mxu0 0.0
    %1216 = vmatpush1.msra.mxu0 0.0
    %1217 = vmatprep.subr.mxu0 0.0
    %1218 = vmatpush1.msra.mxu0 0.0
    %1219 = vmatprep.subr.mxu0 0.0
    %1220 = vmatpush1.msra.mxu0 0.0
    %1221 = vmatprep.subr.mxu0 0.0
    %1222 = vmatpush1.msra.mxu0 0.0
    %1223 = vmatprep.subr.mxu0 0.0
    %1224 = vmatpush1.msra.mxu0 0.0
    %1225 = vmatprep.subr.mxu0 0.0
    %1226 = vmatpush1.msra.mxu0 0.0
    %1227 = vmatprep.subr.mxu0 0.0
    %1228 = vmatpush1.msra.mxu0 0.0
    %1229 = vmatprep.subr.mxu0 0.0
    %1230 = vmatpush1.msra.mxu0 0.0
    %1231 = vmatprep.subr.mxu0 0.0
    %1232 = vmatpush1.msra.mxu0 0.0
    %1233 = vmatprep.subr.mxu0 0.0
    %1234 = vmatpush1.msra.mxu0 0.0
    %1235 = vmatprep.subr.mxu0 0.0
    %1236 = vmatpush1.msra.mxu0 0.0
    %1237 = vmatprep.subr.mxu0 0.0
    %1238 = vmatpush1.msra.mxu0 0.0
    %1239 = vmatprep.subr.mxu0 0.0
    %1240 = vmatpush1.msra.mxu0 0.0
    %1241 = vmatprep.subr.mxu0 0.0
    %1242 = vmatpush1.msra.mxu0 0.0
    %1243 = vmatprep.subr.mxu0 0.0
    %1244 = vmatpush1.msra.mxu0 0.0
    %1245 = vmatprep.subr.mxu0 0.0
    %1246 = vmatpush1.msra.mxu0 0.0
    %1247 = vmatprep.subr.mxu0 0.0
    %1248 = vmatpush1.msra.mxu0 0.0
    %1249 = vmatprep.subr.mxu0 0.0
    %1250 = vmatpush1.msra.mxu0 0.0
    %1251 = vmatprep.subr.mxu0 0.0
    %1252 = vmatpush1.msra.mxu0 0.0
    %1253 = vmatprep.subr.mxu0 0.0
    %1254 = vmatpush1.msra.mxu0 0.0
    %1255 = vmatprep.subr.mxu0 0.0
    %1256 = vmatpush1.msra.mxu0 0.0
    %1257 = vmatprep.subr.mxu0 0.0
    %1258 = vmatpush1.msra.mxu0 0.0
    %1259 = vmatprep.subr.mxu0 0.0
    %1260 = vmatpush1.msra.mxu0 0.0
    %1261 = vmatprep.subr.mxu0 0.0
    %1262 = vmatpush1.msra.mxu0 0.0
    %1263 = vmatprep.subr.mxu0 0.0
    %1264 = vmatpush1.msra.mxu0 0.0
    %1265 = vmatprep.mubr.f32.mxu0 0.0
    %v1266 = vand.u32 %v1099, 4294901760
    %1267 = vmatmul.mubr.f32.gmra.mrb[0].mxu0 %v1266
    %v1268 = vpop.f32.mrb[0].mxu0
    %v1269 = vadd.f32 %v1178, %v1268
    %v1270 = vpop.f32.mrb[0].mxu0
    %1271 = vmatprep.mubr.f32.mxu0 0.0
    %v1272 = vand.u32 %v1102, 4294901760
    %1273 = vmatmul.mubr.f32.gmra.mrb[0].mxu0 %v1272
    %v1274 = vpop.f32.mrb[0].mxu0
    %v1275 = vadd.f32 %v1188, %v1274
    %v1276 = vpop.f32.mrb[0].mxu0
    %1277 = vdwg.mxu0
    %1278 = vmatprep.subr.mxu0 0.0
    %v1279 = vand.u32 %v580, 4294901760
    %v1280 = vsub.f32 %v580, %v1279
    %1281 = vmatpush1.msra.mxu0 %v1280
    %1282 = vmatprep.subr.mxu0 0.0
    %v1283 = vand.u32 %v586, 4294901760
    %v1284 = vsub.f32 %v586, %v1283
    %1285 = vmatpush1.msra.mxu0 %v1284
    %1286 = vmatprep.subr.mxu0 0.0
    %1287 = vmatpush1.msra.mxu0 0.0
    %1288 = vmatprep.subr.mxu0 0.0
    %1289 = vmatpush1.msra.mxu0 0.0
    %1290 = vmatprep.subr.mxu0 0.0
    %1291 = vmatpush1.msra.mxu0 0.0
    %1292 = vmatprep.subr.mxu0 0.0
    %1293 = vmatpush1.msra.mxu0 0.0
    %1294 = vmatprep.subr.mxu0 0.0
    %1295 = vmatpush1.msra.mxu0 0.0
    %1296 = vmatprep.subr.mxu0 0.0
    %1297 = vmatpush1.msra.mxu0 0.0
    %1298 = vmatprep.subr.mxu0 0.0
    %1299 = vmatpush1.msra.mxu0 0.0
    %1300 = vmatprep.subr.mxu0 0.0
    %1301 = vmatpush1.msra.mxu0 0.0
    %1302 = vmatprep.subr.mxu0 0.0
    %1303 = vmatpush1.msra.mxu0 0.0
    %1304 = vmatprep.subr.mxu0 0.0
    %1305 = vmatpush1.msra.mxu0 0.0
    %1306 = vmatprep.subr.mxu0 0.0
    %1307 = vmatpush1.msra.mxu0 0.0
    %1308 = vmatprep.subr.mxu0 0.0
    %1309 = vmatpush1.msra.mxu0 0.0
    %1310 = vmatprep.subr.mxu0 0.0
    %1311 = vmatpush1.msra.mxu0 0.0
    %1312 = vmatprep.subr.mxu0 0.0
    %1313 = vmatpush1.msra.mxu0 0.0
    %1314 = vmatprep.subr.mxu0 0.0
    %1315 = vmatpush1.msra.mxu0 0.0
    %1316 = vmatprep.subr.mxu0 0.0
    %1317 = vmatpush1.msra.mxu0 0.0
    %1318 = vmatprep.subr.mxu0 0.0
    %1319 = vmatpush1.msra.mxu0 0.0
    %1320 = vmatprep.subr.mxu0 0.0
    %1321 = vmatpush1.msra.mxu0 0.0
    %1322 = vmatprep.subr.mxu0 0.0
    %1323 = vmatpush1.msra.mxu0 0.0
    %1324 = vmatprep.subr.mxu0 0.0
    %1325 = vmatpush1.msra.mxu0 0.0
    %1326 = vmatprep.subr.mxu0 0.0
    %1327 = vmatpush1.msra.mxu0 0.0
    %1328 = vmatprep.subr.mxu0 0.0
    %1329 = vmatpush1.msra.mxu0 0.0
    %1330 = vmatprep.subr.mxu0 0.0
    %1331 = vmatpush1.msra.mxu0 0.0
    %1332 = vmatprep.subr.mxu0 0.0
    %1333 = vmatpush1.msra.mxu0 0.0
    %1334 = vmatprep.subr.mxu0 0.0
    %1335 = vmatpush1.msra.mxu0 0.0
    %1336 = vmatprep.subr.mxu0 0.0
    %1337 = vmatpush1.msra.mxu0 0.0
    %1338 = vmatprep.subr.mxu0 0.0
    %1339 = vmatpush1.msra.mxu0 0.0
    %1340 = vmatprep.subr.mxu0 0.0
    %1341 = vmatpush1.msra.mxu0 0.0
    %1342 = vmatprep.subr.mxu0 0.0
    %1343 = vmatpush1.msra.mxu0 0.0
    %1344 = vmatprep.subr.mxu0 0.0
    %1345 = vmatpush1.msra.mxu0 0.0
    %1346 = vmatprep.mubr.f32.mxu0 0.0
    %v1347 = vand.u32 %v1099, 4294901760
    %v1348 = vsub.f32 %v1099, %v1347
    %1349 = vmatmul.mubr.f32.gmra.mrb[0].mxu0 %v1348
    %v1350 = vpop.f32.mrb[0].mxu0
    %v1351 = vadd.f32 %v1269, %v1350
    %v1352 = vpop.f32.mrb[0].mxu0
    %1353 = vmatprep.mubr.f32.mxu0 0.0
    %v1354 = vand.u32 %v1102, 4294901760
    %v1355 = vsub.f32 %v1102, %v1354
    %1356 = vmatmul.mubr.f32.gmra.mrb[0].mxu0 %v1355
    %v1357 = vpop.f32.mrb[0].mxu0
    %v1358 = vadd.f32 %v1275, %v1357
    %v1359 = vpop.f32.mrb[0].mxu0
    %1360 = vdwg.mxu0
    %1361 = vmatprep.subr.mxu0 0.0
    %v1362 = vand.u32 %v580, 4294901760
    %1363 = vmatpush1.msra.mxu0 %v1362
    %1364 = vmatprep.subr.mxu0 0.0
    %v1365 = vand.u32 %v586, 4294901760
    %1366 = vmatpush1.msra.mxu0 %v1365
    %1367 = vmatprep.subr.mxu0 0.0
    %1368 = vmatpush1.msra.mxu0 0.0
    %1369 = vmatprep.subr.mxu0 0.0
    %1370 = vmatpush1.msra.mxu0 0.0
    %1371 = vmatprep.subr.mxu0 0.0
    %1372 = vmatpush1.msra.mxu0 0.0
    %1373 = vmatprep.subr.mxu0 0.0
    %1374 = vmatpush1.msra.mxu0 0.0
    %1375 = vmatprep.subr.mxu0 0.0
    %1376 = vmatpush1.msra.mxu0 0.0
    %1377 = vmatprep.subr.mxu0 0.0
    %1378 = vmatpush1.msra.mxu0 0.0
    %1379 = vmatprep.subr.mxu0 0.0
    %1380 = vmatpush1.msra.mxu0 0.0
    %1381 = vmatprep.subr.mxu0 0.0
    %1382 = vmatpush1.msra.mxu0 0.0
    %1383 = vmatprep.subr.mxu0 0.0
    %1384 = vmatpush1.msra.mxu0 0.0
    %1385 = vmatprep.subr.mxu0 0.0
    %1386 = vmatpush1.msra.mxu0 0.0
    %1387 = vmatprep.subr.mxu0 0.0
    %1388 = vmatpush1.msra.mxu0 0.0
    %1389 = vmatprep.subr.mxu0 0.0
    %1390 = vmatpush1.msra.mxu0 0.0
    %1391 = vmatprep.subr.mxu0 0.0
    %1392 = vmatpush1.msra.mxu0 0.0
    %1393 = vmatprep.subr.mxu0 0.0
    %1394 = vmatpush1.msra.mxu0 0.0
    %1395 = vmatprep.subr.mxu0 0.0
    %1396 = vmatpush1.msra.mxu0 0.0
    %1397 = vmatprep.subr.mxu0 0.0
    %1398 = vmatpush1.msra.mxu0 0.0
    %1399 = vmatprep.subr.mxu0 0.0
    %1400 = vmatpush1.msra.mxu0 0.0
    %1401 = vmatprep.subr.mxu0 0.0
    %1402 = vmatpush1.msra.mxu0 0.0
    %1403 = vmatprep.subr.mxu0 0.0
    %1404 = vmatpush1.msra.mxu0 0.0
    %1405 = vmatprep.subr.mxu0 0.0
    %1406 = vmatpush1.msra.mxu0 0.0
    %1407 = vmatprep.subr.mxu0 0.0
    %1408 = vmatpush1.msra.mxu0 0.0
    %1409 = vmatprep.subr.mxu0 0.0
    %1410 = vmatpush1.msra.mxu0 0.0
    %1411 = vmatprep.subr.mxu0 0.0
    %1412 = vmatpush1.msra.mxu0 0.0
    %1413 = vmatprep.subr.mxu0 0.0
    %1414 = vmatpush1.msra.mxu0 0.0
    %1415 = vmatprep.subr.mxu0 0.0
    %1416 = vmatpush1.msra.mxu0 0.0
    %1417 = vmatprep.subr.mxu0 0.0
    %1418 = vmatpush1.msra.mxu0 0.0
    %1419 = vmatprep.subr.mxu0 0.0
    %1420 = vmatpush1.msra.mxu0 0.0
    %1421 = vmatprep.subr.mxu0 0.0
    %1422 = vmatpush1.msra.mxu0 0.0
    %1423 = vmatprep.subr.mxu0 0.0
    %1424 = vmatpush1.msra.mxu0 0.0
    %1425 = vmatprep.subr.mxu0 0.0
    %1426 = vmatpush1.msra.mxu0 0.0
    %1427 = vmatprep.mubr.f32.mxu0 0.0
    %v1428 = vand.u32 %v1099, 4294901760
    %v1429 = vsub.f32 %v1099, %v1428
    %v1430 = vand.u32 %v1429, 4294901760
    %1431 = vmatmul.mubr.f32.gmra.mrb[0].mxu0 %v1430
    %v1432 = vpop.f32.mrb[0].mxu0
    %v1433 = vadd.f32 %v1351, %v1432
    %v1434 = vpop.f32.mrb[0].mxu0
    %1435 = vmatprep.mubr.f32.mxu0 0.0
    %v1436 = vand.u32 %v1102, 4294901760
    %v1437 = vsub.f32 %v1102, %v1436
    %v1438 = vand.u32 %v1437, 4294901760
    %1439 = vmatmul.mubr.f32.gmra.mrb[0].mxu0 %v1438
    %v1440 = vpop.f32.mrb[0].mxu0
    %v1441 = vadd.f32 %v1358, %v1440
    %v1442 = vpop.f32.mrb[0].mxu0
    %1443 = vdwg.mxu0
    %1444 = vmatprep.subr.mxu0 0.0
    %v1445 = vand.u32 %v580, 4294901760
    %v1446 = vsub.f32 %v580, %v1445
    %v1447 = vand.u32 %v1446, 4294901760
    %1448 = vmatpush1.msra.mxu0 %v1447
    %1449 = vmatprep.subr.mxu0 0.0
    %v1450 = vand.u32 %v586, 4294901760
    %v1451 = vsub.f32 %v586, %v1450
    %v1452 = vand.u32 %v1451, 4294901760
    %1453 = vmatpush1.msra.mxu0 %v1452
    %1454 = vmatprep.subr.mxu0 0.0
    %1455 = vmatpush1.msra.mxu0 0.0
    %1456 = vmatprep.subr.mxu0 0.0
    %1457 = vmatpush1.msra.mxu0 0.0
    %1458 = vmatprep.subr.mxu0 0.0
    %1459 = vmatpush1.msra.mxu0 0.0
    %1460 = vmatprep.subr.mxu0 0.0
    %1461 = vmatpush1.msra.mxu0 0.0
    %1462 = vmatprep.subr.mxu0 0.0
    %1463 = vmatpush1.msra.mxu0 0.0
    %1464 = vmatprep.subr.mxu0 0.0
    %1465 = vmatpush1.msra.mxu0 0.0
    %1466 = vmatprep.subr.mxu0 0.0
    %1467 = vmatpush1.msra.mxu0 0.0
    %1468 = vmatprep.subr.mxu0 0.0
    %1469 = vmatpush1.msra.mxu0 0.0
    %1470 = vmatprep.subr.mxu0 0.0
    %1471 = vmatpush1.msra.mxu0 0.0
    %1472 = vmatprep.subr.mxu0 0.0
    %1473 = vmatpush1.msra.mxu0 0.0
    %1474 = vmatprep.subr.mxu0 0.0
    %1475 = vmatpush1.msra.mxu0 0.0
    %1476 = vmatprep.subr.mxu0 0.0
    %1477 = vmatpush1.msra.mxu0 0.0
    %1478 = vmatprep.subr.mxu0 0.0
    %1479 = vmatpush1.msra.mxu0 0.0
    %1480 = vmatprep.subr.mxu0 0.0
    %1481 = vmatpush1.msra.mxu0 0.0
    %1482 = vmatprep.subr.mxu0 0.0
    %1483 = vmatpush1.msra.mxu0 0.0
    %1484 = vmatprep.subr.mxu0 0.0
    %1485 = vmatpush1.msra.mxu0 0.0
    %1486 = vmatprep.subr.mxu0 0.0
    %1487 = vmatpush1.msra.mxu0 0.0
    %1488 = vmatprep.subr.mxu0 0.0
    %1489 = vmatpush1.msra.mxu0 0.0
    %1490 = vmatprep.subr.mxu0 0.0
    %1491 = vmatpush1.msra.mxu0 0.0
    %1492 = vmatprep.subr.mxu0 0.0
    %1493 = vmatpush1.msra.mxu0 0.0
    %1494 = vmatprep.subr.mxu0 0.0
    %1495 = vmatpush1.msra.mxu0 0.0
    %1496 = vmatprep.subr.mxu0 0.0
    %1497 = vmatpush1.msra.mxu0 0.0
    %1498 = vmatprep.subr.mxu0 0.0
    %1499 = vmatpush1.msra.mxu0 0.0
    %1500 = vmatprep.subr.mxu0 0.0
    %1501 = vmatpush1.msra.mxu0 0.0
    %1502 = vmatprep.subr.mxu0 0.0
    %1503 = vmatpush1.msra.mxu0 0.0
    %1504 = vmatprep.subr.mxu0 0.0
    %1505 = vmatpush1.msra.mxu0 0.0
    %1506 = vmatprep.subr.mxu0 0.0
    %1507 = vmatpush1.msra.mxu0 0.0
    %1508 = vmatprep.subr.mxu0 0.0
    %1509 = vmatpush1.msra.mxu0 0.0
    %1510 = vmatprep.subr.mxu0 0.0
    %1511 = vmatpush1.msra.mxu0 0.0
    %1512 = vmatprep.subr.mxu0 0.0
    %1513 = vmatpush1.msra.mxu0 0.0
    %1514 = vmatprep.mubr.f32.mxu0 0.0
    %v1515 = vand.u32 %v1099, 4294901760
    %1516 = vmatmul.mubr.f32.gmra.mrb[0].mxu0 %v1515
    %v1517 = vpop.f32.mrb[0].mxu0
    %v1518 = vadd.f32 %v1433, %v1517
    %v1519 = vpop.f32.mrb[0].mxu0
    %1520 = vmatprep.mubr.f32.mxu0 0.0
    %v1521 = vand.u32 %v1102, 4294901760
    %1522 = vmatmul.mubr.f32.gmra.mrb[0].mxu0 %v1521
    %v1523 = vpop.f32.mrb[0].mxu0
    %v1524 = vadd.f32 %v1441, %v1523
    %v1525 = vpop.f32.mrb[0].mxu0
    %1526 = vdwg.mxu0
    %1527 = vmatprep.subr.mxu0 0.0
    %v1528 = vand.u32 %v580, 4294901760
    %1529 = vmatpush1.msra.mxu0 %v1528
    %1530 = vmatprep.subr.mxu0 0.0
    %v1531 = vand.u32 %v586, 4294901760
    %1532 = vmatpush1.msra.mxu0 %v1531
    %1533 = vmatprep.subr.mxu0 0.0
    %1534 = vmatpush1.msra.mxu0 0.0
    %1535 = vmatprep.subr.mxu0 0.0
    %1536 = vmatpush1.msra.mxu0 0.0
    %1537 = vmatprep.subr.mxu0 0.0
    %1538 = vmatpush1.msra.mxu0 0.0
    %1539 = vmatprep.subr.mxu0 0.0
    %1540 = vmatpush1.msra.mxu0 0.0
    %1541 = vmatprep.subr.mxu0 0.0
    %1542 = vmatpush1.msra.mxu0 0.0
    %1543 = vmatprep.subr.mxu0 0.0
    %1544 = vmatpush1.msra.mxu0 0.0
    %1545 = vmatprep.subr.mxu0 0.0
    %1546 = vmatpush1.msra.mxu0 0.0
    %1547 = vmatprep.subr.mxu0 0.0
    %1548 = vmatpush1.msra.mxu0 0.0
    %1549 = vmatprep.subr.mxu0 0.0
    %1550 = vmatpush1.msra.mxu0 0.0
    %1551 = vmatprep.subr.mxu0 0.0
    %1552 = vmatpush1.msra.mxu0 0.0
    %1553 = vmatprep.subr.mxu0 0.0
    %1554 = vmatpush1.msra.mxu0 0.0
    %1555 = vmatprep.subr.mxu0 0.0
    %1556 = vmatpush1.msra.mxu0 0.0
    %1557 = vmatprep.subr.mxu0 0.0
    %1558 = vmatpush1.msra.mxu0 0.0
    %1559 = vmatprep.subr.mxu0 0.0
    %1560 = vmatpush1.msra.mxu0 0.0
    %1561 = vmatprep.subr.mxu0 0.0
    %1562 = vmatpush1.msra.mxu0 0.0
    %1563 = vmatprep.subr.mxu0 0.0
    %1564 = vmatpush1.msra.mxu0 0.0
    %1565 = vmatprep.subr.mxu0 0.0
    %1566 = vmatpush1.msra.mxu0 0.0
    %1567 = vmatprep.subr.mxu0 0.0
    %1568 = vmatpush1.msra.mxu0 0.0
    %1569 = vmatprep.subr.mxu0 0.0
    %1570 = vmatpush1.msra.mxu0 0.0
    %1571 = vmatprep.subr.mxu0 0.0
    %1572 = vmatpush1.msra.mxu0 0.0
    %1573 = vmatprep.subr.mxu0 0.0
    %1574 = vmatpush1.msra.mxu0 0.0
    %1575 = vmatprep.subr.mxu0 0.0
    %1576 = vmatpush1.msra.mxu0 0.0
    %1577 = vmatprep.subr.mxu0 0.0
    %1578 = vmatpush1.msra.mxu0 0.0
    %1579 = vmatprep.subr.mxu0 0.0
    %1580 = vmatpush1.msra.mxu0 0.0
    %1581 = vmatprep.subr.mxu0 0.0
    %1582 = vmatpush1.msra.mxu0 0.0
    %1583 = vmatprep.subr.mxu0 0.0
    %1584 = vmatpush1.msra.mxu0 0.0
    %1585 = vmatprep.subr.mxu0 0.0
    %1586 = vmatpush1.msra.mxu0 0.0
    %1587 = vmatprep.subr.mxu0 0.0
    %1588 = vmatpush1.msra.mxu0 0.0
    %1589 = vmatprep.subr.mxu0 0.0
    %1590 = vmatpush1.msra.mxu0 0.0
    %1591 = vmatprep.subr.mxu0 0.0
    %1592 = vmatpush1.msra.mxu0 0.0
    %1593 = vmatprep.mubr.f32.mxu0 0.0
    %v1594 = vand.u32 %v1099, 4294901760
    %1595 = vmatmul.mubr.f32.gmra.mrb[0].mxu0 %v1594
    %v1596 = vpop.f32.mrb[0].mxu0
    %v1597 = vadd.f32 %v1518, %v1596
    %v1598 = vpop.f32.mrb[0].mxu0
    %1599 = vmatprep.mubr.f32.mxu0 0.0
    %v1600 = vand.u32 %v1102, 4294901760
    %1601 = vmatmul.mubr.f32.gmra.mrb[0].mxu0 %v1600
    %v1602 = vpop.f32.mrb[0].mxu0
    %v1603 = vadd.f32 %v1524, %v1602
    %v1604 = vpop.f32.mrb[0].mxu0
    %1605 = vdwg.mxu0
    %1606 = vmatprep.subr.mxu0 0.0
    %v1607 = vand.u32 %v1597, 4294901760
    %1608 = vmatpush1.msra.mxu0 %v1607
    %1609 = vmatprep.subr.mxu0 0.0
    %v1610 = vand.u32 %v1603, 4294901760
    %1611 = vmatpush1.msra.mxu0 %v1610
    %1612 = vmatprep.subr.mxu0 0.0
    %1613 = vmatpush1.msra.mxu0 0.0
    %1614 = vmatprep.subr.mxu0 0.0
    %1615 = vmatpush1.msra.mxu0 0.0
    %1616 = vmatprep.subr.mxu0 0.0
    %1617 = vmatpush1.msra.mxu0 0.0
    %1618 = vmatprep.subr.mxu0 0.0
    %1619 = vmatpush1.msra.mxu0 0.0
    %1620 = vmatprep.subr.mxu0 0.0
    %1621 = vmatpush1.msra.mxu0 0.0
    %1622 = vmatprep.subr.mxu0 0.0
    %1623 = vmatpush1.msra.mxu0 0.0
    %1624 = vmatprep.subr.mxu0 0.0
    %1625 = vmatpush1.msra.mxu0 0.0
    %1626 = vmatprep.subr.mxu0 0.0
    %1627 = vmatpush1.msra.mxu0 0.0
    %1628 = vmatprep.subr.mxu0 0.0
    %1629 = vmatpush1.msra.mxu0 0.0
    %1630 = vmatprep.subr.mxu0 0.0
    %1631 = vmatpush1.msra.mxu0 0.0
    %1632 = vmatprep.subr.mxu0 0.0
    %1633 = vmatpush1.msra.mxu0 0.0
    %1634 = vmatprep.subr.mxu0 0.0
    %1635 = vmatpush1.msra.mxu0 0.0
    %1636 = vmatprep.subr.mxu0 0.0
    %1637 = vmatpush1.msra.mxu0 0.0
    %1638 = vmatprep.subr.mxu0 0.0
    %1639 = vmatpush1.msra.mxu0 0.0
    %1640 = vmatprep.subr.mxu0 0.0
    %1641 = vmatpush1.msra.mxu0 0.0
    %1642 = vmatprep.subr.mxu0 0.0
    %1643 = vmatpush1.msra.mxu0 0.0
    %1644 = vmatprep.subr.mxu0 0.0
    %1645 = vmatpush1.msra.mxu0 0.0
    %1646 = vmatprep.subr.mxu0 0.0
    %1647 = vmatpush1.msra.mxu0 0.0
    %1648 = vmatprep.subr.mxu0 0.0
    %1649 = vmatpush1.msra.mxu0 0.0
    %1650 = vmatprep.subr.mxu0 0.0
    %1651 = vmatpush1.msra.mxu0 0.0
    %1652 = vmatprep.subr.mxu0 0.0
    %1653 = vmatpush1.msra.mxu0 0.0
    %1654 = vmatprep.subr.mxu0 0.0
    %1655 = vmatpush1.msra.mxu0 0.0
    %1656 = vmatprep.subr.mxu0 0.0
    %1657 = vmatpush1.msra.mxu0 0.0
    %1658 = vmatprep.subr.mxu0 0.0
    %1659 = vmatpush1.msra.mxu0 0.0
    %1660 = vmatprep.subr.mxu0 0.0
    %1661 = vmatpush1.msra.mxu0 0.0
    %1662 = vmatprep.subr.mxu0 0.0
    %1663 = vmatpush1.msra.mxu0 0.0
    %1664 = vmatprep.subr.mxu0 0.0
    %1665 = vmatpush1.msra.mxu0 0.0
    %1666 = vmatprep.subr.mxu0 0.0
    %1667 = vmatpush1.msra.mxu0 0.0
    %1668 = vmatprep.subr.mxu0 0.0
    %1669 = vmatpush1.msra.mxu0 0.0
    %1670 = vmatprep.subr.mxu0 0.0
    %1671 = vmatpush1.msra.mxu0 0.0
    %1672 = vmatprep.mubr.f32.mxu0 0.0
    %v1673 = vand.u32 %v1099, 4294901760
    %v1674 = vsub.f32 %v1099, %v1673
    %v1675 = vand.u32 %v1674, 4294901760
    %v1676 = vsub.f32 %v1674, %v1675
    %v1677 = vand.u32 %v1676, 4294901760
    %1678 = vmatmul.mubr.f32.gmra.mrb[0].mxu0 %v1677
    %v1679 = vpop.f32.mrb[0].mxu0
    %v1680 = vadd.f32 0.0, %v1679
    %v1681 = vpop.f32.mrb[0].mxu0
    %1682 = vmatprep.mubr.f32.mxu0 0.0
    %v1683 = vand.u32 %v1102, 4294901760
    %v1684 = vsub.f32 %v1102, %v1683
    %v1685 = vand.u32 %v1684, 4294901760
    %v1686 = vsub.f32 %v1684, %v1685
    %v1687 = vand.u32 %v1686, 4294901760
    %1688 = vmatmul.mubr.f32.gmra.mrb[0].mxu0 %v1687
    %v1689 = vpop.f32.mrb[0].mxu0
    %v1690 = vadd.f32 0.0, %v1689
    %v1691 = vpop.f32.mrb[0].mxu0
    %1692 = vdwg.mxu0
    %1693 = vmatprep.subr.mxu0 0.0
    %v1694 = vand.u32 %v1597, 4294901760
    %v1695 = vsub.f32 %v1597, %v1694
    %v1696 = vand.u32 %v1695, 4294901760
    %v1697 = vsub.f32 %v1695, %v1696
    %v1698 = vand.u32 %v1697, 4294901760
    %1699 = vmatpush1.msra.mxu0 %v1698
    %1700 = vmatprep.subr.mxu0 0.0
    %v1701 = vand.u32 %v1603, 4294901760
    %v1702 = vsub.f32 %v1603, %v1701
    %v1703 = vand.u32 %v1702, 4294901760
    %v1704 = vsub.f32 %v1702, %v1703
    %v1705 = vand.u32 %v1704, 4294901760
    %1706 = vmatpush1.msra.mxu0 %v1705
    %1707 = vmatprep.subr.mxu0 0.0
    %1708 = vmatpush1.msra.mxu0 0.0
    %1709 = vmatprep.subr.mxu0 0.0
    %1710 = vmatpush1.msra.mxu0 0.0
    %1711 = vmatprep.subr.mxu0 0.0
    %1712 = vmatpush1.msra.mxu0 0.0
    %1713 = vmatprep.subr.mxu0 0.0
    %1714 = vmatpush1.msra.mxu0 0.0
    %1715 = vmatprep.subr.mxu0 0.0
    %1716 = vmatpush1.msra.mxu0 0.0
    %1717 = vmatprep.subr.mxu0 0.0
    %1718 = vmatpush1.msra.mxu0 0.0
    %1719 = vmatprep.subr.mxu0 0.0
    %1720 = vmatpush1.msra.mxu0 0.0
    %1721 = vmatprep.subr.mxu0 0.0
    %1722 = vmatpush1.msra.mxu0 0.0
    %1723 = vmatprep.subr.mxu0 0.0
    %1724 = vmatpush1.msra.mxu0 0.0
    %1725 = vmatprep.subr.mxu0 0.0
    %1726 = vmatpush1.msra.mxu0 0.0
    %1727 = vmatprep.subr.mxu0 0.0
    %1728 = vmatpush1.msra.mxu0 0.0
    %1729 = vmatprep.subr.mxu0 0.0
    %1730 = vmatpush1.msra.mxu0 0.0
    %1731 = vmatprep.subr.mxu0 0.0
    %1732 = vmatpush1.msra.mxu0 0.0
    %1733 = vmatprep.subr.mxu0 0.0
    %1734 = vmatpush1.msra.mxu0 0.0
    %1735 = vmatprep.subr.mxu0 0.0
    %1736 = vmatpush1.msra.mxu0 0.0
    %1737 = vmatprep.subr.mxu0 0.0
    %1738 = vmatpush1.msra.mxu0 0.0
    %1739 = vmatprep.subr.mxu0 0.0
    %1740 = vmatpush1.msra.mxu0 0.0
    %1741 = vmatprep.subr.mxu0 0.0
    %1742 = vmatpush1.msra.mxu0 0.0
    %1743 = vmatprep.subr.mxu0 0.0
    %1744 = vmatpush1.msra.mxu0 0.0
    %1745 = vmatprep.subr.mxu0 0.0
    %1746 = vmatpush1.msra.mxu0 0.0
    %1747 = vmatprep.subr.mxu0 0.0
    %1748 = vmatpush1.msra.mxu0 0.0
    %1749 = vmatprep.subr.mxu0 0.0
    %1750 = vmatpush1.msra.mxu0 0.0
    %1751 = vmatprep.subr.mxu0 0.0
    %1752 = vmatpush1.msra.mxu0 0.0
    %1753 = vmatprep.subr.mxu0 0.0
    %1754 = vmatpush1.msra.mxu0 0.0
    %1755 = vmatprep.subr.mxu0 0.0
    %1756 = vmatpush1.msra.mxu0 0.0
    %1757 = vmatprep.subr.mxu0 0.0
    %1758 = vmatpush1.msra.mxu0 0.0
    %1759 = vmatprep.subr.mxu0 0.0
    %1760 = vmatpush1.msra.mxu0 0.0
    %1761 = vmatprep.subr.mxu0 0.0
    %1762 = vmatpush1.msra.mxu0 0.0
    %1763 = vmatprep.subr.mxu0 0.0
    %1764 = vmatpush1.msra.mxu0 0.0
    %1765 = vmatprep.subr.mxu0 0.0
    %1766 = vmatpush1.msra.mxu0 0.0
    %1767 = vmatprep.mubr.f32.mxu0 0.0
    %v1768 = vand.u32 %v1099, 4294901760
    %1769 = vmatmul.mubr.f32.gmra.mrb[0].mxu0 %v1768
    %v1770 = vpop.f32.mrb[0].mxu0
    %v1771 = vadd.f32 %v1680, %v1770
    %v1772 = vpop.f32.mrb[0].mxu0
    %1773 = vmatprep.mubr.f32.mxu0 0.0
    %v1774 = vand.u32 %v1102, 4294901760
    %1775 = vmatmul.mubr.f32.gmra.mrb[0].mxu0 %v1774
    %v1776 = vpop.f32.mrb[0].mxu0
    %v1777 = vadd.f32 %v1690, %v1776
    %v1778 = vpop.f32.mrb[0].mxu0
    %1779 = vdwg.mxu0
    %1780 = vmatprep.subr.mxu0 0.0
    %v1781 = vand.u32 %v1597, 4294901760
    %v1782 = vsub.f32 %v1597, %v1781
    %1783 = vmatpush1.msra.mxu0 %v1782
    %1784 = vmatprep.subr.mxu0 0.0
    %v1785 = vand.u32 %v1603, 4294901760
    %v1786 = vsub.f32 %v1603, %v1785
    %1787 = vmatpush1.msra.mxu0 %v1786
    %1788 = vmatprep.subr.mxu0 0.0
    %1789 = vmatpush1.msra.mxu0 0.0
    %1790 = vmatprep.subr.mxu0 0.0
    %1791 = vmatpush1.msra.mxu0 0.0
    %1792 = vmatprep.subr.mxu0 0.0
    %1793 = vmatpush1.msra.mxu0 0.0
    %1794 = vmatprep.subr.mxu0 0.0
    %1795 = vmatpush1.msra.mxu0 0.0
    %1796 = vmatprep.subr.mxu0 0.0
    %1797 = vmatpush1.msra.mxu0 0.0
    %1798 = vmatprep.subr.mxu0 0.0
    %1799 = vmatpush1.msra.mxu0 0.0
    %1800 = vmatprep.subr.mxu0 0.0
    %1801 = vmatpush1.msra.mxu0 0.0
    %1802 = vmatprep.subr.mxu0 0.0
    %1803 = vmatpush1.msra.mxu0 0.0
    %1804 = vmatprep.subr.mxu0 0.0
    %1805 = vmatpush1.msra.mxu0 0.0
    %1806 = vmatprep.subr.mxu0 0.0
    %1807 = vmatpush1.msra.mxu0 0.0
    %1808 = vmatprep.subr.mxu0 0.0
    %1809 = vmatpush1.msra.mxu0 0.0
    %1810 = vmatprep.subr.mxu0 0.0
    %1811 = vmatpush1.msra.mxu0 0.0
    %1812 = vmatprep.subr.mxu0 0.0
    %1813 = vmatpush1.msra.mxu0 0.0
    %1814 = vmatprep.subr.mxu0 0.0
    %1815 = vmatpush1.msra.mxu0 0.0
    %1816 = vmatprep.subr.mxu0 0.0
    %1817 = vmatpush1.msra.mxu0 0.0
    %1818 = vmatprep.subr.mxu0 0.0
    %1819 = vmatpush1.msra.mxu0 0.0
    %1820 = vmatprep.subr.mxu0 0.0
    %1821 = vmatpush1.msra.mxu0 0.0
    %1822 = vmatprep.subr.mxu0 0.0
    %1823 = vmatpush1.msra.mxu0 0.0
    %1824 = vmatprep.subr.mxu0 0.0
    %1825 = vmatpush1.msra.mxu0 0.0
    %1826 = vmatprep.subr.mxu0 0.0
    %1827 = vmatpush1.msra.mxu0 0.0
    %1828 = vmatprep.subr.mxu0 0.0
    %1829 = vmatpush1.msra.mxu0 0.0
    %1830 = vmatprep.subr.mxu0 0.0
    %1831 = vmatpush1.msra.mxu0 0.0
    %1832 = vmatprep.subr.mxu0 0.0
    %1833 = vmatpush1.msra.mxu0 0.0
    %1834 = vmatprep.subr.mxu0 0.0
    %1835 = vmatpush1.msra.mxu0 0.0
    %1836 = vmatprep.subr.mxu0 0.0
    %1837 = vmatpush1.msra.mxu0 0.0
    %1838 = vmatprep.subr.mxu0 0.0
    %1839 = vmatpush1.msra.mxu0 0.0
    %1840 = vmatprep.subr.mxu0 0.0
    %1841 = vmatpush1.msra.mxu0 0.0
    %1842 = vmatprep.subr.mxu0 0.0
    %1843 = vmatpush1.msra.mxu0 0.0
    %1844 = vmatprep.subr.mxu0 0.0
    %1845 = vmatpush1.msra.mxu0 0.0
    %1846 = vmatprep.subr.mxu0 0.0
    %1847 = vmatpush1.msra.mxu0 0.0
    %1848 = vmatprep.mubr.f32.mxu0 0.0
    %v1849 = vand.u32 %v1099, 4294901760
    %v1850 = vsub.f32 %v1099, %v1849
    %1851 = vmatmul.mubr.f32.gmra.mrb[0].mxu0 %v1850
    %v1852 = vpop.f32.mrb[0].mxu0
    %v1853 = vadd.f32 %v1771, %v1852
    %v1854 = vpop.f32.mrb[0].mxu0
    %1855 = vmatprep.mubr.f32.mxu0 0.0
    %v1856 = vand.u32 %v1102, 4294901760
    %v1857 = vsub.f32 %v1102, %v1856
    %1858 = vmatmul.mubr.f32.gmra.mrb[0].mxu0 %v1857
    %v1859 = vpop.f32.mrb[0].mxu0
    %v1860 = vadd.f32 %v1777, %v1859
    %v1861 = vpop.f32.mrb[0].mxu0
    %1862 = vdwg.mxu0
    %1863 = vmatprep.subr.mxu0 0.0
    %v1864 = vand.u32 %v1597, 4294901760
    %1865 = vmatpush1.msra.mxu0 %v1864
    %1866 = vmatprep.subr.mxu0 0.0
    %v1867 = vand.u32 %v1603, 4294901760
    %1868 = vmatpush1.msra.mxu0 %v1867
    %1869 = vmatprep.subr.mxu0 0.0
    %1870 = vmatpush1.msra.mxu0 0.0
    %1871 = vmatprep.subr.mxu0 0.0
    %1872 = vmatpush1.msra.mxu0 0.0
    %1873 = vmatprep.subr.mxu0 0.0
    %1874 = vmatpush1.msra.mxu0 0.0
    %1875 = vmatprep.subr.mxu0 0.0
    %1876 = vmatpush1.msra.mxu0 0.0
    %1877 = vmatprep.subr.mxu0 0.0
    %1878 = vmatpush1.msra.mxu0 0.0
    %1879 = vmatprep.subr.mxu0 0.0
    %1880 = vmatpush1.msra.mxu0 0.0
    %1881 = vmatprep.subr.mxu0 0.0
    %1882 = vmatpush1.msra.mxu0 0.0
    %1883 = vmatprep.subr.mxu0 0.0
    %1884 = vmatpush1.msra.mxu0 0.0
    %1885 = vmatprep.subr.mxu0 0.0
    %1886 = vmatpush1.msra.mxu0 0.0
    %1887 = vmatprep.subr.mxu0 0.0
    %1888 = vmatpush1.msra.mxu0 0.0
    %1889 = vmatprep.subr.mxu0 0.0
    %1890 = vmatpush1.msra.mxu0 0.0
    %1891 = vmatprep.subr.mxu0 0.0
    %1892 = vmatpush1.msra.mxu0 0.0
    %1893 = vmatprep.subr.mxu0 0.0
    %1894 = vmatpush1.msra.mxu0 0.0
    %1895 = vmatprep.subr.mxu0 0.0
    %1896 = vmatpush1.msra.mxu0 0.0
    %1897 = vmatprep.subr.mxu0 0.0
    %1898 = vmatpush1.msra.mxu0 0.0
    %1899 = vmatprep.subr.mxu0 0.0
    %1900 = vmatpush1.msra.mxu0 0.0
    %1901 = vmatprep.subr.mxu0 0.0
    %1902 = vmatpush1.msra.mxu0 0.0
    %1903 = vmatprep.subr.mxu0 0.0
    %1904 = vmatpush1.msra.mxu0 0.0
    %1905 = vmatprep.subr.mxu0 0.0
    %1906 = vmatpush1.msra.mxu0 0.0
    %1907 = vmatprep.subr.mxu0 0.0
    %1908 = vmatpush1.msra.mxu0 0.0
    %1909 = vmatprep.subr.mxu0 0.0
    %1910 = vmatpush1.msra.mxu0 0.0
    %1911 = vmatprep.subr.mxu0 0.0
    %1912 = vmatpush1.msra.mxu0 0.0
    %1913 = vmatprep.subr.mxu0 0.0
    %1914 = vmatpush1.msra.mxu0 0.0
    %1915 = vmatprep.subr.mxu0 0.0
    %1916 = vmatpush1.msra.mxu0 0.0
    %1917 = vmatprep.subr.mxu0 0.0
    %1918 = vmatpush1.msra.mxu0 0.0
    %1919 = vmatprep.subr.mxu0 0.0
    %1920 = vmatpush1.msra.mxu0 0.0
    %1921 = vmatprep.subr.mxu0 0.0
    %1922 = vmatpush1.msra.mxu0 0.0
    %1923 = vmatprep.subr.mxu0 0.0
    %1924 = vmatpush1.msra.mxu0 0.0
    %1925 = vmatprep.subr.mxu0 0.0
    %1926 = vmatpush1.msra.mxu0 0.0
    %1927 = vmatprep.subr.mxu0 0.0
    %1928 = vmatpush1.msra.mxu0 0.0
    %1929 = vmatprep.mubr.f32.mxu0 0.0
    %v1930 = vand.u32 %v1099, 4294901760
    %v1931 = vsub.f32 %v1099, %v1930
    %v1932 = vand.u32 %v1931, 4294901760
    %1933 = vmatmul.mubr.f32.gmra.mrb[0].mxu0 %v1932
    %v1934 = vpop.f32.mrb[0].mxu0
    %v1935 = vadd.f32 %v1853, %v1934
    %v1936 = vpop.f32.mrb[0].mxu0
    %1937 = vmatprep.mubr.f32.mxu0 0.0
    %v1938 = vand.u32 %v1102, 4294901760
    %v1939 = vsub.f32 %v1102, %v1938
    %v1940 = vand.u32 %v1939, 4294901760
    %1941 = vmatmul.mubr.f32.gmra.mrb[0].mxu0 %v1940
    %v1942 = vpop.f32.mrb[0].mxu0
    %v1943 = vadd.f32 %v1860, %v1942
    %v1944 = vpop.f32.mrb[0].mxu0
    %1945 = vdwg.mxu0
    %1946 = vmatprep.subr.mxu0 0.0
    %v1947 = vand.u32 %v1597, 4294901760
    %v1948 = vsub.f32 %v1597, %v1947
    %v1949 = vand.u32 %v1948, 4294901760
    %1950 = vmatpush1.msra.mxu0 %v1949
    %1951 = vmatprep.subr.mxu0 0.0
    %v1952 = vand.u32 %v1603, 4294901760
    %v1953 = vsub.f32 %v1603, %v1952
    %v1954 = vand.u32 %v1953, 4294901760
    %1955 = vmatpush1.msra.mxu0 %v1954
    %1956 = vmatprep.subr.mxu0 0.0
    %1957 = vmatpush1.msra.mxu0 0.0
    %1958 = vmatprep.subr.mxu0 0.0
    %1959 = vmatpush1.msra.mxu0 0.0
    %1960 = vmatprep.subr.mxu0 0.0
    %1961 = vmatpush1.msra.mxu0 0.0
    %1962 = vmatprep.subr.mxu0 0.0
    %1963 = vmatpush1.msra.mxu0 0.0
    %1964 = vmatprep.subr.mxu0 0.0
    %1965 = vmatpush1.msra.mxu0 0.0
    %1966 = vmatprep.subr.mxu0 0.0
    %1967 = vmatpush1.msra.mxu0 0.0
    %1968 = vmatprep.subr.mxu0 0.0
    %1969 = vmatpush1.msra.mxu0 0.0
    %1970 = vmatprep.subr.mxu0 0.0
    %1971 = vmatpush1.msra.mxu0 0.0
    %1972 = vmatprep.subr.mxu0 0.0
    %1973 = vmatpush1.msra.mxu0 0.0
    %1974 = vmatprep.subr.mxu0 0.0
    %1975 = vmatpush1.msra.mxu0 0.0
    %1976 = vmatprep.subr.mxu0 0.0
    %1977 = vmatpush1.msra.mxu0 0.0
    %1978 = vmatprep.subr.mxu0 0.0
    %1979 = vmatpush1.msra.mxu0 0.0
    %1980 = vmatprep.subr.mxu0 0.0
    %1981 = vmatpush1.msra.mxu0 0.0
    %1982 = vmatprep.subr.mxu0 0.0
    %1983 = vmatpush1.msra.mxu0 0.0
    %1984 = vmatprep.subr.mxu0 0.0
    %1985 = vmatpush1.msra.mxu0 0.0
    %1986 = vmatprep.subr.mxu0 0.0
    %1987 = vmatpush1.msra.mxu0 0.0
    %1988 = vmatprep.subr.mxu0 0.0
    %1989 = vmatpush1.msra.mxu0 0.0
    %1990 = vmatprep.subr.mxu0 0.0
    %1991 = vmatpush1.msra.mxu0 0.0
    %1992 = vmatprep.subr.mxu0 0.0
    %1993 = vmatpush1.msra.mxu0 0.0
    %1994 = vmatprep.subr.mxu0 0.0
    %1995 = vmatpush1.msra.mxu0 0.0
    %1996 = vmatprep.subr.mxu0 0.0
    %1997 = vmatpush1.msra.mxu0 0.0
    %1998 = vmatprep.subr.mxu0 0.0
    %1999 = vmatpush1.msra.mxu0 0.0
    %2000 = vmatprep.subr.mxu0 0.0
    %2001 = vmatpush1.msra.mxu0 0.0
    %2002 = vmatprep.subr.mxu0 0.0
    %2003 = vmatpush1.msra.mxu0 0.0
    %2004 = vmatprep.subr.mxu0 0.0
    %2005 = vmatpush1.msra.mxu0 0.0
    %2006 = vmatprep.subr.mxu0 0.0
    %2007 = vmatpush1.msra.mxu0 0.0
    %2008 = vmatprep.subr.mxu0 0.0
    %2009 = vmatpush1.msra.mxu0 0.0
    %2010 = vmatprep.subr.mxu0 0.0
    %2011 = vmatpush1.msra.mxu0 0.0
    %2012 = vmatprep.subr.mxu0 0.0
    %2013 = vmatpush1.msra.mxu0 0.0
    %2014 = vmatprep.subr.mxu0 0.0
    %2015 = vmatpush1.msra.mxu0 0.0
    %2016 = vmatprep.mubr.f32.mxu0 0.0
    %v2017 = vand.u32 %v1099, 4294901760
    %2018 = vmatmul.mubr.f32.gmra.mrb[0].mxu0 %v2017
    %v2019 = vpop.f32.mrb[0].mxu0
    %v2020 = vadd.f32 %v1935, %v2019
    %v2021 = vpop.f32.mrb[0].mxu0
    %2022 = vmatprep.mubr.f32.mxu0 0.0
    %v2023 = vand.u32 %v1102, 4294901760
    %2024 = vmatmul.mubr.f32.gmra.mrb[0].mxu0 %v2023
    %v2025 = vpop.f32.mrb[0].mxu0
    %v2026 = vadd.f32 %v1943, %v2025
    %v2027 = vpop.f32.mrb[0].mxu0
    %2028 = vdwg.mxu0
    %2029 = vmatprep.subr.mxu0 0.0
    %v2030 = vand.u32 %v1597, 4294901760
    %2031 = vmatpush1.msra.mxu0 %v2030
    %2032 = vmatprep.subr.mxu0 0.0
    %v2033 = vand.u32 %v1603, 4294901760
    %2034 = vmatpush1.msra.mxu0 %v2033
    %2035 = vmatprep.subr.mxu0 0.0
    %2036 = vmatpush1.msra.mxu0 0.0
    %2037 = vmatprep.subr.mxu0 0.0
    %2038 = vmatpush1.msra.mxu0 0.0
    %2039 = vmatprep.subr.mxu0 0.0
    %2040 = vmatpush1.msra.mxu0 0.0
    %2041 = vmatprep.subr.mxu0 0.0
    %2042 = vmatpush1.msra.mxu0 0.0
    %2043 = vmatprep.subr.mxu0 0.0
    %2044 = vmatpush1.msra.mxu0 0.0
    %2045 = vmatprep.subr.mxu0 0.0
    %2046 = vmatpush1.msra.mxu0 0.0
    %2047 = vmatprep.subr.mxu0 0.0
    %2048 = vmatpush1.msra.mxu0 0.0
    %2049 = vmatprep.subr.mxu0 0.0
    %2050 = vmatpush1.msra.mxu0 0.0
    %2051 = vmatprep.subr.mxu0 0.0
    %2052 = vmatpush1.msra.mxu0 0.0
    %2053 = vmatprep.subr.mxu0 0.0
    %2054 = vmatpush1.msra.mxu0 0.0
    %2055 = vmatprep.subr.mxu0 0.0
    %2056 = vmatpush1.msra.mxu0 0.0
    %2057 = vmatprep.subr.mxu0 0.0
    %2058 = vmatpush1.msra.mxu0 0.0
    %2059 = vmatprep.subr.mxu0 0.0
    %2060 = vmatpush1.msra.mxu0 0.0
    %2061 = vmatprep.subr.mxu0 0.0
    %2062 = vmatpush1.msra.mxu0 0.0
    %2063 = vmatprep.subr.mxu0 0.0
    %2064 = vmatpush1.msra.mxu0 0.0
    %2065 = vmatprep.subr.mxu0 0.0
    %2066 = vmatpush1.msra.mxu0 0.0
    %2067 = vmatprep.subr.mxu0 0.0
    %2068 = vmatpush1.msra.mxu0 0.0
    %2069 = vmatprep.subr.mxu0 0.0
    %2070 = vmatpush1.msra.mxu0 0.0
    %2071 = vmatprep.subr.mxu0 0.0
    %2072 = vmatpush1.msra.mxu0 0.0
    %2073 = vmatprep.subr.mxu0 0.0
    %2074 = vmatpush1.msra.mxu0 0.0
    %2075 = vmatprep.subr.mxu0 0.0
    %2076 = vmatpush1.msra.mxu0 0.0
    %2077 = vmatprep.subr.mxu0 0.0
    %2078 = vmatpush1.msra.mxu0 0.0
    %2079 = vmatprep.subr.mxu0 0.0
    %2080 = vmatpush1.msra.mxu0 0.0
    %2081 = vmatprep.subr.mxu0 0.0
    %2082 = vmatpush1.msra.mxu0 0.0
    %2083 = vmatprep.subr.mxu0 0.0
    %2084 = vmatpush1.msra.mxu0 0.0
    %2085 = vmatprep.subr.mxu0 0.0
    %2086 = vmatpush1.msra.mxu0 0.0
    %2087 = vmatprep.subr.mxu0 0.0
    %2088 = vmatpush1.msra.mxu0 0.0
    %2089 = vmatprep.subr.mxu0 0.0
    %2090 = vmatpush1.msra.mxu0 0.0
    %2091 = vmatprep.subr.mxu0 0.0
    %2092 = vmatpush1.msra.mxu0 0.0
    %2093 = vmatprep.subr.mxu0 0.0
    %2094 = vmatpush1.msra.mxu0 0.0
    %2095 = vmatprep.mubr.f32.mxu0 0.0
    %v2096 = vand.u32 %v1099, 4294901760
    %2097 = vmatmul.mubr.f32.gmra.mrb[0].mxu0 %v2096
    %v2098 = vpop.f32.mrb[0].mxu0
    %v2099 = vadd.f32 %v2020, %v2098
    %v2100 = vpop.f32.mrb[0].mxu0
    %2101 = vmatprep.mubr.f32.mxu0 0.0
    %v2102 = vand.u32 %v1102, 4294901760
    %2103 = vmatmul.mubr.f32.gmra.mrb[0].mxu0 %v2102
    %v2104 = vpop.f32.mrb[0].mxu0
    %v2105 = vadd.f32 %v2026, %v2104
    %v2106 = vpop.f32.mrb[0].mxu0
    %2107 = vdwg.mxu0
    %v2108 = vmul.f32 %v2099, 2.0
    %v2109 = vmul.f32 %v2105, 2.0
    %v2110 = vsub.f32 %v2108, %v580
    %v2111 = vsub.f32 %v2109, %v586
    %2114 = vrot.lane.b32.xlu0 %v76, 118
    %v2115 = vpop.permute.xlu0 %2114
    %2116 = vrot.lane.b32.xlu0 %v77, 118
    %v2117 = vpop.permute.xlu0 %2116
    %2122 = vrot.lane.b32.xlu0 %v580, 118
    %v2123 = vpop.permute.xlu0 %2122
    %2124 = vrot.lane.b32.xlu0 %v586, 118
    %v2125 = vpop.permute.xlu0 %2124
    %2130 = vrot.lane.b32.xlu0 %v1093, 118
    %v2131 = vpop.permute.xlu0 %2130
    %2132 = vrot.lane.b32.xlu0 %v1094, 118
    %v2133 = vpop.permute.xlu0 %2132
    %2138 = vrot.lane.b32.xlu0 %v1597, 118
    %v2139 = vpop.permute.xlu0 %2138
    %2140 = vrot.lane.b32.xlu0 %v1603, 118
    %v2141 = vpop.permute.xlu0 %2140
    %2146 = vrot.lane.b32.xlu0 %v2110, 118
    %v2147 = vpop.permute.xlu0 %2146
    %2148 = vrot.lane.b32.xlu0 %v2111, 118
    %v2149 = vpop.permute.xlu0 %2148
    %v2152 = vld [vmem:[#allocation6] sm:$0xf]
    %v2153 = vld [vmem:[#allocation6 + $0x4] sm:$0x1]
    %v2154 = vpack.c.bf16 %v77, %v76
    %v2155 = vpack.c.bf16 %v2117, %v2115
    %s2156 = scalar_lea.vmem [#allocation6], 8
    %v2157 = vld [vmem:[%s2156] sm:$0xf]
    %v2158 = vld [vmem:[%s2156 + $0x4] sm:$0x1]
    %v2159 = vpack.c.bf16 %v586, %v580
    %v2160 = vpack.c.bf16 %v2125, %v2123
    %v2163 = vunpack.c.l.b16 %v2157
    %v2164 = vunpack.c.l.b16 %v2158
    %v2165 = vpack.c.b16 %v2164, %v2163
    %vm2166 = vcmask 80896
    %v2168 = vsel %vm2166, %v2159, 0
    %v2171 = vsel %vm2166, %v2160, 0
    %vm2173 = vcmask 1044480
    %v2175 = vsel %vm2173, %v2165, 0
    %2177 = vmatprep.subr.bf16.mxu0 0
    %2178 = vmatpush1.bf16.msra.mxu0 %v2175
    %2179 = vmatprep.subr.bf16.mxu0 0
    %2180 = vmatpush1.bf16.msra.mxu0 0
    %2181 = vmatprep.subr.bf16.mxu0 0
    %2182 = vmatpush1.bf16.msra.mxu0 0
    %2183 = vmatprep.subr.bf16.mxu0 0
    %2184 = vmatpush1.bf16.msra.mxu0 0
    %2185 = vmatprep.subr.bf16.mxu0 0
    %2186 = vmatpush1.bf16.msra.mxu0 0
    %2187 = vmatprep.subr.bf16.mxu0 0
    %2188 = vmatpush1.bf16.msra.mxu0 0
    %2189 = vmatprep.subr.bf16.mxu0 0
    %2190 = vmatpush1.bf16.msra.mxu0 0
    %2191 = vmatprep.subr.bf16.mxu0 0
    %2192 = vmatpush1.bf16.msra.mxu0 0
    %2193 = vmatprep.subr.bf16.mxu0 0
    %2194 = vmatpush1.bf16.msra.mxu0 0
    %2195 = vmatprep.subr.bf16.mxu0 0
    %2196 = vmatpush1.bf16.msra.mxu0 0
    %2197 = vmatprep.subr.bf16.mxu0 0
    %2198 = vmatpush1.bf16.msra.mxu0 0
    %2199 = vmatprep.subr.bf16.mxu0 0
    %2200 = vmatpush1.bf16.msra.mxu0 0
    %2201 = vmatprep.subr.bf16.mxu0 0
    %2202 = vmatpush1.bf16.msra.mxu0 0
    %2203 = vmatprep.subr.bf16.mxu0 0
    %2204 = vmatpush1.bf16.msra.mxu0 0
    %2205 = vmatprep.subr.bf16.mxu0 0
    %2206 = vmatpush1.bf16.msra.mxu0 0
    %2207 = vmatprep.subr.bf16.mxu0 0
    %2208 = vmatpush1.bf16.msra.mxu0 0
    %2209 = vmatprep.mubr.bf16.mxu0 0
    %2210 = vmatmul.mubr.bf16.gmra.mrb[0].mxu0 %v2168
    %v2211 = vpop.f32.mrb[0].mxu0
    %v2212 = vadd.f32 0.0, %v2211
    %v2213 = vpop.f32.mrb[0].mxu0
    %v2214 = vpop.f32.mrb[0].mxu0
    %v2215 = vadd.f32 0.0, %v2214
    %v2216 = vpop.f32.mrb[0].mxu0
    %2217 = vmatprep.mubr.bf16.mxu0 0
    %2218 = vmatmul.mubr.bf16.gmra.mrb[0].mxu0 %v2171
    %v2219 = vpop.f32.mrb[0].mxu0
    %v2220 = vadd.f32 0.0, %v2219
    %v2221 = vpop.f32.mrb[0].mxu0
    %v2222 = vpop.f32.mrb[0].mxu0
    %v2223 = vadd.f32 0.0, %v2222
    %v2224 = vpop.f32.mrb[0].mxu0
    %2225 = vdwg.mxu0
    %v2228 = vunpack.c.l.b16 %v2152
    %v2229 = vunpack.c.l.b16 %v2153
    %v2230 = vpack.c.b16 %v2229, %v2228
    %v2232 = vsel %vm2166, %v2154, 0
    %v2235 = vsel %vm2166, %v2155, 0
    %v2238 = vsel %vm2173, %v2230, 0
    %2240 = vmatprep.subr.bf16.mxu0 0
    %2241 = vmatpush1.bf16.msra.mxu0 %v2238
    %2242 = vmatprep.subr.bf16.mxu0 0
    %2243 = vmatpush1.bf16.msra.mxu0 0
    %2244 = vmatprep.subr.bf16.mxu0 0
    %2245 = vmatpush1.bf16.msra.mxu0 0
    %2246 = vmatprep.subr.bf16.mxu0 0
    %2247 = vmatpush1.bf16.msra.mxu0 0
    %2248 = vmatprep.subr.bf16.mxu0 0
    %2249 = vmatpush1.bf16.msra.mxu0 0
    %2250 = vmatprep.subr.bf16.mxu0 0
    %2251 = vmatpush1.bf16.msra.mxu0 0
    %2252 = vmatprep.subr.bf16.mxu0 0
    %2253 = vmatpush1.bf16.msra.mxu0 0
    %2254 = vmatprep.subr.bf16.mxu0 0
    %2255 = vmatpush1.bf16.msra.mxu0 0
    %2256 = vmatprep.subr.bf16.mxu0 0
    %2257 = vmatpush1.bf16.msra.mxu0 0
    %2258 = vmatprep.subr.bf16.mxu0 0
    %2259 = vmatpush1.bf16.msra.mxu0 0
    %2260 = vmatprep.subr.bf16.mxu0 0
    %2261 = vmatpush1.bf16.msra.mxu0 0
    %2262 = vmatprep.subr.bf16.mxu0 0
    %2263 = vmatpush1.bf16.msra.mxu0 0
    %2264 = vmatprep.subr.bf16.mxu0 0
    %2265 = vmatpush1.bf16.msra.mxu0 0
    %2266 = vmatprep.subr.bf16.mxu0 0
    %2267 = vmatpush1.bf16.msra.mxu0 0
    %2268 = vmatprep.subr.bf16.mxu0 0
    %2269 = vmatpush1.bf16.msra.mxu0 0
    %2270 = vmatprep.subr.bf16.mxu0 0
    %2271 = vmatpush1.bf16.msra.mxu0 0
    %2272 = vmatprep.mubr.bf16.mxu0 0
    %2273 = vmatmul.mubr.bf16.gmra.mrb[0].mxu0 %v2232
    %v2274 = vpop.f32.mrb[0].mxu0
    %v2275 = vadd.f32 %v2212, %v2274
    %v2276 = vpop.f32.mrb[0].mxu0
    %v2277 = vpop.f32.mrb[0].mxu0
    %v2278 = vadd.f32 %v2215, %v2277
    %v2279 = vpop.f32.mrb[0].mxu0
    %2280 = vmatprep.mubr.bf16.mxu0 0
    %2281 = vmatmul.mubr.bf16.gmra.mrb[0].mxu0 %v2235
    %v2282 = vpop.f32.mrb[0].mxu0
    %v2283 = vadd.f32 %v2220, %v2282
    %v2284 = vpop.f32.mrb[0].mxu0
    %v2285 = vpop.f32.mrb[0].mxu0
    %v2286 = vadd.f32 %v2223, %v2285
    %v2287 = vpop.f32.mrb[0].mxu0
    %2288 = vdwg.mxu0
    %s2289 = scalar_lea.vmem [#allocation6], 16
    %v2290 = vld [vmem:[%s2289] sm:$0xf]
    %v2291 = vld [vmem:[%s2289 + $0x4] sm:$0x1]
    %v2292 = vpack.c.bf16 %v1094, %v1093
    %v2293 = vpack.c.bf16 %v2133, %v2131
    %v2296 = vunpack.c.l.b16 %v2290
    %v2297 = vunpack.c.l.b16 %v2291
    %v2298 = vpack.c.b16 %v2297, %v2296
    %v2300 = vsel %vm2166, %v2292, 0
    %v2303 = vsel %vm2166, %v2293, 0
    %v2306 = vsel %vm2173, %v2298, 0
    %2308 = vmatprep.subr.bf16.mxu0 0
    %2309 = vmatpush1.bf16.msra.mxu0 %v2306
    %2310 = vmatprep.subr.bf16.mxu0 0
    %2311 = vmatpush1.bf16.msra.mxu0 0
    %2312 = vmatprep.subr.bf16.mxu0 0
    %2313 = vmatpush1.bf16.msra.mxu0 0
    %2314 = vmatprep.subr.bf16.mxu0 0
    %2315 = vmatpush1.bf16.msra.mxu0 0
    %2316 = vmatprep.subr.bf16.mxu0 0
    %2317 = vmatpush1.bf16.msra.mxu0 0
    %2318 = vmatprep.subr.bf16.mxu0 0
    %2319 = vmatpush1.bf16.msra.mxu0 0
    %2320 = vmatprep.subr.bf16.mxu0 0
    %2321 = vmatpush1.bf16.msra.mxu0 0
    %2322 = vmatprep.subr.bf16.mxu0 0
    %2323 = vmatpush1.bf16.msra.mxu0 0
    %2324 = vmatprep.subr.bf16.mxu0 0
    %2325 = vmatpush1.bf16.msra.mxu0 0
    %2326 = vmatprep.subr.bf16.mxu0 0
    %2327 = vmatpush1.bf16.msra.mxu0 0
    %2328 = vmatprep.subr.bf16.mxu0 0
    %2329 = vmatpush1.bf16.msra.mxu0 0
    %2330 = vmatprep.subr.bf16.mxu0 0
    %2331 = vmatpush1.bf16.msra.mxu0 0
    %2332 = vmatprep.subr.bf16.mxu0 0
    %2333 = vmatpush1.bf16.msra.mxu0 0
    %2334 = vmatprep.subr.bf16.mxu0 0
    %2335 = vmatpush1.bf16.msra.mxu0 0
    %2336 = vmatprep.subr.bf16.mxu0 0
    %2337 = vmatpush1.bf16.msra.mxu0 0
    %2338 = vmatprep.subr.bf16.mxu0 0
    %2339 = vmatpush1.bf16.msra.mxu0 0
    %2340 = vmatprep.mubr.bf16.mxu0 0
    %2341 = vmatmul.mubr.bf16.gmra.mrb[0].mxu0 %v2300
    %v2342 = vpop.f32.mrb[0].mxu0
    %v2343 = vadd.f32 0.0, %v2342
    %v2344 = vpop.f32.mrb[0].mxu0
    %v2345 = vpop.f32.mrb[0].mxu0
    %v2346 = vadd.f32 0.0, %v2345
    %v2347 = vpop.f32.mrb[0].mxu0
    %2348 = vmatprep.mubr.bf16.mxu0 0
    %2349 = vmatmul.mubr.bf16.gmra.mrb[0].mxu0 %v2303
    %v2350 = vpop.f32.mrb[0].mxu0
    %v2351 = vadd.f32 0.0, %v2350
    %v2352 = vpop.f32.mrb[0].mxu0
    %v2353 = vpop.f32.mrb[0].mxu0
    %v2354 = vadd.f32 0.0, %v2353
    %v2355 = vpop.f32.mrb[0].mxu0
    %2356 = vdwg.mxu0
    %v2357 = vadd.f32 %v2275, %v2343
    %v2358 = vadd.f32 %v2278, %v2346
    %v2359 = vadd.f32 %v2283, %v2351
    %v2360 = vadd.f32 %v2286, %v2354
    %s2361 = scalar_lea.vmem [#allocation6], 24
    %v2362 = vld [vmem:[%s2361] sm:$0xf]
    %v2363 = vld [vmem:[%s2361 + $0x4] sm:$0x1]
    %v2364 = vpack.c.bf16 %v1603, %v1597
    %v2365 = vpack.c.bf16 %v2141, %v2139
    %v2368 = vunpack.c.l.b16 %v2362
    %v2369 = vunpack.c.l.b16 %v2363
    %v2370 = vpack.c.b16 %v2369, %v2368
    %v2372 = vsel %vm2166, %v2364, 0
    %v2375 = vsel %vm2166, %v2365, 0
    %v2378 = vsel %vm2173, %v2370, 0
    %2380 = vmatprep.subr.bf16.mxu0 0
    %2381 = vmatpush1.bf16.msra.mxu0 %v2378
    %2382 = vmatprep.subr.bf16.mxu0 0
    %2383 = vmatpush1.bf16.msra.mxu0 0
    %2384 = vmatprep.subr.bf16.mxu0 0
    %2385 = vmatpush1.bf16.msra.mxu0 0
    %2386 = vmatprep.subr.bf16.mxu0 0
    %2387 = vmatpush1.bf16.msra.mxu0 0
    %2388 = vmatprep.subr.bf16.mxu0 0
    %2389 = vmatpush1.bf16.msra.mxu0 0
    %2390 = vmatprep.subr.bf16.mxu0 0
    %2391 = vmatpush1.bf16.msra.mxu0 0
    %2392 = vmatprep.subr.bf16.mxu0 0
    %2393 = vmatpush1.bf16.msra.mxu0 0
    %2394 = vmatprep.subr.bf16.mxu0 0
    %2395 = vmatpush1.bf16.msra.mxu0 0
    %2396 = vmatprep.subr.bf16.mxu0 0
    %2397 = vmatpush1.bf16.msra.mxu0 0
    %2398 = vmatprep.subr.bf16.mxu0 0
    %2399 = vmatpush1.bf16.msra.mxu0 0
    %2400 = vmatprep.subr.bf16.mxu0 0
    %2401 = vmatpush1.bf16.msra.mxu0 0
    %2402 = vmatprep.subr.bf16.mxu0 0
    %2403 = vmatpush1.bf16.msra.mxu0 0
    %2404 = vmatprep.subr.bf16.mxu0 0
    %2405 = vmatpush1.bf16.msra.mxu0 0
    %2406 = vmatprep.subr.bf16.mxu0 0
    %2407 = vmatpush1.bf16.msra.mxu0 0
    %2408 = vmatprep.subr.bf16.mxu0 0
    %2409 = vmatpush1.bf16.msra.mxu0 0
    %2410 = vmatprep.subr.bf16.mxu0 0
    %2411 = vmatpush1.bf16.msra.mxu0 0
    %2412 = vmatprep.mubr.bf16.mxu0 0
    %2413 = vmatmul.mubr.bf16.gmra.mrb[0].mxu0 %v2372
    %v2414 = vpop.f32.mrb[0].mxu0
    %v2415 = vadd.f32 0.0, %v2414
    %v2416 = vpop.f32.mrb[0].mxu0
    %v2417 = vpop.f32.mrb[0].mxu0
    %v2418 = vadd.f32 0.0, %v2417
    %v2419 = vpop.f32.mrb[0].mxu0
    %2420 = vmatprep.mubr.bf16.mxu0 0
    %2421 = vmatmul.mubr.bf16.gmra.mrb[0].mxu0 %v2375
    %v2422 = vpop.f32.mrb[0].mxu0
    %v2423 = vadd.f32 0.0, %v2422
    %v2424 = vpop.f32.mrb[0].mxu0
    %v2425 = vpop.f32.mrb[0].mxu0
    %v2426 = vadd.f32 0.0, %v2425
    %v2427 = vpop.f32.mrb[0].mxu0
    %2428 = vdwg.mxu0
    %v2429 = vadd.f32 %v2357, %v2415
    %v2430 = vadd.f32 %v2358, %v2418
    %v2431 = vadd.f32 %v2359, %v2423
    %v2432 = vadd.f32 %v2360, %v2426
    %s2433 = scalar_lea.vmem [#allocation6], 32
    %v2434 = vld [vmem:[%s2433] sm:$0xf]
    %v2435 = vld [vmem:[%s2433 + $0x4] sm:$0x1]
    %v2436 = vpack.c.bf16 %v2111, %v2110
    %v2437 = vpack.c.bf16 %v2149, %v2147
    %v2440 = vunpack.c.l.b16 %v2434
    %v2441 = vunpack.c.l.b16 %v2435
    %v2442 = vpack.c.b16 %v2441, %v2440
    %v2444 = vsel %vm2166, %v2436, 0
    %v2447 = vsel %vm2166, %v2437, 0
    %v2450 = vsel %vm2173, %v2442, 0
    %2452 = vmatprep.subr.bf16.mxu0 0
    %2453 = vmatpush1.bf16.msra.mxu0 %v2450
    %2454 = vmatprep.subr.bf16.mxu0 0
    %2455 = vmatpush1.bf16.msra.mxu0 0
    %2456 = vmatprep.subr.bf16.mxu0 0
    %2457 = vmatpush1.bf16.msra.mxu0 0
    %2458 = vmatprep.subr.bf16.mxu0 0
    %2459 = vmatpush1.bf16.msra.mxu0 0
    %2460 = vmatprep.subr.bf16.mxu0 0
    %2461 = vmatpush1.bf16.msra.mxu0 0
    %2462 = vmatprep.subr.bf16.mxu0 0
    %2463 = vmatpush1.bf16.msra.mxu0 0
    %2464 = vmatprep.subr.bf16.mxu0 0
    %2465 = vmatpush1.bf16.msra.mxu0 0
    %2466 = vmatprep.subr.bf16.mxu0 0
    %2467 = vmatpush1.bf16.msra.mxu0 0
    %2468 = vmatprep.subr.bf16.mxu0 0
    %2469 = vmatpush1.bf16.msra.mxu0 0
    %2470 = vmatprep.subr.bf16.mxu0 0
    %2471 = vmatpush1.bf16.msra.mxu0 0
    %2472 = vmatprep.subr.bf16.mxu0 0
    %2473 = vmatpush1.bf16.msra.mxu0 0
    %2474 = vmatprep.subr.bf16.mxu0 0
    %2475 = vmatpush1.bf16.msra.mxu0 0
    %2476 = vmatprep.subr.bf16.mxu0 0
    %2477 = vmatpush1.bf16.msra.mxu0 0
    %2478 = vmatprep.subr.bf16.mxu0 0
    %2479 = vmatpush1.bf16.msra.mxu0 0
    %2480 = vmatprep.subr.bf16.mxu0 0
    %2481 = vmatpush1.bf16.msra.mxu0 0
    %2482 = vmatprep.subr.bf16.mxu0 0
    %2483 = vmatpush1.bf16.msra.mxu0 0
    %2484 = vmatprep.mubr.bf16.mxu0 0
    %2485 = vmatmul.mubr.bf16.gmra.mrb[0].mxu0 %v2444
    %v2486 = vpop.f32.mrb[0].mxu0
    %v2487 = vadd.f32 0.0, %v2486
    %v2488 = vpop.f32.mrb[0].mxu0
    %v2489 = vpop.f32.mrb[0].mxu0
    %v2490 = vadd.f32 0.0, %v2489
    %v2491 = vpop.f32.mrb[0].mxu0
    %2492 = vmatprep.mubr.bf16.mxu0 0
    %2493 = vmatmul.mubr.bf16.gmra.mrb[0].mxu0 %v2447
    %v2494 = vpop.f32.mrb[0].mxu0
    %v2495 = vadd.f32 0.0, %v2494
    %v2496 = vpop.f32.mrb[0].mxu0
    %v2497 = vpop.f32.mrb[0].mxu0
    %v2498 = vadd.f32 0.0, %v2497
    %v2499 = vpop.f32.mrb[0].mxu0
    %2500 = vdwg.mxu0
    %v2501 = vadd.f32 %v2429, %v2487
    %v2502 = vadd.f32 %v2430, %v2490
    %v2503 = vadd.f32 %v2431, %v2495
    %v2504 = vadd.f32 %v2432, %v2498
    %v2505 = vld [vmem:[%s4] sm:$0x1]
    %v2507 = vlaneseq
    %v2508 = vshrl.u32 %v2507, 7
    %v2509 = vsub.s32 0, %v2508
    %v2510 = vrot.slane %v2505, %v2509
    %v2512 = vadd.f32 %v2501, %v2510
    %v2513 = vadd.f32 %v2502, %v2510
    %v2514 = vadd.f32 %v2503, %v2510
    %v2515 = vadd.f32 %v2504, %v2510
    %v2516 = vxor.u32 %v2512, 2147483648
    %v2517 = vxor.u32 %v2513, 2147483648
    %v2518 = vxor.u32 %v2514, 2147483648
    %v2519 = vxor.u32 %v2515, 2147483648
    %v2520 = vmul.f32 %v2516, 1.442695
    %v2521 = vpow.pop %v2520
    %v2522 = vmul.f32 %v2517, 1.442695
    %v2523 = vpow.pop %v2522
    %v2524 = vmul.f32 %v2518, 1.442695
    %v2525 = vpow.pop %v2524
    %v2526 = vmul.f32 %v2519, 1.442695
    %v2527 = vpow.pop %v2526
    %v2528 = vadd.f32 %v2521, 1.0
    %v2529 = vadd.f32 %v2523, 1.0
    %v2530 = vadd.f32 %v2525, 1.0
    %v2531 = vadd.f32 %v2527, 1.0
    %v2532 = vrcp.pop %v2528
    %v2533 = vmul.f32 1.0, %v2532
    %v2534 = vrcp.pop %v2529
    %v2535 = vmul.f32 1.0, %v2534
    %v2536 = vrcp.pop %v2530
    %v2537 = vmul.f32 1.0, %v2536
    %v2538 = vrcp.pop %v2531
    %v2539 = vmul.f32 1.0, %v2538
    %2540 = vrot.lane.b32.xlu0 %v76, 126
    %v2541 = vpop.permute.xlu0 %2540
    %2542 = vrot.lane.b32.xlu0 %v77, 126
    %v2543 = vpop.permute.xlu0 %2542
    %2544 = vrot.lane.b32.xlu0 %v2115, 126
    %v2545 = vpop.permute.xlu0 %2544
    %2546 = vrot.lane.b32.xlu0 %v2117, 126
    %v2547 = vpop.permute.xlu0 %2546
    %v2552 = vmul.f32 %v2533, %v2541
    %v2553 = vmul.f32 %v2535, %v2543
    %v2554 = vmul.f32 %v2537, %v2545
    %v2555 = vmul.f32 %v2539, %v2547
    %2558 = vrot.lane.b32.xlu0 %v2554, 8
    %v2559 = vpop.permute.xlu0 %2558
    %2560 = vrot.lane.b32.xlu0 %v2555, 8
    %v2561 = vpop.permute.xlu0 %2560
    %vm2564 = vcmask 64512
    %v2565 = vsel %vm2564, %v2552, %v2559
    %v2566 = vsel %vm2564, %v2553, %v2561
    %2567 = vmatprep.subr.mxu0 0.0
    %v2568 = vand.u32 %v2565, 4294901760
    %2569 = vmatpush1.msra.mxu0 %v2568
    %2570 = vmatprep.subr.mxu0 0.0
    %v2571 = vand.u32 %v2566, 4294901760
    %2572 = vmatpush1.msra.mxu0 %v2571
    %2573 = vmatprep.subr.mxu0 0.0
    %2574 = vmatpush1.msra.mxu0 0.0
    %2575 = vmatprep.subr.mxu0 0.0
    %2576 = vmatpush1.msra.mxu0 0.0
    %2577 = vmatprep.subr.mxu0 0.0
    %2578 = vmatpush1.msra.mxu0 0.0
    %2579 = vmatprep.subr.mxu0 0.0
    %2580 = vmatpush1.msra.mxu0 0.0
    %2581 = vmatprep.subr.mxu0 0.0
    %2582 = vmatpush1.msra.mxu0 0.0
    %2583 = vmatprep.subr.mxu0 0.0
    %2584 = vmatpush1.msra.mxu0 0.0
    %2585 = vmatprep.subr.mxu0 0.0
    %2586 = vmatpush1.msra.mxu0 0.0
    %2587 = vmatprep.subr.mxu0 0.0
    %2588 = vmatpush1.msra.mxu0 0.0
    %2589 = vmatprep.subr.mxu0 0.0
    %2590 = vmatpush1.msra.mxu0 0.0
    %2591 = vmatprep.subr.mxu0 0.0
    %2592 = vmatpush1.msra.mxu0 0.0
    %2593 = vmatprep.subr.mxu0 0.0
    %2594 = vmatpush1.msra.mxu0 0.0
    %2595 = vmatprep.subr.mxu0 0.0
    %2596 = vmatpush1.msra.mxu0 0.0
    %2597 = vmatprep.subr.mxu0 0.0
    %2598 = vmatpush1.msra.mxu0 0.0
    %2599 = vmatprep.subr.mxu0 0.0
    %2600 = vmatpush1.msra.mxu0 0.0
    %2601 = vmatprep.subr.mxu0 0.0
    %2602 = vmatpush1.msra.mxu0 0.0
    %2603 = vmatprep.subr.mxu0 0.0
    %2604 = vmatpush1.msra.mxu0 0.0
    %2605 = vmatprep.subr.mxu0 0.0
    %2606 = vmatpush1.msra.mxu0 0.0
    %2607 = vmatprep.subr.mxu0 0.0
    %2608 = vmatpush1.msra.mxu0 0.0
    %2609 = vmatprep.subr.mxu0 0.0
    %2610 = vmatpush1.msra.mxu0 0.0
    %2611 = vmatprep.subr.mxu0 0.0
    %2612 = vmatpush1.msra.mxu0 0.0
    %2613 = vmatprep.subr.mxu0 0.0
    %2614 = vmatpush1.msra.mxu0 0.0
    %2615 = vmatprep.subr.mxu0 0.0
    %2616 = vmatpush1.msra.mxu0 0.0
    %2617 = vmatprep.subr.mxu0 0.0
    %2618 = vmatpush1.msra.mxu0 0.0
    %2619 = vmatprep.subr.mxu0 0.0
    %2620 = vmatpush1.msra.mxu0 0.0
    %2621 = vmatprep.subr.mxu0 0.0
    %2622 = vmatpush1.msra.mxu0 0.0
    %2623 = vmatprep.subr.mxu0 0.0
    %2624 = vmatpush1.msra.mxu0 0.0
    %2625 = vmatprep.subr.mxu0 0.0
    %2626 = vmatpush1.msra.mxu0 0.0
    %2627 = vmatprep.subr.mxu0 0.0
    %2628 = vmatpush1.msra.mxu0 0.0
    %2629 = vmatprep.subr.mxu0 0.0
    %2630 = vmatpush1.msra.mxu0 0.0
    %2631 = vmatprep.subr.mxu0 0.0
    %2632 = vmatpush1.msra.mxu0 0.0
    %2633 = vmatprep.mubr.f32.mxu0 0.0
    %v2634 = vand.u32 %v82, 4294901760
    %v2635 = vsub.f32 %v82, %v2634
    %v2636 = vand.u32 %v2635, 4294901760
    %v2637 = vsub.f32 %v2635, %v2636
    %v2638 = vand.u32 %v2637, 4294901760
    %2639 = vmatmul.mubr.f32.gmra.mrb[0].mxu0 %v2638
    %v2640 = vpop.f32.mrb[0].mxu0
    %v2641 = vadd.f32 0.0, %v2640
    %v2642 = vpop.f32.mrb[0].mxu0
    %2643 = vmatprep.mubr.f32.mxu0 0.0
    %v2644 = vand.u32 %v85, 4294901760
    %v2645 = vsub.f32 %v85, %v2644
    %v2646 = vand.u32 %v2645, 4294901760
    %v2647 = vsub.f32 %v2645, %v2646
    %v2648 = vand.u32 %v2647, 4294901760
    %2649 = vmatmul.mubr.f32.gmra.mrb[0].mxu0 %v2648
    %v2650 = vpop.f32.mrb[0].mxu0
    %v2651 = vadd.f32 0.0, %v2650
    %v2652 = vpop.f32.mrb[0].mxu0
    %2653 = vdwg.mxu0
    %2654 = vmatprep.subr.mxu0 0.0
    %v2655 = vand.u32 %v2565, 4294901760
    %v2656 = vsub.f32 %v2565, %v2655
    %v2657 = vand.u32 %v2656, 4294901760
    %v2658 = vsub.f32 %v2656, %v2657
    %v2659 = vand.u32 %v2658, 4294901760
    %2660 = vmatpush1.msra.mxu0 %v2659
    %2661 = vmatprep.subr.mxu0 0.0
    %v2662 = vand.u32 %v2566, 4294901760
    %v2663 = vsub.f32 %v2566, %v2662
    %v2664 = vand.u32 %v2663, 4294901760
    %v2665 = vsub.f32 %v2663, %v2664
    %v2666 = vand.u32 %v2665, 4294901760
    %2667 = vmatpush1.msra.mxu0 %v2666
    %2668 = vmatprep.subr.mxu0 0.0
    %2669 = vmatpush1.msra.mxu0 0.0
    %2670 = vmatprep.subr.mxu0 0.0
    %2671 = vmatpush1.msra.mxu0 0.0
    %2672 = vmatprep.subr.mxu0 0.0
    %2673 = vmatpush1.msra.mxu0 0.0
    %2674 = vmatprep.subr.mxu0 0.0
    %2675 = vmatpush1.msra.mxu0 0.0
    %2676 = vmatprep.subr.mxu0 0.0
    %2677 = vmatpush1.msra.mxu0 0.0
    %2678 = vmatprep.subr.mxu0 0.0
    %2679 = vmatpush1.msra.mxu0 0.0
    %2680 = vmatprep.subr.mxu0 0.0
    %2681 = vmatpush1.msra.mxu0 0.0
    %2682 = vmatprep.subr.mxu0 0.0
    %2683 = vmatpush1.msra.mxu0 0.0
    %2684 = vmatprep.subr.mxu0 0.0
    %2685 = vmatpush1.msra.mxu0 0.0
    %2686 = vmatprep.subr.mxu0 0.0
    %2687 = vmatpush1.msra.mxu0 0.0
    %2688 = vmatprep.subr.mxu0 0.0
    %2689 = vmatpush1.msra.mxu0 0.0
    %2690 = vmatprep.subr.mxu0 0.0
    %2691 = vmatpush1.msra.mxu0 0.0
    %2692 = vmatprep.subr.mxu0 0.0
    %2693 = vmatpush1.msra.mxu0 0.0
    %2694 = vmatprep.subr.mxu0 0.0
    %2695 = vmatpush1.msra.mxu0 0.0
    %2696 = vmatprep.subr.mxu0 0.0
    %2697 = vmatpush1.msra.mxu0 0.0
    %2698 = vmatprep.subr.mxu0 0.0
    %2699 = vmatpush1.msra.mxu0 0.0
    %2700 = vmatprep.subr.mxu0 0.0
    %2701 = vmatpush1.msra.mxu0 0.0
    %2702 = vmatprep.subr.mxu0 0.0
    %2703 = vmatpush1.msra.mxu0 0.0
    %2704 = vmatprep.subr.mxu0 0.0
    %2705 = vmatpush1.msra.mxu0 0.0
    %2706 = vmatprep.subr.mxu0 0.0
    %2707 = vmatpush1.msra.mxu0 0.0
    %2708 = vmatprep.subr.mxu0 0.0
    %2709 = vmatpush1.msra.mxu0 0.0
    %2710 = vmatprep.subr.mxu0 0.0
    %2711 = vmatpush1.msra.mxu0 0.0
    %2712 = vmatprep.subr.mxu0 0.0
    %2713 = vmatpush1.msra.mxu0 0.0
    %2714 = vmatprep.subr.mxu0 0.0
    %2715 = vmatpush1.msra.mxu0 0.0
    %2716 = vmatprep.subr.mxu0 0.0
    %2717 = vmatpush1.msra.mxu0 0.0
    %2718 = vmatprep.subr.mxu0 0.0
    %2719 = vmatpush1.msra.mxu0 0.0
    %2720 = vmatprep.subr.mxu0 0.0
    %2721 = vmatpush1.msra.mxu0 0.0
    %2722 = vmatprep.subr.mxu0 0.0
    %2723 = vmatpush1.msra.mxu0 0.0
    %2724 = vmatprep.subr.mxu0 0.0
    %2725 = vmatpush1.msra.mxu0 0.0
    %2726 = vmatprep.subr.mxu0 0.0
    %2727 = vmatpush1.msra.mxu0 0.0
    %2728 = vmatprep.mubr.f32.mxu0 0.0
    %v2729 = vand.u32 %v82, 4294901760
    %2730 = vmatmul.mubr.f32.gmra.mrb[0].mxu0 %v2729
    %v2731 = vpop.f32.mrb[0].mxu0
    %v2732 = vadd.f32 %v2641, %v2731
    %v2733 = vpop.f32.mrb[0].mxu0
    %2734 = vmatprep.mubr.f32.mxu0 0.0
    %v2735 = vand.u32 %v85, 4294901760
    %2736 = vmatmul.mubr.f32.gmra.mrb[0].mxu0 %v2735
    %v2737 = vpop.f32.mrb[0].mxu0
    %v2738 = vadd.f32 %v2651, %v2737
    %v2739 = vpop.f32.mrb[0].mxu0
    %2740 = vdwg.mxu0
    %2741 = vmatprep.subr.mxu0 0.0
    %v2742 = vand.u32 %v2565, 4294901760
    %v2743 = vsub.f32 %v2565, %v2742
    %2744 = vmatpush1.msra.mxu0 %v2743
    %2745 = vmatprep.subr.mxu0 0.0
    %v2746 = vand.u32 %v2566, 4294901760
    %v2747 = vsub.f32 %v2566, %v2746
    %2748 = vmatpush1.msra.mxu0 %v2747
    %2749 = vmatprep.subr.mxu0 0.0
    %2750 = vmatpush1.msra.mxu0 0.0
    %2751 = vmatprep.subr.mxu0 0.0
    %2752 = vmatpush1.msra.mxu0 0.0
    %2753 = vmatprep.subr.mxu0 0.0
    %2754 = vmatpush1.msra.mxu0 0.0
    %2755 = vmatprep.subr.mxu0 0.0
    %2756 = vmatpush1.msra.mxu0 0.0
    %2757 = vmatprep.subr.mxu0 0.0
    %2758 = vmatpush1.msra.mxu0 0.0
    %2759 = vmatprep.subr.mxu0 0.0
    %2760 = vmatpush1.msra.mxu0 0.0
    %2761 = vmatprep.subr.mxu0 0.0
    %2762 = vmatpush1.msra.mxu0 0.0
    %2763 = vmatprep.subr.mxu0 0.0
    %2764 = vmatpush1.msra.mxu0 0.0
    %2765 = vmatprep.subr.mxu0 0.0
    %2766 = vmatpush1.msra.mxu0 0.0
    %2767 = vmatprep.subr.mxu0 0.0
    %2768 = vmatpush1.msra.mxu0 0.0
    %2769 = vmatprep.subr.mxu0 0.0
    %2770 = vmatpush1.msra.mxu0 0.0
    %2771 = vmatprep.subr.mxu0 0.0
    %2772 = vmatpush1.msra.mxu0 0.0
    %2773 = vmatprep.subr.mxu0 0.0
    %2774 = vmatpush1.msra.mxu0 0.0
    %2775 = vmatprep.subr.mxu0 0.0
    %2776 = vmatpush1.msra.mxu0 0.0
    %2777 = vmatprep.subr.mxu0 0.0
    %2778 = vmatpush1.msra.mxu0 0.0
    %2779 = vmatprep.subr.mxu0 0.0
    %2780 = vmatpush1.msra.mxu0 0.0
    %2781 = vmatprep.subr.mxu0 0.0
    %2782 = vmatpush1.msra.mxu0 0.0
    %2783 = vmatprep.subr.mxu0 0.0
    %2784 = vmatpush1.msra.mxu0 0.0
    %2785 = vmatprep.subr.mxu0 0.0
    %2786 = vmatpush1.msra.mxu0 0.0
    %2787 = vmatprep.subr.mxu0 0.0
    %2788 = vmatpush1.msra.mxu0 0.0
    %2789 = vmatprep.subr.mxu0 0.0
    %2790 = vmatpush1.msra.mxu0 0.0
    %2791 = vmatprep.subr.mxu0 0.0
    %2792 = vmatpush1.msra.mxu0 0.0
    %2793 = vmatprep.subr.mxu0 0.0
    %2794 = vmatpush1.msra.mxu0 0.0
    %2795 = vmatprep.subr.mxu0 0.0
    %2796 = vmatpush1.msra.mxu0 0.0
    %2797 = vmatprep.subr.mxu0 0.0
    %2798 = vmatpush1.msra.mxu0 0.0
    %2799 = vmatprep.subr.mxu0 0.0
    %2800 = vmatpush1.msra.mxu0 0.0
    %2801 = vmatprep.subr.mxu0 0.0
    %2802 = vmatpush1.msra.mxu0 0.0
    %2803 = vmatprep.subr.mxu0 0.0
    %2804 = vmatpush1.msra.mxu0 0.0
    %2805 = vmatprep.subr.mxu0 0.0
    %2806 = vmatpush1.msra.mxu0 0.0
    %2807 = vmatprep.subr.mxu0 0.0
    %2808 = vmatpush1.msra.mxu0 0.0
    %2809 = vmatprep.mubr.f32.mxu0 0.0
    %v2810 = vand.u32 %v82, 4294901760
    %v2811 = vsub.f32 %v82, %v2810
    %2812 = vmatmul.mubr.f32.gmra.mrb[0].mxu0 %v2811
    %v2813 = vpop.f32.mrb[0].mxu0
    %v2814 = vadd.f32 %v2732, %v2813
    %v2815 = vpop.f32.mrb[0].mxu0
    %2816 = vmatprep.mubr.f32.mxu0 0.0
    %v2817 = vand.u32 %v85, 4294901760
    %v2818 = vsub.f32 %v85, %v2817
    %2819 = vmatmul.mubr.f32.gmra.mrb[0].mxu0 %v2818
    %v2820 = vpop.f32.mrb[0].mxu0
    %v2821 = vadd.f32 %v2738, %v2820
    %v2822 = vpop.f32.mrb[0].mxu0
    %2823 = vdwg.mxu0
    %2824 = vmatprep.subr.mxu0 0.0
    %v2825 = vand.u32 %v2565, 4294901760
    %2826 = vmatpush1.msra.mxu0 %v2825
    %2827 = vmatprep.subr.mxu0 0.0
    %v2828 = vand.u32 %v2566, 4294901760
    %2829 = vmatpush1.msra.mxu0 %v2828
    %2830 = vmatprep.subr.mxu0 0.0
    %2831 = vmatpush1.msra.mxu0 0.0
    %2832 = vmatprep.subr.mxu0 0.0
    %2833 = vmatpush1.msra.mxu0 0.0
    %2834 = vmatprep.subr.mxu0 0.0
    %2835 = vmatpush1.msra.mxu0 0.0
    %2836 = vmatprep.subr.mxu0 0.0
    %2837 = vmatpush1.msra.mxu0 0.0
    %2838 = vmatprep.subr.mxu0 0.0
    %2839 = vmatpush1.msra.mxu0 0.0
    %2840 = vmatprep.subr.mxu0 0.0
    %2841 = vmatpush1.msra.mxu0 0.0
    %2842 = vmatprep.subr.mxu0 0.0
    %2843 = vmatpush1.msra.mxu0 0.0
    %2844 = vmatprep.subr.mxu0 0.0
    %2845 = vmatpush1.msra.mxu0 0.0
    %2846 = vmatprep.subr.mxu0 0.0
    %2847 = vmatpush1.msra.mxu0 0.0
    %2848 = vmatprep.subr.mxu0 0.0
    %2849 = vmatpush1.msra.mxu0 0.0
    %2850 = vmatprep.subr.mxu0 0.0
    %2851 = vmatpush1.msra.mxu0 0.0
    %2852 = vmatprep.subr.mxu0 0.0
    %2853 = vmatpush1.msra.mxu0 0.0
    %2854 = vmatprep.subr.mxu0 0.0
    %2855 = vmatpush1.msra.mxu0 0.0
    %2856 = vmatprep.subr.mxu0 0.0
    %2857 = vmatpush1.msra.mxu0 0.0
    %2858 = vmatprep.subr.mxu0 0.0
    %2859 = vmatpush1.msra.mxu0 0.0
    %2860 = vmatprep.subr.mxu0 0.0
    %2861 = vmatpush1.msra.mxu0 0.0
    %2862 = vmatprep.subr.mxu0 0.0
    %2863 = vmatpush1.msra.mxu0 0.0
    %2864 = vmatprep.subr.mxu0 0.0
    %2865 = vmatpush1.msra.mxu0 0.0
    %2866 = vmatprep.subr.mxu0 0.0
    %2867 = vmatpush1.msra.mxu0 0.0
    %2868 = vmatprep.subr.mxu0 0.0
    %2869 = vmatpush1.msra.mxu0 0.0
    %2870 = vmatprep.subr.mxu0 0.0
    %2871 = vmatpush1.msra.mxu0 0.0
    %2872 = vmatprep.subr.mxu0 0.0
    %2873 = vmatpush1.msra.mxu0 0.0
    %2874 = vmatprep.subr.mxu0 0.0
    %2875 = vmatpush1.msra.mxu0 0.0
    %2876 = vmatprep.subr.mxu0 0.0
    %2877 = vmatpush1.msra.mxu0 0.0
    %2878 = vmatprep.subr.mxu0 0.0
    %2879 = vmatpush1.msra.mxu0 0.0
    %2880 = vmatprep.subr.mxu0 0.0
    %2881 = vmatpush1.msra.mxu0 0.0
    %2882 = vmatprep.subr.mxu0 0.0
    %2883 = vmatpush1.msra.mxu0 0.0
    %2884 = vmatprep.subr.mxu0 0.0
    %2885 = vmatpush1.msra.mxu0 0.0
    %2886 = vmatprep.subr.mxu0 0.0
    %2887 = vmatpush1.msra.mxu0 0.0
    %2888 = vmatprep.subr.mxu0 0.0
    %2889 = vmatpush1.msra.mxu0 0.0
    %2890 = vmatprep.mubr.f32.mxu0 0.0
    %v2891 = vand.u32 %v82, 4294901760
    %v2892 = vsub.f32 %v82, %v2891
    %v2893 = vand.u32 %v2892, 4294901760
    %2894 = vmatmul.mubr.f32.gmra.mrb[0].mxu0 %v2893
    %v2895 = vpop.f32.mrb[0].mxu0
    %v2896 = vadd.f32 %v2814, %v2895
    %v2897 = vpop.f32.mrb[0].mxu0
    %2898 = vmatprep.mubr.f32.mxu0 0.0
    %v2899 = vand.u32 %v85, 4294901760
    %v2900 = vsub.f32 %v85, %v2899
    %v2901 = vand.u32 %v2900, 4294901760
    %2902 = vmatmul.mubr.f32.gmra.mrb[0].mxu0 %v2901
    %v2903 = vpop.f32.mrb[0].mxu0
    %v2904 = vadd.f32 %v2821, %v2903
    %v2905 = vpop.f32.mrb[0].mxu0
    %2906 = vdwg.mxu0
    %2907 = vmatprep.subr.mxu0 0.0
    %v2908 = vand.u32 %v2565, 4294901760
    %v2909 = vsub.f32 %v2565, %v2908
    %v2910 = vand.u32 %v2909, 4294901760
    %2911 = vmatpush1.msra.mxu0 %v2910
    %2912 = vmatprep.subr.mxu0 0.0
    %v2913 = vand.u32 %v2566, 4294901760
    %v2914 = vsub.f32 %v2566, %v2913
    %v2915 = vand.u32 %v2914, 4294901760
    %2916 = vmatpush1.msra.mxu0 %v2915
    %2917 = vmatprep.subr.mxu0 0.0
    %2918 = vmatpush1.msra.mxu0 0.0
    %2919 = vmatprep.subr.mxu0 0.0
    %2920 = vmatpush1.msra.mxu0 0.0
    %2921 = vmatprep.subr.mxu0 0.0
    %2922 = vmatpush1.msra.mxu0 0.0
    %2923 = vmatprep.subr.mxu0 0.0
    %2924 = vmatpush1.msra.mxu0 0.0
    %2925 = vmatprep.subr.mxu0 0.0
    %2926 = vmatpush1.msra.mxu0 0.0
    %2927 = vmatprep.subr.mxu0 0.0
    %2928 = vmatpush1.msra.mxu0 0.0
    %2929 = vmatprep.subr.mxu0 0.0
    %2930 = vmatpush1.msra.mxu0 0.0
    %2931 = vmatprep.subr.mxu0 0.0
    %2932 = vmatpush1.msra.mxu0 0.0
    %2933 = vmatprep.subr.mxu0 0.0
    %2934 = vmatpush1.msra.mxu0 0.0
    %2935 = vmatprep.subr.mxu0 0.0
    %2936 = vmatpush1.msra.mxu0 0.0
    %2937 = vmatprep.subr.mxu0 0.0
    %2938 = vmatpush1.msra.mxu0 0.0
    %2939 = vmatprep.subr.mxu0 0.0
    %2940 = vmatpush1.msra.mxu0 0.0
    %2941 = vmatprep.subr.mxu0 0.0
    %2942 = vmatpush1.msra.mxu0 0.0
    %2943 = vmatprep.subr.mxu0 0.0
    %2944 = vmatpush1.msra.mxu0 0.0
    %2945 = vmatprep.subr.mxu0 0.0
    %2946 = vmatpush1.msra.mxu0 0.0
    %2947 = vmatprep.subr.mxu0 0.0
    %2948 = vmatpush1.msra.mxu0 0.0
    %2949 = vmatprep.subr.mxu0 0.0
    %2950 = vmatpush1.msra.mxu0 0.0
    %2951 = vmatprep.subr.mxu0 0.0
    %2952 = vmatpush1.msra.mxu0 0.0
    %2953 = vmatprep.subr.mxu0 0.0
    %2954 = vmatpush1.msra.mxu0 0.0
    %2955 = vmatprep.subr.mxu0 0.0
    %2956 = vmatpush1.msra.mxu0 0.0
    %2957 = vmatprep.subr.mxu0 0.0
    %2958 = vmatpush1.msra.mxu0 0.0
    %2959 = vmatprep.subr.mxu0 0.0
    %2960 = vmatpush1.msra.mxu0 0.0
    %2961 = vmatprep.subr.mxu0 0.0
    %2962 = vmatpush1.msra.mxu0 0.0
    %2963 = vmatprep.subr.mxu0 0.0
    %2964 = vmatpush1.msra.mxu0 0.0
    %2965 = vmatprep.subr.mxu0 0.0
    %2966 = vmatpush1.msra.mxu0 0.0
    %2967 = vmatprep.subr.mxu0 0.0
    %2968 = vmatpush1.msra.mxu0 0.0
    %2969 = vmatprep.subr.mxu0 0.0
    %2970 = vmatpush1.msra.mxu0 0.0
    %2971 = vmatprep.subr.mxu0 0.0
    %2972 = vmatpush1.msra.mxu0 0.0
    %2973 = vmatprep.subr.mxu0 0.0
    %2974 = vmatpush1.msra.mxu0 0.0
    %2975 = vmatprep.subr.mxu0 0.0
    %2976 = vmatpush1.msra.mxu0 0.0
    %2977 = vmatprep.mubr.f32.mxu0 0.0
    %v2978 = vand.u32 %v82, 4294901760
    %2979 = vmatmul.mubr.f32.gmra.mrb[0].mxu0 %v2978
    %v2980 = vpop.f32.mrb[0].mxu0
    %v2981 = vadd.f32 %v2896, %v2980
    %v2982 = vpop.f32.mrb[0].mxu0
    %2983 = vmatprep.mubr.f32.mxu0 0.0
    %v2984 = vand.u32 %v85, 4294901760
    %2985 = vmatmul.mubr.f32.gmra.mrb[0].mxu0 %v2984
    %v2986 = vpop.f32.mrb[0].mxu0
    %v2987 = vadd.f32 %v2904, %v2986
    %v2988 = vpop.f32.mrb[0].mxu0
    %2989 = vdwg.mxu0
    %2990 = vmatprep.subr.mxu0 0.0
    %v2991 = vand.u32 %v2565, 4294901760
    %2992 = vmatpush1.msra.mxu0 %v2991
    %2993 = vmatprep.subr.mxu0 0.0
    %v2994 = vand.u32 %v2566, 4294901760
    %2995 = vmatpush1.msra.mxu0 %v2994
    %2996 = vmatprep.subr.mxu0 0.0
    %2997 = vmatpush1.msra.mxu0 0.0
    %2998 = vmatprep.subr.mxu0 0.0
    %2999 = vmatpush1.msra.mxu0 0.0
    %3000 = vmatprep.subr.mxu0 0.0
    %3001 = vmatpush1.msra.mxu0 0.0
    %3002 = vmatprep.subr.mxu0 0.0
    %3003 = vmatpush1.msra.mxu0 0.0
    %3004 = vmatprep.subr.mxu0 0.0
    %3005 = vmatpush1.msra.mxu0 0.0
    %3006 = vmatprep.subr.mxu0 0.0
    %3007 = vmatpush1.msra.mxu0 0.0
    %3008 = vmatprep.subr.mxu0 0.0
    %3009 = vmatpush1.msra.mxu0 0.0
    %3010 = vmatprep.subr.mxu0 0.0
    %3011 = vmatpush1.msra.mxu0 0.0
    %3012 = vmatprep.subr.mxu0 0.0
    %3013 = vmatpush1.msra.mxu0 0.0
    %3014 = vmatprep.subr.mxu0 0.0
    %3015 = vmatpush1.msra.mxu0 0.0
    %3016 = vmatprep.subr.mxu0 0.0
    %3017 = vmatpush1.msra.mxu0 0.0
    %3018 = vmatprep.subr.mxu0 0.0
    %3019 = vmatpush1.msra.mxu0 0.0
    %3020 = vmatprep.subr.mxu0 0.0
    %3021 = vmatpush1.msra.mxu0 0.0
    %3022 = vmatprep.subr.mxu0 0.0
    %3023 = vmatpush1.msra.mxu0 0.0
    %3024 = vmatprep.subr.mxu0 0.0
    %3025 = vmatpush1.msra.mxu0 0.0
    %3026 = vmatprep.subr.mxu0 0.0
    %3027 = vmatpush1.msra.mxu0 0.0
    %3028 = vmatprep.subr.mxu0 0.0
    %3029 = vmatpush1.msra.mxu0 0.0
    %3030 = vmatprep.subr.mxu0 0.0
    %3031 = vmatpush1.msra.mxu0 0.0
    %3032 = vmatprep.subr.mxu0 0.0
    %3033 = vmatpush1.msra.mxu0 0.0
    %3034 = vmatprep.subr.mxu0 0.0
    %3035 = vmatpush1.msra.mxu0 0.0
    %3036 = vmatprep.subr.mxu0 0.0
    %3037 = vmatpush1.msra.mxu0 0.0
    %3038 = vmatprep.subr.mxu0 0.0
    %3039 = vmatpush1.msra.mxu0 0.0
    %3040 = vmatprep.subr.mxu0 0.0
    %3041 = vmatpush1.msra.mxu0 0.0
    %3042 = vmatprep.subr.mxu0 0.0
    %3043 = vmatpush1.msra.mxu0 0.0
    %3044 = vmatprep.subr.mxu0 0.0
    %3045 = vmatpush1.msra.mxu0 0.0
    %3046 = vmatprep.subr.mxu0 0.0
    %3047 = vmatpush1.msra.mxu0 0.0
    %3048 = vmatprep.subr.mxu0 0.0
    %3049 = vmatpush1.msra.mxu0 0.0
    %3050 = vmatprep.subr.mxu0 0.0
    %3051 = vmatpush1.msra.mxu0 0.0
    %3052 = vmatprep.subr.mxu0 0.0
    %3053 = vmatpush1.msra.mxu0 0.0
    %3054 = vmatprep.subr.mxu0 0.0
    %3055 = vmatpush1.msra.mxu0 0.0
    %3056 = vmatprep.mubr.f32.mxu0 0.0
    %v3057 = vand.u32 %v82, 4294901760
    %3058 = vmatmul.mubr.f32.gmra.mrb[0].mxu0 %v3057
    %v3059 = vpop.f32.mrb[0].mxu0
    %v3060 = vadd.f32 %v2981, %v3059
    %v3061 = vpop.f32.mrb[0].mxu0
    %3062 = vmatprep.mubr.f32.mxu0 0.0
    %v3063 = vand.u32 %v85, 4294901760
    %3064 = vmatmul.mubr.f32.gmra.mrb[0].mxu0 %v3063
    %v3065 = vpop.f32.mrb[0].mxu0
    %v3066 = vadd.f32 %v2987, %v3065
    %v3067 = vpop.f32.mrb[0].mxu0
    %3068 = vdwg.mxu0
    %3069 = vmatprep.subr.mxu0 0.0
    %v3070 = vand.u32 %v3060, 4294901760
    %3071 = vmatpush1.msra.mxu0 %v3070
    %3072 = vmatprep.subr.mxu0 0.0
    %v3073 = vand.u32 %v3066, 4294901760
    %3074 = vmatpush1.msra.mxu0 %v3073
    %3075 = vmatprep.subr.mxu0 0.0
    %3076 = vmatpush1.msra.mxu0 0.0
    %3077 = vmatprep.subr.mxu0 0.0
    %3078 = vmatpush1.msra.mxu0 0.0
    %3079 = vmatprep.subr.mxu0 0.0
    %3080 = vmatpush1.msra.mxu0 0.0
    %3081 = vmatprep.subr.mxu0 0.0
    %3082 = vmatpush1.msra.mxu0 0.0
    %3083 = vmatprep.subr.mxu0 0.0
    %3084 = vmatpush1.msra.mxu0 0.0
    %3085 = vmatprep.subr.mxu0 0.0
    %3086 = vmatpush1.msra.mxu0 0.0
    %3087 = vmatprep.subr.mxu0 0.0
    %3088 = vmatpush1.msra.mxu0 0.0
    %3089 = vmatprep.subr.mxu0 0.0
    %3090 = vmatpush1.msra.mxu0 0.0
    %3091 = vmatprep.subr.mxu0 0.0
    %3092 = vmatpush1.msra.mxu0 0.0
    %3093 = vmatprep.subr.mxu0 0.0
    %3094 = vmatpush1.msra.mxu0 0.0
    %3095 = vmatprep.subr.mxu0 0.0
    %3096 = vmatpush1.msra.mxu0 0.0
    %3097 = vmatprep.subr.mxu0 0.0
    %3098 = vmatpush1.msra.mxu0 0.0
    %3099 = vmatprep.subr.mxu0 0.0
    %3100 = vmatpush1.msra.mxu0 0.0
    %3101 = vmatprep.subr.mxu0 0.0
    %3102 = vmatpush1.msra.mxu0 0.0
    %3103 = vmatprep.subr.mxu0 0.0
    %3104 = vmatpush1.msra.mxu0 0.0
    %3105 = vmatprep.subr.mxu0 0.0
    %3106 = vmatpush1.msra.mxu0 0.0
    %3107 = vmatprep.subr.mxu0 0.0
    %3108 = vmatpush1.msra.mxu0 0.0
    %3109 = vmatprep.subr.mxu0 0.0
    %3110 = vmatpush1.msra.mxu0 0.0
    %3111 = vmatprep.subr.mxu0 0.0
    %3112 = vmatpush1.msra.mxu0 0.0
    %3113 = vmatprep.subr.mxu0 0.0
    %3114 = vmatpush1.msra.mxu0 0.0
    %3115 = vmatprep.subr.mxu0 0.0
    %3116 = vmatpush1.msra.mxu0 0.0
    %3117 = vmatprep.subr.mxu0 0.0
    %3118 = vmatpush1.msra.mxu0 0.0
    %3119 = vmatprep.subr.mxu0 0.0
    %3120 = vmatpush1.msra.mxu0 0.0
    %3121 = vmatprep.subr.mxu0 0.0
    %3122 = vmatpush1.msra.mxu0 0.0
    %3123 = vmatprep.subr.mxu0 0.0
    %3124 = vmatpush1.msra.mxu0 0.0
    %3125 = vmatprep.subr.mxu0 0.0
    %3126 = vmatpush1.msra.mxu0 0.0
    %3127 = vmatprep.subr.mxu0 0.0
    %3128 = vmatpush1.msra.mxu0 0.0
    %3129 = vmatprep.subr.mxu0 0.0
    %3130 = vmatpush1.msra.mxu0 0.0
    %3131 = vmatprep.subr.mxu0 0.0
    %3132 = vmatpush1.msra.mxu0 0.0
    %3133 = vmatprep.subr.mxu0 0.0
    %3134 = vmatpush1.msra.mxu0 0.0
    %3135 = vmatprep.mubr.f32.mxu0 0.0
    %v3136 = vand.u32 %v82, 4294901760
    %v3137 = vsub.f32 %v82, %v3136
    %v3138 = vand.u32 %v3137, 4294901760
    %v3139 = vsub.f32 %v3137, %v3138
    %v3140 = vand.u32 %v3139, 4294901760
    %3141 = vmatmul.mubr.f32.gmra.mrb[0].mxu0 %v3140
    %v3142 = vpop.f32.mrb[0].mxu0
    %v3143 = vadd.f32 0.0, %v3142
    %v3144 = vpop.f32.mrb[0].mxu0
    %3145 = vmatprep.mubr.f32.mxu0 0.0
    %v3146 = vand.u32 %v85, 4294901760
    %v3147 = vsub.f32 %v85, %v3146
    %v3148 = vand.u32 %v3147, 4294901760
    %v3149 = vsub.f32 %v3147, %v3148
    %v3150 = vand.u32 %v3149, 4294901760
    %3151 = vmatmul.mubr.f32.gmra.mrb[0].mxu0 %v3150
    %v3152 = vpop.f32.mrb[0].mxu0
    %v3153 = vadd.f32 0.0, %v3152
    %v3154 = vpop.f32.mrb[0].mxu0
    %3155 = vdwg.mxu0
    %3156 = vmatprep.subr.mxu0 0.0
    %v3157 = vand.u32 %v3060, 4294901760
    %v3158 = vsub.f32 %v3060, %v3157
    %v3159 = vand.u32 %v3158, 4294901760
    %v3160 = vsub.f32 %v3158, %v3159
    %v3161 = vand.u32 %v3160, 4294901760
    %3162 = vmatpush1.msra.mxu0 %v3161
    %3163 = vmatprep.subr.mxu0 0.0
    %v3164 = vand.u32 %v3066, 4294901760
    %v3165 = vsub.f32 %v3066, %v3164
    %v3166 = vand.u32 %v3165, 4294901760
    %v3167 = vsub.f32 %v3165, %v3166
    %v3168 = vand.u32 %v3167, 4294901760
    %3169 = vmatpush1.msra.mxu0 %v3168
    %3170 = vmatprep.subr.mxu0 0.0
    %3171 = vmatpush1.msra.mxu0 0.0
    %3172 = vmatprep.subr.mxu0 0.0
    %3173 = vmatpush1.msra.mxu0 0.0
    %3174 = vmatprep.subr.mxu0 0.0
    %3175 = vmatpush1.msra.mxu0 0.0
    %3176 = vmatprep.subr.mxu0 0.0
    %3177 = vmatpush1.msra.mxu0 0.0
    %3178 = vmatprep.subr.mxu0 0.0
    %3179 = vmatpush1.msra.mxu0 0.0
    %3180 = vmatprep.subr.mxu0 0.0
    %3181 = vmatpush1.msra.mxu0 0.0
    %3182 = vmatprep.subr.mxu0 0.0
    %3183 = vmatpush1.msra.mxu0 0.0
    %3184 = vmatprep.subr.mxu0 0.0
    %3185 = vmatpush1.msra.mxu0 0.0
    %3186 = vmatprep.subr.mxu0 0.0
    %3187 = vmatpush1.msra.mxu0 0.0
    %3188 = vmatprep.subr.mxu0 0.0
    %3189 = vmatpush1.msra.mxu0 0.0
    %3190 = vmatprep.subr.mxu0 0.0
    %3191 = vmatpush1.msra.mxu0 0.0
    %3192 = vmatprep.subr.mxu0 0.0
    %3193 = vmatpush1.msra.mxu0 0.0
    %3194 = vmatprep.subr.mxu0 0.0
    %3195 = vmatpush1.msra.mxu0 0.0
    %3196 = vmatprep.subr.mxu0 0.0
    %3197 = vmatpush1.msra.mxu0 0.0
    %3198 = vmatprep.subr.mxu0 0.0
    %3199 = vmatpush1.msra.mxu0 0.0
    %3200 = vmatprep.subr.mxu0 0.0
    %3201 = vmatpush1.msra.mxu0 0.0
    %3202 = vmatprep.subr.mxu0 0.0
    %3203 = vmatpush1.msra.mxu0 0.0
    %3204 = vmatprep.subr.mxu0 0.0
    %3205 = vmatpush1.msra.mxu0 0.0
    %3206 = vmatprep.subr.mxu0 0.0
    %3207 = vmatpush1.msra.mxu0 0.0
    %3208 = vmatprep.subr.mxu0 0.0
    %3209 = vmatpush1.msra.mxu0 0.0
    %3210 = vmatprep.subr.mxu0 0.0
    %3211 = vmatpush1.msra.mxu0 0.0
    %3212 = vmatprep.subr.mxu0 0.0
    %3213 = vmatpush1.msra.mxu0 0.0
    %3214 = vmatprep.subr.mxu0 0.0
    %3215 = vmatpush1.msra.mxu0 0.0
    %3216 = vmatprep.subr.mxu0 0.0
    %3217 = vmatpush1.msra.mxu0 0.0
    %3218 = vmatprep.subr.mxu0 0.0
    %3219 = vmatpush1.msra.mxu0 0.0
    %3220 = vmatprep.subr.mxu0 0.0
    %3221 = vmatpush1.msra.mxu0 0.0
    %3222 = vmatprep.subr.mxu0 0.0
    %3223 = vmatpush1.msra.mxu0 0.0
    %3224 = vmatprep.subr.mxu0 0.0
    %3225 = vmatpush1.msra.mxu0 0.0
    %3226 = vmatprep.subr.mxu0 0.0
    %3227 = vmatpush1.msra.mxu0 0.0
    %3228 = vmatprep.subr.mxu0 0.0
    %3229 = vmatpush1.msra.mxu0 0.0
    %3230 = vmatprep.mubr.f32.mxu0 0.0
    %v3231 = vand.u32 %v82, 4294901760
    %3232 = vmatmul.mubr.f32.gmra.mrb[0].mxu0 %v3231
    %v3233 = vpop.f32.mrb[0].mxu0
    %v3234 = vadd.f32 %v3143, %v3233
    %v3235 = vpop.f32.mrb[0].mxu0
    %3236 = vmatprep.mubr.f32.mxu0 0.0
    %v3237 = vand.u32 %v85, 4294901760
    %3238 = vmatmul.mubr.f32.gmra.mrb[0].mxu0 %v3237
    %v3239 = vpop.f32.mrb[0].mxu0
    %v3240 = vadd.f32 %v3153, %v3239
    %v3241 = vpop.f32.mrb[0].mxu0
    %3242 = vdwg.mxu0
    %3243 = vmatprep.subr.mxu0 0.0
    %v3244 = vand.u32 %v3060, 4294901760
    %v3245 = vsub.f32 %v3060, %v3244
    %3246 = vmatpush1.msra.mxu0 %v3245
    %3247 = vmatprep.subr.mxu0 0.0
    %v3248 = vand.u32 %v3066, 4294901760
    %v3249 = vsub.f32 %v3066, %v3248
    %3250 = vmatpush1.msra.mxu0 %v3249
    %3251 = vmatprep.subr.mxu0 0.0
    %3252 = vmatpush1.msra.mxu0 0.0
    %3253 = vmatprep.subr.mxu0 0.0
    %3254 = vmatpush1.msra.mxu0 0.0
    %3255 = vmatprep.subr.mxu0 0.0
    %3256 = vmatpush1.msra.mxu0 0.0
    %3257 = vmatprep.subr.mxu0 0.0
    %3258 = vmatpush1.msra.mxu0 0.0
    %3259 = vmatprep.subr.mxu0 0.0
    %3260 = vmatpush1.msra.mxu0 0.0
    %3261 = vmatprep.subr.mxu0 0.0
    %3262 = vmatpush1.msra.mxu0 0.0
    %3263 = vmatprep.subr.mxu0 0.0
    %3264 = vmatpush1.msra.mxu0 0.0
    %3265 = vmatprep.subr.mxu0 0.0
    %3266 = vmatpush1.msra.mxu0 0.0
    %3267 = vmatprep.subr.mxu0 0.0
    %3268 = vmatpush1.msra.mxu0 0.0
    %3269 = vmatprep.subr.mxu0 0.0
    %3270 = vmatpush1.msra.mxu0 0.0
    %3271 = vmatprep.subr.mxu0 0.0
    %3272 = vmatpush1.msra.mxu0 0.0
    %3273 = vmatprep.subr.mxu0 0.0
    %3274 = vmatpush1.msra.mxu0 0.0
    %3275 = vmatprep.subr.mxu0 0.0
    %3276 = vmatpush1.msra.mxu0 0.0
    %3277 = vmatprep.subr.mxu0 0.0
    %3278 = vmatpush1.msra.mxu0 0.0
    %3279 = vmatprep.subr.mxu0 0.0
    %3280 = vmatpush1.msra.mxu0 0.0
    %3281 = vmatprep.subr.mxu0 0.0
    %3282 = vmatpush1.msra.mxu0 0.0
    %3283 = vmatprep.subr.mxu0 0.0
    %3284 = vmatpush1.msra.mxu0 0.0
    %3285 = vmatprep.subr.mxu0 0.0
    %3286 = vmatpush1.msra.mxu0 0.0
    %3287 = vmatprep.subr.mxu0 0.0
    %3288 = vmatpush1.msra.mxu0 0.0
    %3289 = vmatprep.subr.mxu0 0.0
    %3290 = vmatpush1.msra.mxu0 0.0
    %3291 = vmatprep.subr.mxu0 0.0
    %3292 = vmatpush1.msra.mxu0 0.0
    %3293 = vmatprep.subr.mxu0 0.0
    %3294 = vmatpush1.msra.mxu0 0.0
    %3295 = vmatprep.subr.mxu0 0.0
    %3296 = vmatpush1.msra.mxu0 0.0
    %3297 = vmatprep.subr.mxu0 0.0
    %3298 = vmatpush1.msra.mxu0 0.0
    %3299 = vmatprep.subr.mxu0 0.0
    %3300 = vmatpush1.msra.mxu0 0.0
    %3301 = vmatprep.subr.mxu0 0.0
    %3302 = vmatpush1.msra.mxu0 0.0
    %3303 = vmatprep.subr.mxu0 0.0
    %3304 = vmatpush1.msra.mxu0 0.0
    %3305 = vmatprep.subr.mxu0 0.0
    %3306 = vmatpush1.msra.mxu0 0.0
    %3307 = vmatprep.subr.mxu0 0.0
    %3308 = vmatpush1.msra.mxu0 0.0
    %3309 = vmatprep.subr.mxu0 0.0
    %3310 = vmatpush1.msra.mxu0 0.0
    %3311 = vmatprep.mubr.f32.mxu0 0.0
    %v3312 = vand.u32 %v82, 4294901760
    %v3313 = vsub.f32 %v82, %v3312
    %3314 = vmatmul.mubr.f32.gmra.mrb[0].mxu0 %v3313
    %v3315 = vpop.f32.mrb[0].mxu0
    %v3316 = vadd.f32 %v3234, %v3315
    %v3317 = vpop.f32.mrb[0].mxu0
    %3318 = vmatprep.mubr.f32.mxu0 0.0
    %v3319 = vand.u32 %v85, 4294901760
    %v3320 = vsub.f32 %v85, %v3319
    %3321 = vmatmul.mubr.f32.gmra.mrb[0].mxu0 %v3320
    %v3322 = vpop.f32.mrb[0].mxu0
    %v3323 = vadd.f32 %v3240, %v3322
    %v3324 = vpop.f32.mrb[0].mxu0
    %3325 = vdwg.mxu0
    %3326 = vmatprep.subr.mxu0 0.0
    %v3327 = vand.u32 %v3060, 4294901760
    %3328 = vmatpush1.msra.mxu0 %v3327
    %3329 = vmatprep.subr.mxu0 0.0
    %v3330 = vand.u32 %v3066, 4294901760
    %3331 = vmatpush1.msra.mxu0 %v3330
    %3332 = vmatprep.subr.mxu0 0.0
    %3333 = vmatpush1.msra.mxu0 0.0
    %3334 = vmatprep.subr.mxu0 0.0
    %3335 = vmatpush1.msra.mxu0 0.0
    %3336 = vmatprep.subr.mxu0 0.0
    %3337 = vmatpush1.msra.mxu0 0.0
    %3338 = vmatprep.subr.mxu0 0.0
    %3339 = vmatpush1.msra.mxu0 0.0
    %3340 = vmatprep.subr.mxu0 0.0
    %3341 = vmatpush1.msra.mxu0 0.0
    %3342 = vmatprep.subr.mxu0 0.0
    %3343 = vmatpush1.msra.mxu0 0.0
    %3344 = vmatprep.subr.mxu0 0.0
    %3345 = vmatpush1.msra.mxu0 0.0
    %3346 = vmatprep.subr.mxu0 0.0
    %3347 = vmatpush1.msra.mxu0 0.0
    %3348 = vmatprep.subr.mxu0 0.0
    %3349 = vmatpush1.msra.mxu0 0.0
    %3350 = vmatprep.subr.mxu0 0.0
    %3351 = vmatpush1.msra.mxu0 0.0
    %3352 = vmatprep.subr.mxu0 0.0
    %3353 = vmatpush1.msra.mxu0 0.0
    %3354 = vmatprep.subr.mxu0 0.0
    %3355 = vmatpush1.msra.mxu0 0.0
    %3356 = vmatprep.subr.mxu0 0.0
    %3357 = vmatpush1.msra.mxu0 0.0
    %3358 = vmatprep.subr.mxu0 0.0
    %3359 = vmatpush1.msra.mxu0 0.0
    %3360 = vmatprep.subr.mxu0 0.0
    %3361 = vmatpush1.msra.mxu0 0.0
    %3362 = vmatprep.subr.mxu0 0.0
    %3363 = vmatpush1.msra.mxu0 0.0
    %3364 = vmatprep.subr.mxu0 0.0
    %3365 = vmatpush1.msra.mxu0 0.0
    %3366 = vmatprep.subr.mxu0 0.0
    %3367 = vmatpush1.msra.mxu0 0.0
    %3368 = vmatprep.subr.mxu0 0.0
    %3369 = vmatpush1.msra.mxu0 0.0
    %3370 = vmatprep.subr.mxu0 0.0
    %3371 = vmatpush1.msra.mxu0 0.0
    %3372 = vmatprep.subr.mxu0 0.0
    %3373 = vmatpush1.msra.mxu0 0.0
    %3374 = vmatprep.subr.mxu0 0.0
    %3375 = vmatpush1.msra.mxu0 0.0
    %3376 = vmatprep.subr.mxu0 0.0
    %3377 = vmatpush1.msra.mxu0 0.0
    %3378 = vmatprep.subr.mxu0 0.0
    %3379 = vmatpush1.msra.mxu0 0.0
    %3380 = vmatprep.subr.mxu0 0.0
    %3381 = vmatpush1.msra.mxu0 0.0
    %3382 = vmatprep.subr.mxu0 0.0
    %3383 = vmatpush1.msra.mxu0 0.0
    %3384 = vmatprep.subr.mxu0 0.0
    %3385 = vmatpush1.msra.mxu0 0.0
    %3386 = vmatprep.subr.mxu0 0.0
    %3387 = vmatpush1.msra.mxu0 0.0
    %3388 = vmatprep.subr.mxu0 0.0
    %3389 = vmatpush1.msra.mxu0 0.0
    %3390 = vmatprep.subr.mxu0 0.0
    %3391 = vmatpush1.msra.mxu0 0.0
    %3392 = vmatprep.mubr.f32.mxu0 0.0
    %v3393 = vand.u32 %v82, 4294901760
    %v3394 = vsub.f32 %v82, %v3393
    %v3395 = vand.u32 %v3394, 4294901760
    %3396 = vmatmul.mubr.f32.gmra.mrb[0].mxu0 %v3395
    %v3397 = vpop.f32.mrb[0].mxu0
    %v3398 = vadd.f32 %v3316, %v3397
    %v3399 = vpop.f32.mrb[0].mxu0
    %3400 = vmatprep.mubr.f32.mxu0 0.0
    %v3401 = vand.u32 %v85, 4294901760
    %v3402 = vsub.f32 %v85, %v3401
    %v3403 = vand.u32 %v3402, 4294901760
    %3404 = vmatmul.mubr.f32.gmra.mrb[0].mxu0 %v3403
    %v3405 = vpop.f32.mrb[0].mxu0
    %v3406 = vadd.f32 %v3323, %v3405
    %v3407 = vpop.f32.mrb[0].mxu0
    %3408 = vdwg.mxu0
    %3409 = vmatprep.subr.mxu0 0.0
    %v3410 = vand.u32 %v3060, 4294901760
    %v3411 = vsub.f32 %v3060, %v3410
    %v3412 = vand.u32 %v3411, 4294901760
    %3413 = vmatpush1.msra.mxu0 %v3412
    %3414 = vmatprep.subr.mxu0 0.0
    %v3415 = vand.u32 %v3066, 4294901760
    %v3416 = vsub.f32 %v3066, %v3415
    %v3417 = vand.u32 %v3416, 4294901760
    %3418 = vmatpush1.msra.mxu0 %v3417
    %3419 = vmatprep.subr.mxu0 0.0
    %3420 = vmatpush1.msra.mxu0 0.0
    %3421 = vmatprep.subr.mxu0 0.0
    %3422 = vmatpush1.msra.mxu0 0.0
    %3423 = vmatprep.subr.mxu0 0.0
    %3424 = vmatpush1.msra.mxu0 0.0
    %3425 = vmatprep.subr.mxu0 0.0
    %3426 = vmatpush1.msra.mxu0 0.0
    %3427 = vmatprep.subr.mxu0 0.0
    %3428 = vmatpush1.msra.mxu0 0.0
    %3429 = vmatprep.subr.mxu0 0.0
    %3430 = vmatpush1.msra.mxu0 0.0
    %3431 = vmatprep.subr.mxu0 0.0
    %3432 = vmatpush1.msra.mxu0 0.0
    %3433 = vmatprep.subr.mxu0 0.0
    %3434 = vmatpush1.msra.mxu0 0.0
    %3435 = vmatprep.subr.mxu0 0.0
    %3436 = vmatpush1.msra.mxu0 0.0
    %3437 = vmatprep.subr.mxu0 0.0
    %3438 = vmatpush1.msra.mxu0 0.0
    %3439 = vmatprep.subr.mxu0 0.0
    %3440 = vmatpush1.msra.mxu0 0.0
    %3441 = vmatprep.subr.mxu0 0.0
    %3442 = vmatpush1.msra.mxu0 0.0
    %3443 = vmatprep.subr.mxu0 0.0
    %3444 = vmatpush1.msra.mxu0 0.0
    %3445 = vmatprep.subr.mxu0 0.0
    %3446 = vmatpush1.msra.mxu0 0.0
    %3447 = vmatprep.subr.mxu0 0.0
    %3448 = vmatpush1.msra.mxu0 0.0
    %3449 = vmatprep.subr.mxu0 0.0
    %3450 = vmatpush1.msra.mxu0 0.0
    %3451 = vmatprep.subr.mxu0 0.0
    %3452 = vmatpush1.msra.mxu0 0.0
    %3453 = vmatprep.subr.mxu0 0.0
    %3454 = vmatpush1.msra.mxu0 0.0
    %3455 = vmatprep.subr.mxu0 0.0
    %3456 = vmatpush1.msra.mxu0 0.0
    %3457 = vmatprep.subr.mxu0 0.0
    %3458 = vmatpush1.msra.mxu0 0.0
    %3459 = vmatprep.subr.mxu0 0.0
    %3460 = vmatpush1.msra.mxu0 0.0
    %3461 = vmatprep.subr.mxu0 0.0
    %3462 = vmatpush1.msra.mxu0 0.0
    %3463 = vmatprep.subr.mxu0 0.0
    %3464 = vmatpush1.msra.mxu0 0.0
    %3465 = vmatprep.subr.mxu0 0.0
    %3466 = vmatpush1.msra.mxu0 0.0
    %3467 = vmatprep.subr.mxu0 0.0
    %3468 = vmatpush1.msra.mxu0 0.0
    %3469 = vmatprep.subr.mxu0 0.0
    %3470 = vmatpush1.msra.mxu0 0.0
    %3471 = vmatprep.subr.mxu0 0.0
    %3472 = vmatpush1.msra.mxu0 0.0
    %3473 = vmatprep.subr.mxu0 0.0
    %3474 = vmatpush1.msra.mxu0 0.0
    %3475 = vmatprep.subr.mxu0 0.0
    %3476 = vmatpush1.msra.mxu0 0.0
    %3477 = vmatprep.subr.mxu0 0.0
    %3478 = vmatpush1.msra.mxu0 0.0
    %3479 = vmatprep.mubr.f32.mxu0 0.0
    %v3480 = vand.u32 %v82, 4294901760
    %3481 = vmatmul.mubr.f32.gmra.mrb[0].mxu0 %v3480
    %v3482 = vpop.f32.mrb[0].mxu0
    %v3483 = vadd.f32 %v3398, %v3482
    %v3484 = vpop.f32.mrb[0].mxu0
    %3485 = vmatprep.mubr.f32.mxu0 0.0
    %v3486 = vand.u32 %v85, 4294901760
    %3487 = vmatmul.mubr.f32.gmra.mrb[0].mxu0 %v3486
    %v3488 = vpop.f32.mrb[0].mxu0
    %v3489 = vadd.f32 %v3406, %v3488
    %v3490 = vpop.f32.mrb[0].mxu0
    %3491 = vdwg.mxu0
    %3492 = vmatprep.subr.mxu0 0.0
    %v3493 = vand.u32 %v3060, 4294901760
    %3494 = vmatpush1.msra.mxu0 %v3493
    %3495 = vmatprep.subr.mxu0 0.0
    %v3496 = vand.u32 %v3066, 4294901760
    %3497 = vmatpush1.msra.mxu0 %v3496
    %3498 = vmatprep.subr.mxu0 0.0
    %3499 = vmatpush1.msra.mxu0 0.0
    %3500 = vmatprep.subr.mxu0 0.0
    %3501 = vmatpush1.msra.mxu0 0.0
    %3502 = vmatprep.subr.mxu0 0.0
    %3503 = vmatpush1.msra.mxu0 0.0
    %3504 = vmatprep.subr.mxu0 0.0
    %3505 = vmatpush1.msra.mxu0 0.0
    %3506 = vmatprep.subr.mxu0 0.0
    %3507 = vmatpush1.msra.mxu0 0.0
    %3508 = vmatprep.subr.mxu0 0.0
    %3509 = vmatpush1.msra.mxu0 0.0
    %3510 = vmatprep.subr.mxu0 0.0
    %3511 = vmatpush1.msra.mxu0 0.0
    %3512 = vmatprep.subr.mxu0 0.0
    %3513 = vmatpush1.msra.mxu0 0.0
    %3514 = vmatprep.subr.mxu0 0.0
    %3515 = vmatpush1.msra.mxu0 0.0
    %3516 = vmatprep.subr.mxu0 0.0
    %3517 = vmatpush1.msra.mxu0 0.0
    %3518 = vmatprep.subr.mxu0 0.0
    %3519 = vmatpush1.msra.mxu0 0.0
    %3520 = vmatprep.subr.mxu0 0.0
    %3521 = vmatpush1.msra.mxu0 0.0
    %3522 = vmatprep.subr.mxu0 0.0
    %3523 = vmatpush1.msra.mxu0 0.0
    %3524 = vmatprep.subr.mxu0 0.0
    %3525 = vmatpush1.msra.mxu0 0.0
    %3526 = vmatprep.subr.mxu0 0.0
    %3527 = vmatpush1.msra.mxu0 0.0
    %3528 = vmatprep.subr.mxu0 0.0
    %3529 = vmatpush1.msra.mxu0 0.0
    %3530 = vmatprep.subr.mxu0 0.0
    %3531 = vmatpush1.msra.mxu0 0.0
    %3532 = vmatprep.subr.mxu0 0.0
    %3533 = vmatpush1.msra.mxu0 0.0
    %3534 = vmatprep.subr.mxu0 0.0
    %3535 = vmatpush1.msra.mxu0 0.0
    %3536 = vmatprep.subr.mxu0 0.0
    %3537 = vmatpush1.msra.mxu0 0.0
    %3538 = vmatprep.subr.mxu0 0.0
    %3539 = vmatpush1.msra.mxu0 0.0
    %3540 = vmatprep.subr.mxu0 0.0
    %3541 = vmatpush1.msra.mxu0 0.0
    %3542 = vmatprep.subr.mxu0 0.0
    %3543 = vmatpush1.msra.mxu0 0.0
    %3544 = vmatprep.subr.mxu0 0.0
    %3545 = vmatpush1.msra.mxu0 0.0
    %3546 = vmatprep.subr.mxu0 0.0
    %3547 = vmatpush1.msra.mxu0 0.0
    %3548 = vmatprep.subr.mxu0 0.0
    %3549 = vmatpush1.msra.mxu0 0.0
    %3550 = vmatprep.subr.mxu0 0.0
    %3551 = vmatpush1.msra.mxu0 0.0
    %3552 = vmatprep.subr.mxu0 0.0
    %3553 = vmatpush1.msra.mxu0 0.0
    %3554 = vmatprep.subr.mxu0 0.0
    %3555 = vmatpush1.msra.mxu0 0.0
    %3556 = vmatprep.subr.mxu0 0.0
    %3557 = vmatpush1.msra.mxu0 0.0
    %3558 = vmatprep.mubr.f32.mxu0 0.0
    %v3559 = vand.u32 %v82, 4294901760
    %3560 = vmatmul.mubr.f32.gmra.mrb[0].mxu0 %v3559
    %v3561 = vpop.f32.mrb[0].mxu0
    %v3562 = vadd.f32 %v3483, %v3561
    %v3563 = vpop.f32.mrb[0].mxu0
    %3564 = vmatprep.mubr.f32.mxu0 0.0
    %v3565 = vand.u32 %v85, 4294901760
    %3566 = vmatmul.mubr.f32.gmra.mrb[0].mxu0 %v3565
    %v3567 = vpop.f32.mrb[0].mxu0
    %v3568 = vadd.f32 %v3489, %v3567
    %v3569 = vpop.f32.mrb[0].mxu0
    %3570 = vdwg.mxu0
    %v3571 = vmul.f32 %v3562, 2.0
    %v3572 = vmul.f32 %v3568, 2.0
    %v3573 = vsub.f32 %v3571, %v2565
    %v3574 = vsub.f32 %v3572, %v2566
    %3575 = vmatprep.subr.mxu0 0.0
    %v3576 = vand.u32 %v3060, 4294901760
    %3577 = vmatpush1.msra.mxu0 %v3576
    %3578 = vmatprep.subr.mxu0 0.0
    %v3579 = vand.u32 %v3066, 4294901760
    %3580 = vmatpush1.msra.mxu0 %v3579
    %3581 = vmatprep.subr.mxu0 0.0
    %3582 = vmatpush1.msra.mxu0 0.0
    %3583 = vmatprep.subr.mxu0 0.0
    %3584 = vmatpush1.msra.mxu0 0.0
    %3585 = vmatprep.subr.mxu0 0.0
    %3586 = vmatpush1.msra.mxu0 0.0
    %3587 = vmatprep.subr.mxu0 0.0
    %3588 = vmatpush1.msra.mxu0 0.0
    %3589 = vmatprep.subr.mxu0 0.0
    %3590 = vmatpush1.msra.mxu0 0.0
    %3591 = vmatprep.subr.mxu0 0.0
    %3592 = vmatpush1.msra.mxu0 0.0
    %3593 = vmatprep.subr.mxu0 0.0
    %3594 = vmatpush1.msra.mxu0 0.0
    %3595 = vmatprep.subr.mxu0 0.0
    %3596 = vmatpush1.msra.mxu0 0.0
    %3597 = vmatprep.subr.mxu0 0.0
    %3598 = vmatpush1.msra.mxu0 0.0
    %3599 = vmatprep.subr.mxu0 0.0
    %3600 = vmatpush1.msra.mxu0 0.0
    %3601 = vmatprep.subr.mxu0 0.0
    %3602 = vmatpush1.msra.mxu0 0.0
    %3603 = vmatprep.subr.mxu0 0.0
    %3604 = vmatpush1.msra.mxu0 0.0
    %3605 = vmatprep.subr.mxu0 0.0
    %3606 = vmatpush1.msra.mxu0 0.0
    %3607 = vmatprep.subr.mxu0 0.0
    %3608 = vmatpush1.msra.mxu0 0.0
    %3609 = vmatprep.subr.mxu0 0.0
    %3610 = vmatpush1.msra.mxu0 0.0
    %3611 = vmatprep.subr.mxu0 0.0
    %3612 = vmatpush1.msra.mxu0 0.0
    %3613 = vmatprep.subr.mxu0 0.0
    %3614 = vmatpush1.msra.mxu0 0.0
    %3615 = vmatprep.subr.mxu0 0.0
    %3616 = vmatpush1.msra.mxu0 0.0
    %3617 = vmatprep.subr.mxu0 0.0
    %3618 = vmatpush1.msra.mxu0 0.0
    %3619 = vmatprep.subr.mxu0 0.0
    %3620 = vmatpush1.msra.mxu0 0.0
    %3621 = vmatprep.subr.mxu0 0.0
    %3622 = vmatpush1.msra.mxu0 0.0
    %3623 = vmatprep.subr.mxu0 0.0
    %3624 = vmatpush1.msra.mxu0 0.0
    %3625 = vmatprep.subr.mxu0 0.0
    %3626 = vmatpush1.msra.mxu0 0.0
    %3627 = vmatprep.subr.mxu0 0.0
    %3628 = vmatpush1.msra.mxu0 0.0
    %3629 = vmatprep.subr.mxu0 0.0
    %3630 = vmatpush1.msra.mxu0 0.0
    %3631 = vmatprep.subr.mxu0 0.0
    %3632 = vmatpush1.msra.mxu0 0.0
    %3633 = vmatprep.subr.mxu0 0.0
    %3634 = vmatpush1.msra.mxu0 0.0
    %3635 = vmatprep.subr.mxu0 0.0
    %3636 = vmatpush1.msra.mxu0 0.0
    %3637 = vmatprep.subr.mxu0 0.0
    %3638 = vmatpush1.msra.mxu0 0.0
    %3639 = vmatprep.subr.mxu0 0.0
    %3640 = vmatpush1.msra.mxu0 0.0
    %3641 = vmatprep.mubr.f32.mxu0 0.0
    %v3642 = vand.u32 %v1099, 4294901760
    %v3643 = vsub.f32 %v1099, %v3642
    %v3644 = vand.u32 %v3643, 4294901760
    %v3645 = vsub.f32 %v3643, %v3644
    %v3646 = vand.u32 %v3645, 4294901760
    %3647 = vmatmul.mubr.f32.gmra.mrb[0].mxu0 %v3646
    %v3648 = vpop.f32.mrb[0].mxu0
    %v3649 = vadd.f32 0.0, %v3648
    %v3650 = vpop.f32.mrb[0].mxu0
    %3651 = vmatprep.mubr.f32.mxu0 0.0
    %v3652 = vand.u32 %v1102, 4294901760
    %v3653 = vsub.f32 %v1102, %v3652
    %v3654 = vand.u32 %v3653, 4294901760
    %v3655 = vsub.f32 %v3653, %v3654
    %v3656 = vand.u32 %v3655, 4294901760
    %3657 = vmatmul.mubr.f32.gmra.mrb[0].mxu0 %v3656
    %v3658 = vpop.f32.mrb[0].mxu0
    %v3659 = vadd.f32 0.0, %v3658
    %v3660 = vpop.f32.mrb[0].mxu0
    %3661 = vdwg.mxu0
    %3662 = vmatprep.subr.mxu0 0.0
    %v3663 = vand.u32 %v3060, 4294901760
    %v3664 = vsub.f32 %v3060, %v3663
    %v3665 = vand.u32 %v3664, 4294901760
    %v3666 = vsub.f32 %v3664, %v3665
    %v3667 = vand.u32 %v3666, 4294901760
    %3668 = vmatpush1.msra.mxu0 %v3667
    %3669 = vmatprep.subr.mxu0 0.0
    %v3670 = vand.u32 %v3066, 4294901760
    %v3671 = vsub.f32 %v3066, %v3670
    %v3672 = vand.u32 %v3671, 4294901760
    %v3673 = vsub.f32 %v3671, %v3672
    %v3674 = vand.u32 %v3673, 4294901760
    %3675 = vmatpush1.msra.mxu0 %v3674
    %3676 = vmatprep.subr.mxu0 0.0
    %3677 = vmatpush1.msra.mxu0 0.0
    %3678 = vmatprep.subr.mxu0 0.0
    %3679 = vmatpush1.msra.mxu0 0.0
    %3680 = vmatprep.subr.mxu0 0.0
    %3681 = vmatpush1.msra.mxu0 0.0
    %3682 = vmatprep.subr.mxu0 0.0
    %3683 = vmatpush1.msra.mxu0 0.0
    %3684 = vmatprep.subr.mxu0 0.0
    %3685 = vmatpush1.msra.mxu0 0.0
    %3686 = vmatprep.subr.mxu0 0.0
    %3687 = vmatpush1.msra.mxu0 0.0
    %3688 = vmatprep.subr.mxu0 0.0
    %3689 = vmatpush1.msra.mxu0 0.0
    %3690 = vmatprep.subr.mxu0 0.0
    %3691 = vmatpush1.msra.mxu0 0.0
    %3692 = vmatprep.subr.mxu0 0.0
    %3693 = vmatpush1.msra.mxu0 0.0
    %3694 = vmatprep.subr.mxu0 0.0
    %3695 = vmatpush1.msra.mxu0 0.0
    %3696 = vmatprep.subr.mxu0 0.0
    %3697 = vmatpush1.msra.mxu0 0.0
    %3698 = vmatprep.subr.mxu0 0.0
    %3699 = vmatpush1.msra.mxu0 0.0
    %3700 = vmatprep.subr.mxu0 0.0
    %3701 = vmatpush1.msra.mxu0 0.0
    %3702 = vmatprep.subr.mxu0 0.0
    %3703 = vmatpush1.msra.mxu0 0.0
    %3704 = vmatprep.subr.mxu0 0.0
    %3705 = vmatpush1.msra.mxu0 0.0
    %3706 = vmatprep.subr.mxu0 0.0
    %3707 = vmatpush1.msra.mxu0 0.0
    %3708 = vmatprep.subr.mxu0 0.0
    %3709 = vmatpush1.msra.mxu0 0.0
    %3710 = vmatprep.subr.mxu0 0.0
    %3711 = vmatpush1.msra.mxu0 0.0
    %3712 = vmatprep.subr.mxu0 0.0
    %3713 = vmatpush1.msra.mxu0 0.0
    %3714 = vmatprep.subr.mxu0 0.0
    %3715 = vmatpush1.msra.mxu0 0.0
    %3716 = vmatprep.subr.mxu0 0.0
    %3717 = vmatpush1.msra.mxu0 0.0
    %3718 = vmatprep.subr.mxu0 0.0
    %3719 = vmatpush1.msra.mxu0 0.0
    %3720 = vmatprep.subr.mxu0 0.0
    %3721 = vmatpush1.msra.mxu0 0.0
    %3722 = vmatprep.subr.mxu0 0.0
    %3723 = vmatpush1.msra.mxu0 0.0
    %3724 = vmatprep.subr.mxu0 0.0
    %3725 = vmatpush1.msra.mxu0 0.0
    %3726 = vmatprep.subr.mxu0 0.0
    %3727 = vmatpush1.msra.mxu0 0.0
    %3728 = vmatprep.subr.mxu0 0.0
    %3729 = vmatpush1.msra.mxu0 0.0
    %3730 = vmatprep.subr.mxu0 0.0
    %3731 = vmatpush1.msra.mxu0 0.0
    %3732 = vmatprep.subr.mxu0 0.0
    %3733 = vmatpush1.msra.mxu0 0.0
    %3734 = vmatprep.subr.mxu0 0.0
    %3735 = vmatpush1.msra.mxu0 0.0
    %3736 = vmatprep.mubr.f32.mxu0 0.0
    %v3737 = vand.u32 %v1099, 4294901760
    %3738 = vmatmul.mubr.f32.gmra.mrb[0].mxu0 %v3737
    %v3739 = vpop.f32.mrb[0].mxu0
    %v3740 = vadd.f32 %v3649, %v3739
    %v3741 = vpop.f32.mrb[0].mxu0
    %3742 = vmatprep.mubr.f32.mxu0 0.0
    %v3743 = vand.u32 %v1102, 4294901760
    %3744 = vmatmul.mubr.f32.gmra.mrb[0].mxu0 %v3743
    %v3745 = vpop.f32.mrb[0].mxu0
    %v3746 = vadd.f32 %v3659, %v3745
    %v3747 = vpop.f32.mrb[0].mxu0
    %3748 = vdwg.mxu0
    %3749 = vmatprep.subr.mxu0 0.0
    %v3750 = vand.u32 %v3060, 4294901760
    %v3751 = vsub.f32 %v3060, %v3750
    %3752 = vmatpush1.msra.mxu0 %v3751
    %3753 = vmatprep.subr.mxu0 0.0
    %v3754 = vand.u32 %v3066, 4294901760
    %v3755 = vsub.f32 %v3066, %v3754
    %3756 = vmatpush1.msra.mxu0 %v3755
    %3757 = vmatprep.subr.mxu0 0.0
    %3758 = vmatpush1.msra.mxu0 0.0
    %3759 = vmatprep.subr.mxu0 0.0
    %3760 = vmatpush1.msra.mxu0 0.0
    %3761 = vmatprep.subr.mxu0 0.0
    %3762 = vmatpush1.msra.mxu0 0.0
    %3763 = vmatprep.subr.mxu0 0.0
    %3764 = vmatpush1.msra.mxu0 0.0
    %3765 = vmatprep.subr.mxu0 0.0
    %3766 = vmatpush1.msra.mxu0 0.0
    %3767 = vmatprep.subr.mxu0 0.0
    %3768 = vmatpush1.msra.mxu0 0.0
    %3769 = vmatprep.subr.mxu0 0.0
    %3770 = vmatpush1.msra.mxu0 0.0
    %3771 = vmatprep.subr.mxu0 0.0
    %3772 = vmatpush1.msra.mxu0 0.0
    %3773 = vmatprep.subr.mxu0 0.0
    %3774 = vmatpush1.msra.mxu0 0.0
    %3775 = vmatprep.subr.mxu0 0.0
    %3776 = vmatpush1.msra.mxu0 0.0
    %3777 = vmatprep.subr.mxu0 0.0
    %3778 = vmatpush1.msra.mxu0 0.0
    %3779 = vmatprep.subr.mxu0 0.0
    %3780 = vmatpush1.msra.mxu0 0.0
    %3781 = vmatprep.subr.mxu0 0.0
    %3782 = vmatpush1.msra.mxu0 0.0
    %3783 = vmatprep.subr.mxu0 0.0
    %3784 = vmatpush1.msra.mxu0 0.0
    %3785 = vmatprep.subr.mxu0 0.0
    %3786 = vmatpush1.msra.mxu0 0.0
    %3787 = vmatprep.subr.mxu0 0.0
    %3788 = vmatpush1.msra.mxu0 0.0
    %3789 = vmatprep.subr.mxu0 0.0
    %3790 = vmatpush1.msra.mxu0 0.0
    %3791 = vmatprep.subr.mxu0 0.0
    %3792 = vmatpush1.msra.mxu0 0.0
    %3793 = vmatprep.subr.mxu0 0.0
    %3794 = vmatpush1.msra.mxu0 0.0
    %3795 = vmatprep.subr.mxu0 0.0
    %3796 = vmatpush1.msra.mxu0 0.0
    %3797 = vmatprep.subr.mxu0 0.0
    %3798 = vmatpush1.msra.mxu0 0.0
    %3799 = vmatprep.subr.mxu0 0.0
    %3800 = vmatpush1.msra.mxu0 0.0
    %3801 = vmatprep.subr.mxu0 0.0
    %3802 = vmatpush1.msra.mxu0 0.0
    %3803 = vmatprep.subr.mxu0 0.0
    %3804 = vmatpush1.msra.mxu0 0.0
    %3805 = vmatprep.subr.mxu0 0.0
    %3806 = vmatpush1.msra.mxu0 0.0
    %3807 = vmatprep.subr.mxu0 0.0
    %3808 = vmatpush1.msra.mxu0 0.0
    %3809 = vmatprep.subr.mxu0 0.0
    %3810 = vmatpush1.msra.mxu0 0.0
    %3811 = vmatprep.subr.mxu0 0.0
    %3812 = vmatpush1.msra.mxu0 0.0
    %3813 = vmatprep.subr.mxu0 0.0
    %3814 = vmatpush1.msra.mxu0 0.0
    %3815 = vmatprep.subr.mxu0 0.0
    %3816 = vmatpush1.msra.mxu0 0.0
    %3817 = vmatprep.mubr.f32.mxu0 0.0
    %v3818 = vand.u32 %v1099, 4294901760
    %v3819 = vsub.f32 %v1099, %v3818
    %3820 = vmatmul.mubr.f32.gmra.mrb[0].mxu0 %v3819
    %v3821 = vpop.f32.mrb[0].mxu0
    %v3822 = vadd.f32 %v3740, %v3821
    %v3823 = vpop.f32.mrb[0].mxu0
    %3824 = vmatprep.mubr.f32.mxu0 0.0
    %v3825 = vand.u32 %v1102, 4294901760
    %v3826 = vsub.f32 %v1102, %v3825
    %3827 = vmatmul.mubr.f32.gmra.mrb[0].mxu0 %v3826
    %v3828 = vpop.f32.mrb[0].mxu0
    %v3829 = vadd.f32 %v3746, %v3828
    %v3830 = vpop.f32.mrb[0].mxu0
    %3831 = vdwg.mxu0
    %3832 = vmatprep.subr.mxu0 0.0
    %v3833 = vand.u32 %v3060, 4294901760
    %3834 = vmatpush1.msra.mxu0 %v3833
    %3835 = vmatprep.subr.mxu0 0.0
    %v3836 = vand.u32 %v3066, 4294901760
    %3837 = vmatpush1.msra.mxu0 %v3836
    %3838 = vmatprep.subr.mxu0 0.0
    %3839 = vmatpush1.msra.mxu0 0.0
    %3840 = vmatprep.subr.mxu0 0.0
    %3841 = vmatpush1.msra.mxu0 0.0
    %3842 = vmatprep.subr.mxu0 0.0
    %3843 = vmatpush1.msra.mxu0 0.0
    %3844 = vmatprep.subr.mxu0 0.0
    %3845 = vmatpush1.msra.mxu0 0.0
    %3846 = vmatprep.subr.mxu0 0.0
    %3847 = vmatpush1.msra.mxu0 0.0
    %3848 = vmatprep.subr.mxu0 0.0
    %3849 = vmatpush1.msra.mxu0 0.0
    %3850 = vmatprep.subr.mxu0 0.0
    %3851 = vmatpush1.msra.mxu0 0.0
    %3852 = vmatprep.subr.mxu0 0.0
    %3853 = vmatpush1.msra.mxu0 0.0
    %3854 = vmatprep.subr.mxu0 0.0
    %3855 = vmatpush1.msra.mxu0 0.0
    %3856 = vmatprep.subr.mxu0 0.0
    %3857 = vmatpush1.msra.mxu0 0.0
    %3858 = vmatprep.subr.mxu0 0.0
    %3859 = vmatpush1.msra.mxu0 0.0
    %3860 = vmatprep.subr.mxu0 0.0
    %3861 = vmatpush1.msra.mxu0 0.0
    %3862 = vmatprep.subr.mxu0 0.0
    %3863 = vmatpush1.msra.mxu0 0.0
    %3864 = vmatprep.subr.mxu0 0.0
    %3865 = vmatpush1.msra.mxu0 0.0
    %3866 = vmatprep.subr.mxu0 0.0
    %3867 = vmatpush1.msra.mxu0 0.0
    %3868 = vmatprep.subr.mxu0 0.0
    %3869 = vmatpush1.msra.mxu0 0.0
    %3870 = vmatprep.subr.mxu0 0.0
    %3871 = vmatpush1.msra.mxu0 0.0
    %3872 = vmatprep.subr.mxu0 0.0
    %3873 = vmatpush1.msra.mxu0 0.0
    %3874 = vmatprep.subr.mxu0 0.0
    %3875 = vmatpush1.msra.mxu0 0.0
    %3876 = vmatprep.subr.mxu0 0.0
    %3877 = vmatpush1.msra.mxu0 0.0
    %3878 = vmatprep.subr.mxu0 0.0
    %3879 = vmatpush1.msra.mxu0 0.0
    %3880 = vmatprep.subr.mxu0 0.0
    %3881 = vmatpush1.msra.mxu0 0.0
    %3882 = vmatprep.subr.mxu0 0.0
    %3883 = vmatpush1.msra.mxu0 0.0
    %3884 = vmatprep.subr.mxu0 0.0
    %3885 = vmatpush1.msra.mxu0 0.0
    %3886 = vmatprep.subr.mxu0 0.0
    %3887 = vmatpush1.msra.mxu0 0.0
    %3888 = vmatprep.subr.mxu0 0.0
    %3889 = vmatpush1.msra.mxu0 0.0
    %3890 = vmatprep.subr.mxu0 0.0
    %3891 = vmatpush1.msra.mxu0 0.0
    %3892 = vmatprep.subr.mxu0 0.0
    %3893 = vmatpush1.msra.mxu0 0.0
    %3894 = vmatprep.subr.mxu0 0.0
    %3895 = vmatpush1.msra.mxu0 0.0
    %3896 = vmatprep.subr.mxu0 0.0
    %3897 = vmatpush1.msra.mxu0 0.0
    %3898 = vmatprep.mubr.f32.mxu0 0.0
    %v3899 = vand.u32 %v1099, 4294901760
    %v3900 = vsub.f32 %v1099, %v3899
    %v3901 = vand.u32 %v3900, 4294901760
    %3902 = vmatmul.mubr.f32.gmra.mrb[0].mxu0 %v3901
    %v3903 = vpop.f32.mrb[0].mxu0
    %v3904 = vadd.f32 %v3822, %v3903
    %v3905 = vpop.f32.mrb[0].mxu0
    %3906 = vmatprep.mubr.f32.mxu0 0.0
    %v3907 = vand.u32 %v1102, 4294901760
    %v3908 = vsub.f32 %v1102, %v3907
    %v3909 = vand.u32 %v3908, 4294901760
    %3910 = vmatmul.mubr.f32.gmra.mrb[0].mxu0 %v3909
    %v3911 = vpop.f32.mrb[0].mxu0
    %v3912 = vadd.f32 %v3829, %v3911
    %v3913 = vpop.f32.mrb[0].mxu0
    %3914 = vdwg.mxu0
    %3915 = vmatprep.subr.mxu0 0.0
    %v3916 = vand.u32 %v3060, 4294901760
    %v3917 = vsub.f32 %v3060, %v3916
    %v3918 = vand.u32 %v3917, 4294901760
    %3919 = vmatpush1.msra.mxu0 %v3918
    %3920 = vmatprep.subr.mxu0 0.0
    %v3921 = vand.u32 %v3066, 4294901760
    %v3922 = vsub.f32 %v3066, %v3921
    %v3923 = vand.u32 %v3922, 4294901760
    %3924 = vmatpush1.msra.mxu0 %v3923
    %3925 = vmatprep.subr.mxu0 0.0
    %3926 = vmatpush1.msra.mxu0 0.0
    %3927 = vmatprep.subr.mxu0 0.0
    %3928 = vmatpush1.msra.mxu0 0.0
    %3929 = vmatprep.subr.mxu0 0.0
    %3930 = vmatpush1.msra.mxu0 0.0
    %3931 = vmatprep.subr.mxu0 0.0
    %3932 = vmatpush1.msra.mxu0 0.0
    %3933 = vmatprep.subr.mxu0 0.0
    %3934 = vmatpush1.msra.mxu0 0.0
    %3935 = vmatprep.subr.mxu0 0.0
    %3936 = vmatpush1.msra.mxu0 0.0
    %3937 = vmatprep.subr.mxu0 0.0
    %3938 = vmatpush1.msra.mxu0 0.0
    %3939 = vmatprep.subr.mxu0 0.0
    %3940 = vmatpush1.msra.mxu0 0.0
    %3941 = vmatprep.subr.mxu0 0.0
    %3942 = vmatpush1.msra.mxu0 0.0
    %3943 = vmatprep.subr.mxu0 0.0
    %3944 = vmatpush1.msra.mxu0 0.0
    %3945 = vmatprep.subr.mxu0 0.0
    %3946 = vmatpush1.msra.mxu0 0.0
    %3947 = vmatprep.subr.mxu0 0.0
    %3948 = vmatpush1.msra.mxu0 0.0
    %3949 = vmatprep.subr.mxu0 0.0
    %3950 = vmatpush1.msra.mxu0 0.0
    %3951 = vmatprep.subr.mxu0 0.0
    %3952 = vmatpush1.msra.mxu0 0.0
    %3953 = vmatprep.subr.mxu0 0.0
    %3954 = vmatpush1.msra.mxu0 0.0
    %3955 = vmatprep.subr.mxu0 0.0
    %3956 = vmatpush1.msra.mxu0 0.0
    %3957 = vmatprep.subr.mxu0 0.0
    %3958 = vmatpush1.msra.mxu0 0.0
    %3959 = vmatprep.subr.mxu0 0.0
    %3960 = vmatpush1.msra.mxu0 0.0
    %3961 = vmatprep.subr.mxu0 0.0
    %3962 = vmatpush1.msra.mxu0 0.0
    %3963 = vmatprep.subr.mxu0 0.0
    %3964 = vmatpush1.msra.mxu0 0.0
    %3965 = vmatprep.subr.mxu0 0.0
    %3966 = vmatpush1.msra.mxu0 0.0
    %3967 = vmatprep.subr.mxu0 0.0
    %3968 = vmatpush1.msra.mxu0 0.0
    %3969 = vmatprep.subr.mxu0 0.0
    %3970 = vmatpush1.msra.mxu0 0.0
    %3971 = vmatprep.subr.mxu0 0.0
    %3972 = vmatpush1.msra.mxu0 0.0
    %3973 = vmatprep.subr.mxu0 0.0
    %3974 = vmatpush1.msra.mxu0 0.0
    %3975 = vmatprep.subr.mxu0 0.0
    %3976 = vmatpush1.msra.mxu0 0.0
    %3977 = vmatprep.subr.mxu0 0.0
    %3978 = vmatpush1.msra.mxu0 0.0
    %3979 = vmatprep.subr.mxu0 0.0
    %3980 = vmatpush1.msra.mxu0 0.0
    %3981 = vmatprep.subr.mxu0 0.0
    %3982 = vmatpush1.msra.mxu0 0.0
    %3983 = vmatprep.subr.mxu0 0.0
    %3984 = vmatpush1.msra.mxu0 0.0
    %3985 = vmatprep.mubr.f32.mxu0 0.0
    %v3986 = vand.u32 %v1099, 4294901760
    %3987 = vmatmul.mubr.f32.gmra.mrb[0].mxu0 %v3986
    %v3988 = vpop.f32.mrb[0].mxu0
    %v3989 = vadd.f32 %v3904, %v3988
    %v3990 = vpop.f32.mrb[0].mxu0
    %3991 = vmatprep.mubr.f32.mxu0 0.0
    %v3992 = vand.u32 %v1102, 4294901760
    %3993 = vmatmul.mubr.f32.gmra.mrb[0].mxu0 %v3992
    %v3994 = vpop.f32.mrb[0].mxu0
    %v3995 = vadd.f32 %v3912, %v3994
    %v3996 = vpop.f32.mrb[0].mxu0
    %3997 = vdwg.mxu0
    %3998 = vmatprep.subr.mxu0 0.0
    %v3999 = vand.u32 %v3060, 4294901760
    %4000 = vmatpush1.msra.mxu0 %v3999
    %4001 = vmatprep.subr.mxu0 0.0
    %v4002 = vand.u32 %v3066, 4294901760
    %4003 = vmatpush1.msra.mxu0 %v4002
    %4004 = vmatprep.subr.mxu0 0.0
    %4005 = vmatpush1.msra.mxu0 0.0
    %4006 = vmatprep.subr.mxu0 0.0
    %4007 = vmatpush1.msra.mxu0 0.0
    %4008 = vmatprep.subr.mxu0 0.0
    %4009 = vmatpush1.msra.mxu0 0.0
    %4010 = vmatprep.subr.mxu0 0.0
    %4011 = vmatpush1.msra.mxu0 0.0
    %4012 = vmatprep.subr.mxu0 0.0
    %4013 = vmatpush1.msra.mxu0 0.0
    %4014 = vmatprep.subr.mxu0 0.0
    %4015 = vmatpush1.msra.mxu0 0.0
    %4016 = vmatprep.subr.mxu0 0.0
    %4017 = vmatpush1.msra.mxu0 0.0
    %4018 = vmatprep.subr.mxu0 0.0
    %4019 = vmatpush1.msra.mxu0 0.0
    %4020 = vmatprep.subr.mxu0 0.0
    %4021 = vmatpush1.msra.mxu0 0.0
    %4022 = vmatprep.subr.mxu0 0.0
    %4023 = vmatpush1.msra.mxu0 0.0
    %4024 = vmatprep.subr.mxu0 0.0
    %4025 = vmatpush1.msra.mxu0 0.0
    %4026 = vmatprep.subr.mxu0 0.0
    %4027 = vmatpush1.msra.mxu0 0.0
    %4028 = vmatprep.subr.mxu0 0.0
    %4029 = vmatpush1.msra.mxu0 0.0
    %4030 = vmatprep.subr.mxu0 0.0
    %4031 = vmatpush1.msra.mxu0 0.0
    %4032 = vmatprep.subr.mxu0 0.0
    %4033 = vmatpush1.msra.mxu0 0.0
    %4034 = vmatprep.subr.mxu0 0.0
    %4035 = vmatpush1.msra.mxu0 0.0
    %4036 = vmatprep.subr.mxu0 0.0
    %4037 = vmatpush1.msra.mxu0 0.0
    %4038 = vmatprep.subr.mxu0 0.0
    %4039 = vmatpush1.msra.mxu0 0.0
    %4040 = vmatprep.subr.mxu0 0.0
    %4041 = vmatpush1.msra.mxu0 0.0
    %4042 = vmatprep.subr.mxu0 0.0
    %4043 = vmatpush1.msra.mxu0 0.0
    %4044 = vmatprep.subr.mxu0 0.0
    %4045 = vmatpush1.msra.mxu0 0.0
    %4046 = vmatprep.subr.mxu0 0.0
    %4047 = vmatpush1.msra.mxu0 0.0
    %4048 = vmatprep.subr.mxu0 0.0
    %4049 = vmatpush1.msra.mxu0 0.0
    %4050 = vmatprep.subr.mxu0 0.0
    %4051 = vmatpush1.msra.mxu0 0.0
    %4052 = vmatprep.subr.mxu0 0.0
    %4053 = vmatpush1.msra.mxu0 0.0
    %4054 = vmatprep.subr.mxu0 0.0
    %4055 = vmatpush1.msra.mxu0 0.0
    %4056 = vmatprep.subr.mxu0 0.0
    %4057 = vmatpush1.msra.mxu0 0.0
    %4058 = vmatprep.subr.mxu0 0.0
    %4059 = vmatpush1.msra.mxu0 0.0
    %4060 = vmatprep.subr.mxu0 0.0
    %4061 = vmatpush1.msra.mxu0 0.0
    %4062 = vmatprep.subr.mxu0 0.0
    %4063 = vmatpush1.msra.mxu0 0.0
    %4064 = vmatprep.mubr.f32.mxu0 0.0
    %v4065 = vand.u32 %v1099, 4294901760
    %4066 = vmatmul.mubr.f32.gmra.mrb[0].mxu0 %v4065
    %v4067 = vpop.f32.mrb[0].mxu0
    %v4068 = vadd.f32 %v3989, %v4067
    %v4069 = vpop.f32.mrb[0].mxu0
    %4070 = vmatprep.mubr.f32.mxu0 0.0
    %v4071 = vand.u32 %v1102, 4294901760
    %4072 = vmatmul.mubr.f32.gmra.mrb[0].mxu0 %v4071
    %v4073 = vpop.f32.mrb[0].mxu0
    %v4074 = vadd.f32 %v3995, %v4073
    %v4075 = vpop.f32.mrb[0].mxu0
    %4076 = vdwg.mxu0
    %4077 = vmatprep.subr.mxu0 0.0
    %v4078 = vand.u32 %v4068, 4294901760
    %4079 = vmatpush1.msra.mxu0 %v4078
    %4080 = vmatprep.subr.mxu0 0.0
    %v4081 = vand.u32 %v4074, 4294901760
    %4082 = vmatpush1.msra.mxu0 %v4081
    %4083 = vmatprep.subr.mxu0 0.0
    %4084 = vmatpush1.msra.mxu0 0.0
    %4085 = vmatprep.subr.mxu0 0.0
    %4086 = vmatpush1.msra.mxu0 0.0
    %4087 = vmatprep.subr.mxu0 0.0
    %4088 = vmatpush1.msra.mxu0 0.0
    %4089 = vmatprep.subr.mxu0 0.0
    %4090 = vmatpush1.msra.mxu0 0.0
    %4091 = vmatprep.subr.mxu0 0.0
    %4092 = vmatpush1.msra.mxu0 0.0
    %4093 = vmatprep.subr.mxu0 0.0
    %4094 = vmatpush1.msra.mxu0 0.0
    %4095 = vmatprep.subr.mxu0 0.0
    %4096 = vmatpush1.msra.mxu0 0.0
    %4097 = vmatprep.subr.mxu0 0.0
    %4098 = vmatpush1.msra.mxu0 0.0
    %4099 = vmatprep.subr.mxu0 0.0
    %4100 = vmatpush1.msra.mxu0 0.0
    %4101 = vmatprep.subr.mxu0 0.0
    %4102 = vmatpush1.msra.mxu0 0.0
    %4103 = vmatprep.subr.mxu0 0.0
    %4104 = vmatpush1.msra.mxu0 0.0
    %4105 = vmatprep.subr.mxu0 0.0
    %4106 = vmatpush1.msra.mxu0 0.0
    %4107 = vmatprep.subr.mxu0 0.0
    %4108 = vmatpush1.msra.mxu0 0.0
    %4109 = vmatprep.subr.mxu0 0.0
    %4110 = vmatpush1.msra.mxu0 0.0
    %4111 = vmatprep.subr.mxu0 0.0
    %4112 = vmatpush1.msra.mxu0 0.0
    %4113 = vmatprep.subr.mxu0 0.0
    %4114 = vmatpush1.msra.mxu0 0.0
    %4115 = vmatprep.subr.mxu0 0.0
    %4116 = vmatpush1.msra.mxu0 0.0
    %4117 = vmatprep.subr.mxu0 0.0
    %4118 = vmatpush1.msra.mxu0 0.0
    %4119 = vmatprep.subr.mxu0 0.0
    %4120 = vmatpush1.msra.mxu0 0.0
    %4121 = vmatprep.subr.mxu0 0.0
    %4122 = vmatpush1.msra.mxu0 0.0
    %4123 = vmatprep.subr.mxu0 0.0
    %4124 = vmatpush1.msra.mxu0 0.0
    %4125 = vmatprep.subr.mxu0 0.0
    %4126 = vmatpush1.msra.mxu0 0.0
    %4127 = vmatprep.subr.mxu0 0.0
    %4128 = vmatpush1.msra.mxu0 0.0
    %4129 = vmatprep.subr.mxu0 0.0
    %4130 = vmatpush1.msra.mxu0 0.0
    %4131 = vmatprep.subr.mxu0 0.0
    %4132 = vmatpush1.msra.mxu0 0.0
    %4133 = vmatprep.subr.mxu0 0.0
    %4134 = vmatpush1.msra.mxu0 0.0
    %4135 = vmatprep.subr.mxu0 0.0
    %4136 = vmatpush1.msra.mxu0 0.0
    %4137 = vmatprep.subr.mxu0 0.0
    %4138 = vmatpush1.msra.mxu0 0.0
    %4139 = vmatprep.subr.mxu0 0.0
    %4140 = vmatpush1.msra.mxu0 0.0
    %4141 = vmatprep.subr.mxu0 0.0
    %4142 = vmatpush1.msra.mxu0 0.0
    %4143 = vmatprep.mubr.f32.mxu0 0.0
    %v4144 = vand.u32 %v1099, 4294901760
    %v4145 = vsub.f32 %v1099, %v4144
    %v4146 = vand.u32 %v4145, 4294901760
    %v4147 = vsub.f32 %v4145, %v4146
    %v4148 = vand.u32 %v4147, 4294901760
    %4149 = vmatmul.mubr.f32.gmra.mrb[0].mxu0 %v4148
    %v4150 = vpop.f32.mrb[0].mxu0
    %v4151 = vadd.f32 0.0, %v4150
    %v4152 = vpop.f32.mrb[0].mxu0
    %4153 = vmatprep.mubr.f32.mxu0 0.0
    %v4154 = vand.u32 %v1102, 4294901760
    %v4155 = vsub.f32 %v1102, %v4154
    %v4156 = vand.u32 %v4155, 4294901760
    %v4157 = vsub.f32 %v4155, %v4156
    %v4158 = vand.u32 %v4157, 4294901760
    %4159 = vmatmul.mubr.f32.gmra.mrb[0].mxu0 %v4158
    %v4160 = vpop.f32.mrb[0].mxu0
    %v4161 = vadd.f32 0.0, %v4160
    %v4162 = vpop.f32.mrb[0].mxu0
    %4163 = vdwg.mxu0
    %4164 = vmatprep.subr.mxu0 0.0
    %v4165 = vand.u32 %v4068, 4294901760
    %v4166 = vsub.f32 %v4068, %v4165
    %v4167 = vand.u32 %v4166, 4294901760
    %v4168 = vsub.f32 %v4166, %v4167
    %v4169 = vand.u32 %v4168, 4294901760
    %4170 = vmatpush1.msra.mxu0 %v4169
    %4171 = vmatprep.subr.mxu0 0.0
    %v4172 = vand.u32 %v4074, 4294901760
    %v4173 = vsub.f32 %v4074, %v4172
    %v4174 = vand.u32 %v4173, 4294901760
    %v4175 = vsub.f32 %v4173, %v4174
    %v4176 = vand.u32 %v4175, 4294901760
    %4177 = vmatpush1.msra.mxu0 %v4176
    %4178 = vmatprep.subr.mxu0 0.0
    %4179 = vmatpush1.msra.mxu0 0.0
    %4180 = vmatprep.subr.mxu0 0.0
    %4181 = vmatpush1.msra.mxu0 0.0
    %4182 = vmatprep.subr.mxu0 0.0
    %4183 = vmatpush1.msra.mxu0 0.0
    %4184 = vmatprep.subr.mxu0 0.0
    %4185 = vmatpush1.msra.mxu0 0.0
    %4186 = vmatprep.subr.mxu0 0.0
    %4187 = vmatpush1.msra.mxu0 0.0
    %4188 = vmatprep.subr.mxu0 0.0
    %4189 = vmatpush1.msra.mxu0 0.0
    %4190 = vmatprep.subr.mxu0 0.0
    %4191 = vmatpush1.msra.mxu0 0.0
    %4192 = vmatprep.subr.mxu0 0.0
    %4193 = vmatpush1.msra.mxu0 0.0
    %4194 = vmatprep.subr.mxu0 0.0
    %4195 = vmatpush1.msra.mxu0 0.0
    %4196 = vmatprep.subr.mxu0 0.0
    %4197 = vmatpush1.msra.mxu0 0.0
    %4198 = vmatprep.subr.mxu0 0.0
    %4199 = vmatpush1.msra.mxu0 0.0
    %4200 = vmatprep.subr.mxu0 0.0
    %4201 = vmatpush1.msra.mxu0 0.0
    %4202 = vmatprep.subr.mxu0 0.0
    %4203 = vmatpush1.msra.mxu0 0.0
    %4204 = vmatprep.subr.mxu0 0.0
    %4205 = vmatpush1.msra.mxu0 0.0
    %4206 = vmatprep.subr.mxu0 0.0
    %4207 = vmatpush1.msra.mxu0 0.0
    %4208 = vmatprep.subr.mxu0 0.0
    %4209 = vmatpush1.msra.mxu0 0.0
    %4210 = vmatprep.subr.mxu0 0.0
    %4211 = vmatpush1.msra.mxu0 0.0
    %4212 = vmatprep.subr.mxu0 0.0
    %4213 = vmatpush1.msra.mxu0 0.0
    %4214 = vmatprep.subr.mxu0 0.0
    %4215 = vmatpush1.msra.mxu0 0.0
    %4216 = vmatprep.subr.mxu0 0.0
    %4217 = vmatpush1.msra.mxu0 0.0
    %4218 = vmatprep.subr.mxu0 0.0
    %4219 = vmatpush1.msra.mxu0 0.0
    %4220 = vmatprep.subr.mxu0 0.0
    %4221 = vmatpush1.msra.mxu0 0.0
    %4222 = vmatprep.subr.mxu0 0.0
    %4223 = vmatpush1.msra.mxu0 0.0
    %4224 = vmatprep.subr.mxu0 0.0
    %4225 = vmatpush1.msra.mxu0 0.0
    %4226 = vmatprep.subr.mxu0 0.0
    %4227 = vmatpush1.msra.mxu0 0.0
    %4228 = vmatprep.subr.mxu0 0.0
    %4229 = vmatpush1.msra.mxu0 0.0
    %4230 = vmatprep.subr.mxu0 0.0
    %4231 = vmatpush1.msra.mxu0 0.0
    %4232 = vmatprep.subr.mxu0 0.0
    %4233 = vmatpush1.msra.mxu0 0.0
    %4234 = vmatprep.subr.mxu0 0.0
    %4235 = vmatpush1.msra.mxu0 0.0
    %4236 = vmatprep.subr.mxu0 0.0
    %4237 = vmatpush1.msra.mxu0 0.0
    %4238 = vmatprep.mubr.f32.mxu0 0.0
    %v4239 = vand.u32 %v1099, 4294901760
    %4240 = vmatmul.mubr.f32.gmra.mrb[0].mxu0 %v4239
    %v4241 = vpop.f32.mrb[0].mxu0
    %v4242 = vadd.f32 %v4151, %v4241
    %v4243 = vpop.f32.mrb[0].mxu0
    %4244 = vmatprep.mubr.f32.mxu0 0.0
    %v4245 = vand.u32 %v1102, 4294901760
    %4246 = vmatmul.mubr.f32.gmra.mrb[0].mxu0 %v4245
    %v4247 = vpop.f32.mrb[0].mxu0
    %v4248 = vadd.f32 %v4161, %v4247
    %v4249 = vpop.f32.mrb[0].mxu0
    %4250 = vdwg.mxu0
    %4251 = vmatprep.subr.mxu0 0.0
    %v4252 = vand.u32 %v4068, 4294901760
    %v4253 = vsub.f32 %v4068, %v4252
    %4254 = vmatpush1.msra.mxu0 %v4253
    %4255 = vmatprep.subr.mxu0 0.0
    %v4256 = vand.u32 %v4074, 4294901760
    %v4257 = vsub.f32 %v4074, %v4256
    %4258 = vmatpush1.msra.mxu0 %v4257
    %4259 = vmatprep.subr.mxu0 0.0
    %4260 = vmatpush1.msra.mxu0 0.0
    %4261 = vmatprep.subr.mxu0 0.0
    %4262 = vmatpush1.msra.mxu0 0.0
    %4263 = vmatprep.subr.mxu0 0.0
    %4264 = vmatpush1.msra.mxu0 0.0
    %4265 = vmatprep.subr.mxu0 0.0
    %4266 = vmatpush1.msra.mxu0 0.0
    %4267 = vmatprep.subr.mxu0 0.0
    %4268 = vmatpush1.msra.mxu0 0.0
    %4269 = vmatprep.subr.mxu0 0.0
    %4270 = vmatpush1.msra.mxu0 0.0
    %4271 = vmatprep.subr.mxu0 0.0
    %4272 = vmatpush1.msra.mxu0 0.0
    %4273 = vmatprep.subr.mxu0 0.0
    %4274 = vmatpush1.msra.mxu0 0.0
    %4275 = vmatprep.subr.mxu0 0.0
    %4276 = vmatpush1.msra.mxu0 0.0
    %4277 = vmatprep.subr.mxu0 0.0
    %4278 = vmatpush1.msra.mxu0 0.0
    %4279 = vmatprep.subr.mxu0 0.0
    %4280 = vmatpush1.msra.mxu0 0.0
    %4281 = vmatprep.subr.mxu0 0.0
    %4282 = vmatpush1.msra.mxu0 0.0
    %4283 = vmatprep.subr.mxu0 0.0
    %4284 = vmatpush1.msra.mxu0 0.0
    %4285 = vmatprep.subr.mxu0 0.0
    %4286 = vmatpush1.msra.mxu0 0.0
    %4287 = vmatprep.subr.mxu0 0.0
    %4288 = vmatpush1.msra.mxu0 0.0
    %4289 = vmatprep.subr.mxu0 0.0
    %4290 = vmatpush1.msra.mxu0 0.0
    %4291 = vmatprep.subr.mxu0 0.0
    %4292 = vmatpush1.msra.mxu0 0.0
    %4293 = vmatprep.subr.mxu0 0.0
    %4294 = vmatpush1.msra.mxu0 0.0
    %4295 = vmatprep.subr.mxu0 0.0
    %4296 = vmatpush1.msra.mxu0 0.0
    %4297 = vmatprep.subr.mxu0 0.0
    %4298 = vmatpush1.msra.mxu0 0.0
    %4299 = vmatprep.subr.mxu0 0.0
    %4300 = vmatpush1.msra.mxu0 0.0
    %4301 = vmatprep.subr.mxu0 0.0
    %4302 = vmatpush1.msra.mxu0 0.0
    %4303 = vmatprep.subr.mxu0 0.0
    %4304 = vmatpush1.msra.mxu0 0.0
    %4305 = vmatprep.subr.mxu0 0.0
    %4306 = vmatpush1.msra.mxu0 0.0
    %4307 = vmatprep.subr.mxu0 0.0
    %4308 = vmatpush1.msra.mxu0 0.0
    %4309 = vmatprep.subr.mxu0 0.0
    %4310 = vmatpush1.msra.mxu0 0.0
    %4311 = vmatprep.subr.mxu0 0.0
    %4312 = vmatpush1.msra.mxu0 0.0
    %4313 = vmatprep.subr.mxu0 0.0
    %4314 = vmatpush1.msra.mxu0 0.0
    %4315 = vmatprep.subr.mxu0 0.0
    %4316 = vmatpush1.msra.mxu0 0.0
    %4317 = vmatprep.subr.mxu0 0.0
    %4318 = vmatpush1.msra.mxu0 0.0
    %4319 = vmatprep.mubr.f32.mxu0 0.0
    %v4320 = vand.u32 %v1099, 4294901760
    %v4321 = vsub.f32 %v1099, %v4320
    %4322 = vmatmul.mubr.f32.gmra.mrb[0].mxu0 %v4321
    %v4323 = vpop.f32.mrb[0].mxu0
    %v4324 = vadd.f32 %v4242, %v4323
    %v4325 = vpop.f32.mrb[0].mxu0
    %4326 = vmatprep.mubr.f32.mxu0 0.0
    %v4327 = vand.u32 %v1102, 4294901760
    %v4328 = vsub.f32 %v1102, %v4327
    %4329 = vmatmul.mubr.f32.gmra.mrb[0].mxu0 %v4328
    %v4330 = vpop.f32.mrb[0].mxu0
    %v4331 = vadd.f32 %v4248, %v4330
    %v4332 = vpop.f32.mrb[0].mxu0
    %4333 = vdwg.mxu0
    %4334 = vmatprep.subr.mxu0 0.0
    %v4335 = vand.u32 %v4068, 4294901760
    %4336 = vmatpush1.msra.mxu0 %v4335
    %4337 = vmatprep.subr.mxu0 0.0
    %v4338 = vand.u32 %v4074, 4294901760
    %4339 = vmatpush1.msra.mxu0 %v4338
    %4340 = vmatprep.subr.mxu0 0.0
    %4341 = vmatpush1.msra.mxu0 0.0
    %4342 = vmatprep.subr.mxu0 0.0
    %4343 = vmatpush1.msra.mxu0 0.0
    %4344 = vmatprep.subr.mxu0 0.0
    %4345 = vmatpush1.msra.mxu0 0.0
    %4346 = vmatprep.subr.mxu0 0.0
    %4347 = vmatpush1.msra.mxu0 0.0
    %4348 = vmatprep.subr.mxu0 0.0
    %4349 = vmatpush1.msra.mxu0 0.0
    %4350 = vmatprep.subr.mxu0 0.0
    %4351 = vmatpush1.msra.mxu0 0.0
    %4352 = vmatprep.subr.mxu0 0.0
    %4353 = vmatpush1.msra.mxu0 0.0
    %4354 = vmatprep.subr.mxu0 0.0
    %4355 = vmatpush1.msra.mxu0 0.0
    %4356 = vmatprep.subr.mxu0 0.0
    %4357 = vmatpush1.msra.mxu0 0.0
    %4358 = vmatprep.subr.mxu0 0.0
    %4359 = vmatpush1.msra.mxu0 0.0
    %4360 = vmatprep.subr.mxu0 0.0
    %4361 = vmatpush1.msra.mxu0 0.0
    %4362 = vmatprep.subr.mxu0 0.0
    %4363 = vmatpush1.msra.mxu0 0.0
    %4364 = vmatprep.subr.mxu0 0.0
    %4365 = vmatpush1.msra.mxu0 0.0
    %4366 = vmatprep.subr.mxu0 0.0
    %4367 = vmatpush1.msra.mxu0 0.0
    %4368 = vmatprep.subr.mxu0 0.0
    %4369 = vmatpush1.msra.mxu0 0.0
    %4370 = vmatprep.subr.mxu0 0.0
    %4371 = vmatpush1.msra.mxu0 0.0
    %4372 = vmatprep.subr.mxu0 0.0
    %4373 = vmatpush1.msra.mxu0 0.0
    %4374 = vmatprep.subr.mxu0 0.0
    %4375 = vmatpush1.msra.mxu0 0.0
    %4376 = vmatprep.subr.mxu0 0.0
    %4377 = vmatpush1.msra.mxu0 0.0
    %4378 = vmatprep.subr.mxu0 0.0
    %4379 = vmatpush1.msra.mxu0 0.0
    %4380 = vmatprep.subr.mxu0 0.0
    %4381 = vmatpush1.msra.mxu0 0.0
    %4382 = vmatprep.subr.mxu0 0.0
    %4383 = vmatpush1.msra.mxu0 0.0
    %4384 = vmatprep.subr.mxu0 0.0
    %4385 = vmatpush1.msra.mxu0 0.0
    %4386 = vmatprep.subr.mxu0 0.0
    %4387 = vmatpush1.msra.mxu0 0.0
    %4388 = vmatprep.subr.mxu0 0.0
    %4389 = vmatpush1.msra.mxu0 0.0
    %4390 = vmatprep.subr.mxu0 0.0
    %4391 = vmatpush1.msra.mxu0 0.0
    %4392 = vmatprep.subr.mxu0 0.0
    %4393 = vmatpush1.msra.mxu0 0.0
    %4394 = vmatprep.subr.mxu0 0.0
    %4395 = vmatpush1.msra.mxu0 0.0
    %4396 = vmatprep.subr.mxu0 0.0
    %4397 = vmatpush1.msra.mxu0 0.0
    %4398 = vmatprep.subr.mxu0 0.0
    %4399 = vmatpush1.msra.mxu0 0.0
    %4400 = vmatprep.mubr.f32.mxu0 0.0
    %v4401 = vand.u32 %v1099, 4294901760
    %v4402 = vsub.f32 %v1099, %v4401
    %v4403 = vand.u32 %v4402, 4294901760
    %4404 = vmatmul.mubr.f32.gmra.mrb[0].mxu0 %v4403
    %v4405 = vpop.f32.mrb[0].mxu0
    %v4406 = vadd.f32 %v4324, %v4405
    %v4407 = vpop.f32.mrb[0].mxu0
    %4408 = vmatprep.mubr.f32.mxu0 0.0
    %v4409 = vand.u32 %v1102, 4294901760
    %v4410 = vsub.f32 %v1102, %v4409
    %v4411 = vand.u32 %v4410, 4294901760
    %4412 = vmatmul.mubr.f32.gmra.mrb[0].mxu0 %v4411
    %v4413 = vpop.f32.mrb[0].mxu0
    %v4414 = vadd.f32 %v4331, %v4413
    %v4415 = vpop.f32.mrb[0].mxu0
    %4416 = vdwg.mxu0
    %4417 = vmatprep.subr.mxu0 0.0
    %v4418 = vand.u32 %v4068, 4294901760
    %v4419 = vsub.f32 %v4068, %v4418
    %v4420 = vand.u32 %v4419, 4294901760
    %4421 = vmatpush1.msra.mxu0 %v4420
    %4422 = vmatprep.subr.mxu0 0.0
    %v4423 = vand.u32 %v4074, 4294901760
    %v4424 = vsub.f32 %v4074, %v4423
    %v4425 = vand.u32 %v4424, 4294901760
    %4426 = vmatpush1.msra.mxu0 %v4425
    %4427 = vmatprep.subr.mxu0 0.0
    %4428 = vmatpush1.msra.mxu0 0.0
    %4429 = vmatprep.subr.mxu0 0.0
    %4430 = vmatpush1.msra.mxu0 0.0
    %4431 = vmatprep.subr.mxu0 0.0
    %4432 = vmatpush1.msra.mxu0 0.0
    %4433 = vmatprep.subr.mxu0 0.0
    %4434 = vmatpush1.msra.mxu0 0.0
    %4435 = vmatprep.subr.mxu0 0.0
    %4436 = vmatpush1.msra.mxu0 0.0
    %4437 = vmatprep.subr.mxu0 0.0
    %4438 = vmatpush1.msra.mxu0 0.0
    %4439 = vmatprep.subr.mxu0 0.0
    %4440 = vmatpush1.msra.mxu0 0.0
    %4441 = vmatprep.subr.mxu0 0.0
    %4442 = vmatpush1.msra.mxu0 0.0
    %4443 = vmatprep.subr.mxu0 0.0
    %4444 = vmatpush1.msra.mxu0 0.0
    %4445 = vmatprep.subr.mxu0 0.0
    %4446 = vmatpush1.msra.mxu0 0.0
    %4447 = vmatprep.subr.mxu0 0.0
    %4448 = vmatpush1.msra.mxu0 0.0
    %4449 = vmatprep.subr.mxu0 0.0
    %4450 = vmatpush1.msra.mxu0 0.0
    %4451 = vmatprep.subr.mxu0 0.0
    %4452 = vmatpush1.msra.mxu0 0.0
    %4453 = vmatprep.subr.mxu0 0.0
    %4454 = vmatpush1.msra.mxu0 0.0
    %4455 = vmatprep.subr.mxu0 0.0
    %4456 = vmatpush1.msra.mxu0 0.0
    %4457 = vmatprep.subr.mxu0 0.0
    %4458 = vmatpush1.msra.mxu0 0.0
    %4459 = vmatprep.subr.mxu0 0.0
    %4460 = vmatpush1.msra.mxu0 0.0
    %4461 = vmatprep.subr.mxu0 0.0
    %4462 = vmatpush1.msra.mxu0 0.0
    %4463 = vmatprep.subr.mxu0 0.0
    %4464 = vmatpush1.msra.mxu0 0.0
    %4465 = vmatprep.subr.mxu0 0.0
    %4466 = vmatpush1.msra.mxu0 0.0
    %4467 = vmatprep.subr.mxu0 0.0
    %4468 = vmatpush1.msra.mxu0 0.0
    %4469 = vmatprep.subr.mxu0 0.0
    %4470 = vmatpush1.msra.mxu0 0.0
    %4471 = vmatprep.subr.mxu0 0.0
    %4472 = vmatpush1.msra.mxu0 0.0
    %4473 = vmatprep.subr.mxu0 0.0
    %4474 = vmatpush1.msra.mxu0 0.0
    %4475 = vmatprep.subr.mxu0 0.0
    %4476 = vmatpush1.msra.mxu0 0.0
    %4477 = vmatprep.subr.mxu0 0.0
    %4478 = vmatpush1.msra.mxu0 0.0
    %4479 = vmatprep.subr.mxu0 0.0
    %4480 = vmatpush1.msra.mxu0 0.0
    %4481 = vmatprep.subr.mxu0 0.0
    %4482 = vmatpush1.msra.mxu0 0.0
    %4483 = vmatprep.subr.mxu0 0.0
    %4484 = vmatpush1.msra.mxu0 0.0
    %4485 = vmatprep.subr.mxu0 0.0
    %4486 = vmatpush1.msra.mxu0 0.0
    %4487 = vmatprep.mubr.f32.mxu0 0.0
    %v4488 = vand.u32 %v1099, 4294901760
    %4489 = vmatmul.mubr.f32.gmra.mrb[0].mxu0 %v4488
    %v4490 = vpop.f32.mrb[0].mxu0
    %v4491 = vadd.f32 %v4406, %v4490
    %v4492 = vpop.f32.mrb[0].mxu0
    %4493 = vmatprep.mubr.f32.mxu0 0.0
    %v4494 = vand.u32 %v1102, 4294901760
    %4495 = vmatmul.mubr.f32.gmra.mrb[0].mxu0 %v4494
    %v4496 = vpop.f32.mrb[0].mxu0
    %v4497 = vadd.f32 %v4414, %v4496
    %v4498 = vpop.f32.mrb[0].mxu0
    %4499 = vdwg.mxu0
    %4500 = vmatprep.subr.mxu0 0.0
    %v4501 = vand.u32 %v4068, 4294901760
    %4502 = vmatpush1.msra.mxu0 %v4501
    %4503 = vmatprep.subr.mxu0 0.0
    %v4504 = vand.u32 %v4074, 4294901760
    %4505 = vmatpush1.msra.mxu0 %v4504
    %4506 = vmatprep.subr.mxu0 0.0
    %4507 = vmatpush1.msra.mxu0 0.0
    %4508 = vmatprep.subr.mxu0 0.0
    %4509 = vmatpush1.msra.mxu0 0.0
    %4510 = vmatprep.subr.mxu0 0.0
    %4511 = vmatpush1.msra.mxu0 0.0
    %4512 = vmatprep.subr.mxu0 0.0
    %4513 = vmatpush1.msra.mxu0 0.0
    %4514 = vmatprep.subr.mxu0 0.0
    %4515 = vmatpush1.msra.mxu0 0.0
    %4516 = vmatprep.subr.mxu0 0.0
    %4517 = vmatpush1.msra.mxu0 0.0
    %4518 = vmatprep.subr.mxu0 0.0
    %4519 = vmatpush1.msra.mxu0 0.0
    %4520 = vmatprep.subr.mxu0 0.0
    %4521 = vmatpush1.msra.mxu0 0.0
    %4522 = vmatprep.subr.mxu0 0.0
    %4523 = vmatpush1.msra.mxu0 0.0
    %4524 = vmatprep.subr.mxu0 0.0
    %4525 = vmatpush1.msra.mxu0 0.0
    %4526 = vmatprep.subr.mxu0 0.0
    %4527 = vmatpush1.msra.mxu0 0.0
    %4528 = vmatprep.subr.mxu0 0.0
    %4529 = vmatpush1.msra.mxu0 0.0
    %4530 = vmatprep.subr.mxu0 0.0
    %4531 = vmatpush1.msra.mxu0 0.0
    %4532 = vmatprep.subr.mxu0 0.0
    %4533 = vmatpush1.msra.mxu0 0.0
    %4534 = vmatprep.subr.mxu0 0.0
    %4535 = vmatpush1.msra.mxu0 0.0
    %4536 = vmatprep.subr.mxu0 0.0
    %4537 = vmatpush1.msra.mxu0 0.0
    %4538 = vmatprep.subr.mxu0 0.0
    %4539 = vmatpush1.msra.mxu0 0.0
    %4540 = vmatprep.subr.mxu0 0.0
    %4541 = vmatpush1.msra.mxu0 0.0
    %4542 = vmatprep.subr.mxu0 0.0
    %4543 = vmatpush1.msra.mxu0 0.0
    %4544 = vmatprep.subr.mxu0 0.0
    %4545 = vmatpush1.msra.mxu0 0.0
    %4546 = vmatprep.subr.mxu0 0.0
    %4547 = vmatpush1.msra.mxu0 0.0
    %4548 = vmatprep.subr.mxu0 0.0
    %4549 = vmatpush1.msra.mxu0 0.0
    %4550 = vmatprep.subr.mxu0 0.0
    %4551 = vmatpush1.msra.mxu0 0.0
    %4552 = vmatprep.subr.mxu0 0.0
    %4553 = vmatpush1.msra.mxu0 0.0
    %4554 = vmatprep.subr.mxu0 0.0
    %4555 = vmatpush1.msra.mxu0 0.0
    %4556 = vmatprep.subr.mxu0 0.0
    %4557 = vmatpush1.msra.mxu0 0.0
    %4558 = vmatprep.subr.mxu0 0.0
    %4559 = vmatpush1.msra.mxu0 0.0
    %4560 = vmatprep.subr.mxu0 0.0
    %4561 = vmatpush1.msra.mxu0 0.0
    %4562 = vmatprep.subr.mxu0 0.0
    %4563 = vmatpush1.msra.mxu0 0.0
    %4564 = vmatprep.subr.mxu0 0.0
    %4565 = vmatpush1.msra.mxu0 0.0
    %4566 = vmatprep.mubr.f32.mxu0 0.0
    %v4567 = vand.u32 %v1099, 4294901760
    %4568 = vmatmul.mubr.f32.gmra.mrb[0].mxu0 %v4567
    %v4569 = vpop.f32.mrb[0].mxu0
    %v4570 = vadd.f32 %v4491, %v4569
    %v4571 = vpop.f32.mrb[0].mxu0
    %4572 = vmatprep.mubr.f32.mxu0 0.0
    %v4573 = vand.u32 %v1102, 4294901760
    %4574 = vmatmul.mubr.f32.gmra.mrb[0].mxu0 %v4573
    %v4575 = vpop.f32.mrb[0].mxu0
    %v4576 = vadd.f32 %v4497, %v4575
    %v4577 = vpop.f32.mrb[0].mxu0
    %4578 = vdwg.mxu0
    %v4579 = vmul.f32 %v4570, 2.0
    %v4580 = vmul.f32 %v4576, 2.0
    %v4581 = vsub.f32 %v4579, %v3060
    %v4582 = vsub.f32 %v4580, %v3066
    %4585 = vrot.lane.b32.xlu0 %v2565, 120
    %v4586 = vpop.permute.xlu0 %4585
    %4587 = vrot.lane.b32.xlu0 %v2566, 120
    %v4588 = vpop.permute.xlu0 %4587
    %v4591 = vld [vmem:[#allocation7] sm:$0xf]
    %v4592 = vpack.c.bf16 %v2566, %v2565
    %v4593 = vpack.c.bf16 %v4588, %v4586
    %v4595 = vsel %vm2564, %v4592, 0
    %v4598 = vsel %vm2564, %v4593, 0
    %vm4600 = vcmask 1043456
    %v4602 = vsel %vm4600, %v4591, 0
    %4604 = vmatprep.subr.bf16.mxu0 0
    %4605 = vmatpush1.bf16.msra.mxu0 %v4602
    %4606 = vmatprep.subr.bf16.mxu0 0
    %4607 = vmatpush1.bf16.msra.mxu0 0
    %4608 = vmatprep.subr.bf16.mxu0 0
    %4609 = vmatpush1.bf16.msra.mxu0 0
    %4610 = vmatprep.subr.bf16.mxu0 0
    %4611 = vmatpush1.bf16.msra.mxu0 0
    %4612 = vmatprep.subr.bf16.mxu0 0
    %4613 = vmatpush1.bf16.msra.mxu0 0
    %4614 = vmatprep.subr.bf16.mxu0 0
    %4615 = vmatpush1.bf16.msra.mxu0 0
    %4616 = vmatprep.subr.bf16.mxu0 0
    %4617 = vmatpush1.bf16.msra.mxu0 0
    %4618 = vmatprep.subr.bf16.mxu0 0
    %4619 = vmatpush1.bf16.msra.mxu0 0
    %4620 = vmatprep.subr.bf16.mxu0 0
    %4621 = vmatpush1.bf16.msra.mxu0 0
    %4622 = vmatprep.subr.bf16.mxu0 0
    %4623 = vmatpush1.bf16.msra.mxu0 0
    %4624 = vmatprep.subr.bf16.mxu0 0
    %4625 = vmatpush1.bf16.msra.mxu0 0
    %4626 = vmatprep.subr.bf16.mxu0 0
    %4627 = vmatpush1.bf16.msra.mxu0 0
    %4628 = vmatprep.subr.bf16.mxu0 0
    %4629 = vmatpush1.bf16.msra.mxu0 0
    %4630 = vmatprep.subr.bf16.mxu0 0
    %4631 = vmatpush1.bf16.msra.mxu0 0
    %4632 = vmatprep.subr.bf16.mxu0 0
    %4633 = vmatpush1.bf16.msra.mxu0 0
    %4634 = vmatprep.subr.bf16.mxu0 0
    %4635 = vmatpush1.bf16.msra.mxu0 0
    %4636 = vmatprep.mubr.bf16.mxu0 0
    %4637 = vmatmul.mubr.bf16.gmra.mrb[0].mxu0 %v4595
    %v4638 = vpop.f32.mrb[0].mxu0
    %v4639 = vadd.f32 0.0, %v4638
    %v4640 = vpop.f32.mrb[0].mxu0
    %v4641 = vpop.f32.mrb[0].mxu0
    %v4642 = vadd.f32 0.0, %v4641
    %v4643 = vpop.f32.mrb[0].mxu0
    %4644 = vmatprep.mubr.bf16.mxu0 0
    %4645 = vmatmul.mubr.bf16.gmra.mrb[0].mxu0 %v4598
    %v4646 = vpop.f32.mrb[0].mxu0
    %v4647 = vadd.f32 0.0, %v4646
    %v4648 = vpop.f32.mrb[0].mxu0
    %v4649 = vpop.f32.mrb[0].mxu0
    %v4650 = vadd.f32 0.0, %v4649
    %v4651 = vpop.f32.mrb[0].mxu0
    %4652 = vdwg.mxu0
    %4657 = vrot.lane.b32.xlu0 %v4639, 16
    %v4658 = vpop.permute.xlu0 %4657
    %4659 = vrot.lane.b32.xlu0 %v4642, 16
    %v4660 = vpop.permute.xlu0 %4659
    %4661 = vrot.lane.b32.xlu0 %v4647, 16
    %v4662 = vpop.permute.xlu0 %4661
    %4663 = vrot.lane.b32.xlu0 %v4650, 16
    %v4664 = vpop.permute.xlu0 %4663
    %v4669 = vadd.f32 %v2512, %v4658
    %v4670 = vadd.f32 %v2513, %v4660
    %v4671 = vadd.f32 %v2514, %v4662
    %v4672 = vadd.f32 %v2515, %v4664
    %4675 = vrot.lane.b32.xlu0 %v3060, 120
    %v4676 = vpop.permute.xlu0 %4675
    %4677 = vrot.lane.b32.xlu0 %v3066, 120
    %v4678 = vpop.permute.xlu0 %4677
    %s4681 = scalar_lea.vmem [#allocation7], 4
    %v4682 = vld [vmem:[%s4681] sm:$0xf]
    %v4683 = vpack.c.bf16 %v3066, %v3060
    %v4684 = vpack.c.bf16 %v4678, %v4676
    %v4686 = vsel %vm2564, %v4683, 0
    %v4689 = vsel %vm2564, %v4684, 0
    %v4692 = vsel %vm4600, %v4682, 0
    %4694 = vmatprep.subr.bf16.mxu0 0
    %4695 = vmatpush1.bf16.msra.mxu0 %v4692
    %4696 = vmatprep.subr.bf16.mxu0 0
    %4697 = vmatpush1.bf16.msra.mxu0 0
    %4698 = vmatprep.subr.bf16.mxu0 0
    %4699 = vmatpush1.bf16.msra.mxu0 0
    %4700 = vmatprep.subr.bf16.mxu0 0
    %4701 = vmatpush1.bf16.msra.mxu0 0
    %4702 = vmatprep.subr.bf16.mxu0 0
    %4703 = vmatpush1.bf16.msra.mxu0 0
    %4704 = vmatprep.subr.bf16.mxu0 0
    %4705 = vmatpush1.bf16.msra.mxu0 0
    %4706 = vmatprep.subr.bf16.mxu0 0
    %4707 = vmatpush1.bf16.msra.mxu0 0
    %4708 = vmatprep.subr.bf16.mxu0 0
    %4709 = vmatpush1.bf16.msra.mxu0 0
    %4710 = vmatprep.subr.bf16.mxu0 0
    %4711 = vmatpush1.bf16.msra.mxu0 0
    %4712 = vmatprep.subr.bf16.mxu0 0
    %4713 = vmatpush1.bf16.msra.mxu0 0
    %4714 = vmatprep.subr.bf16.mxu0 0
    %4715 = vmatpush1.bf16.msra.mxu0 0
    %4716 = vmatprep.subr.bf16.mxu0 0
    %4717 = vmatpush1.bf16.msra.mxu0 0
    %4718 = vmatprep.subr.bf16.mxu0 0
    %4719 = vmatpush1.bf16.msra.mxu0 0
    %4720 = vmatprep.subr.bf16.mxu0 0
    %4721 = vmatpush1.bf16.msra.mxu0 0
    %4722 = vmatprep.subr.bf16.mxu0 0
    %4723 = vmatpush1.bf16.msra.mxu0 0
    %4724 = vmatprep.subr.bf16.mxu0 0
    %4725 = vmatpush1.bf16.msra.mxu0 0
    %4726 = vmatprep.mubr.bf16.mxu0 0
    %4727 = vmatmul.mubr.bf16.gmra.mrb[0].mxu0 %v4686
    %v4728 = vpop.f32.mrb[0].mxu0
    %v4729 = vadd.f32 0.0, %v4728
    %v4730 = vpop.f32.mrb[0].mxu0
    %v4731 = vpop.f32.mrb[0].mxu0
    %v4732 = vadd.f32 0.0, %v4731
    %v4733 = vpop.f32.mrb[0].mxu0
    %4734 = vmatprep.mubr.bf16.mxu0 0
    %4735 = vmatmul.mubr.bf16.gmra.mrb[0].mxu0 %v4689
    %v4736 = vpop.f32.mrb[0].mxu0
    %v4737 = vadd.f32 0.0, %v4736
    %v4738 = vpop.f32.mrb[0].mxu0
    %v4739 = vpop.f32.mrb[0].mxu0
    %v4740 = vadd.f32 0.0, %v4739
    %v4741 = vpop.f32.mrb[0].mxu0
    %4742 = vdwg.mxu0
    %4747 = vrot.lane.b32.xlu0 %v4729, 16
    %v4748 = vpop.permute.xlu0 %4747
    %4749 = vrot.lane.b32.xlu0 %v4732, 16
    %v4750 = vpop.permute.xlu0 %4749
    %4751 = vrot.lane.b32.xlu0 %v4737, 16
    %v4752 = vpop.permute.xlu0 %4751
    %4753 = vrot.lane.b32.xlu0 %v4740, 16
    %v4754 = vpop.permute.xlu0 %4753
    %v4759 = vadd.f32 %v4669, %v4748
    %v4760 = vadd.f32 %v4670, %v4750
    %v4761 = vadd.f32 %v4671, %v4752
    %v4762 = vadd.f32 %v4672, %v4754
    %4765 = vrot.lane.b32.xlu0 %v3573, 120
    %v4766 = vpop.permute.xlu0 %4765
    %4767 = vrot.lane.b32.xlu0 %v3574, 120
    %v4768 = vpop.permute.xlu0 %4767
    %s4771 = scalar_lea.vmem [#allocation7], 8
    %v4772 = vld [vmem:[%s4771] sm:$0xf]
    %v4773 = vpack.c.bf16 %v3574, %v3573
    %v4774 = vpack.c.bf16 %v4768, %v4766
    %v4776 = vsel %vm2564, %v4773, 0
    %v4779 = vsel %vm2564, %v4774, 0
    %v4782 = vsel %vm4600, %v4772, 0
    %4784 = vmatprep.subr.bf16.mxu0 0
    %4785 = vmatpush1.bf16.msra.mxu0 %v4782
    %4786 = vmatprep.subr.bf16.mxu0 0
    %4787 = vmatpush1.bf16.msra.mxu0 0
    %4788 = vmatprep.subr.bf16.mxu0 0
    %4789 = vmatpush1.bf16.msra.mxu0 0
    %4790 = vmatprep.subr.bf16.mxu0 0
    %4791 = vmatpush1.bf16.msra.mxu0 0
    %4792 = vmatprep.subr.bf16.mxu0 0
    %4793 = vmatpush1.bf16.msra.mxu0 0
    %4794 = vmatprep.subr.bf16.mxu0 0
    %4795 = vmatpush1.bf16.msra.mxu0 0
    %4796 = vmatprep.subr.bf16.mxu0 0
    %4797 = vmatpush1.bf16.msra.mxu0 0
    %4798 = vmatprep.subr.bf16.mxu0 0
    %4799 = vmatpush1.bf16.msra.mxu0 0
    %4800 = vmatprep.subr.bf16.mxu0 0
    %4801 = vmatpush1.bf16.msra.mxu0 0
    %4802 = vmatprep.subr.bf16.mxu0 0
    %4803 = vmatpush1.bf16.msra.mxu0 0
    %4804 = vmatprep.subr.bf16.mxu0 0
    %4805 = vmatpush1.bf16.msra.mxu0 0
    %4806 = vmatprep.subr.bf16.mxu0 0
    %4807 = vmatpush1.bf16.msra.mxu0 0
    %4808 = vmatprep.subr.bf16.mxu0 0
    %4809 = vmatpush1.bf16.msra.mxu0 0
    %4810 = vmatprep.subr.bf16.mxu0 0
    %4811 = vmatpush1.bf16.msra.mxu0 0
    %4812 = vmatprep.subr.bf16.mxu0 0
    %4813 = vmatpush1.bf16.msra.mxu0 0
    %4814 = vmatprep.subr.bf16.mxu0 0
    %4815 = vmatpush1.bf16.msra.mxu0 0
    %4816 = vmatprep.mubr.bf16.mxu0 0
    %4817 = vmatmul.mubr.bf16.gmra.mrb[0].mxu0 %v4776
    %v4818 = vpop.f32.mrb[0].mxu0
    %v4819 = vadd.f32 0.0, %v4818
    %v4820 = vpop.f32.mrb[0].mxu0
    %v4821 = vpop.f32.mrb[0].mxu0
    %v4822 = vadd.f32 0.0, %v4821
    %v4823 = vpop.f32.mrb[0].mxu0
    %4824 = vmatprep.mubr.bf16.mxu0 0
    %4825 = vmatmul.mubr.bf16.gmra.mrb[0].mxu0 %v4779
    %v4826 = vpop.f32.mrb[0].mxu0
    %v4827 = vadd.f32 0.0, %v4826
    %v4828 = vpop.f32.mrb[0].mxu0
    %v4829 = vpop.f32.mrb[0].mxu0
    %v4830 = vadd.f32 0.0, %v4829
    %v4831 = vpop.f32.mrb[0].mxu0
    %4832 = vdwg.mxu0
    %4837 = vrot.lane.b32.xlu0 %v4819, 16
    %v4838 = vpop.permute.xlu0 %4837
    %4839 = vrot.lane.b32.xlu0 %v4822, 16
    %v4840 = vpop.permute.xlu0 %4839
    %4841 = vrot.lane.b32.xlu0 %v4827, 16
    %v4842 = vpop.permute.xlu0 %4841
    %4843 = vrot.lane.b32.xlu0 %v4830, 16
    %v4844 = vpop.permute.xlu0 %4843
    %v4849 = vadd.f32 %v4759, %v4838
    %v4850 = vadd.f32 %v4760, %v4840
    %v4851 = vadd.f32 %v4761, %v4842
    %v4852 = vadd.f32 %v4762, %v4844
    %4855 = vrot.lane.b32.xlu0 %v4068, 120
    %v4856 = vpop.permute.xlu0 %4855
    %4857 = vrot.lane.b32.xlu0 %v4074, 120
    %v4858 = vpop.permute.xlu0 %4857
    %s4861 = scalar_lea.vmem [#allocation7], 12
    %v4862 = vld [vmem:[%s4861] sm:$0xf]
    %v4863 = vpack.c.bf16 %v4074, %v4068
    %v4864 = vpack.c.bf16 %v4858, %v4856
    %v4866 = vsel %vm2564, %v4863, 0
    %v4869 = vsel %vm2564, %v4864, 0
    %v4872 = vsel %vm4600, %v4862, 0
    %4874 = vmatprep.subr.bf16.mxu0 0
    %4875 = vmatpush1.bf16.msra.mxu0 %v4872
    %4876 = vmatprep.subr.bf16.mxu0 0
    %4877 = vmatpush1.bf16.msra.mxu0 0
    %4878 = vmatprep.subr.bf16.mxu0 0
    %4879 = vmatpush1.bf16.msra.mxu0 0
    %4880 = vmatprep.subr.bf16.mxu0 0
    %4881 = vmatpush1.bf16.msra.mxu0 0
    %4882 = vmatprep.subr.bf16.mxu0 0
    %4883 = vmatpush1.bf16.msra.mxu0 0
    %4884 = vmatprep.subr.bf16.mxu0 0
    %4885 = vmatpush1.bf16.msra.mxu0 0
    %4886 = vmatprep.subr.bf16.mxu0 0
    %4887 = vmatpush1.bf16.msra.mxu0 0
    %4888 = vmatprep.subr.bf16.mxu0 0
    %4889 = vmatpush1.bf16.msra.mxu0 0
    %4890 = vmatprep.subr.bf16.mxu0 0
    %4891 = vmatpush1.bf16.msra.mxu0 0
    %4892 = vmatprep.subr.bf16.mxu0 0
    %4893 = vmatpush1.bf16.msra.mxu0 0
    %4894 = vmatprep.subr.bf16.mxu0 0
    %4895 = vmatpush1.bf16.msra.mxu0 0
    %4896 = vmatprep.subr.bf16.mxu0 0
    %4897 = vmatpush1.bf16.msra.mxu0 0
    %4898 = vmatprep.subr.bf16.mxu0 0
    %4899 = vmatpush1.bf16.msra.mxu0 0
    %4900 = vmatprep.subr.bf16.mxu0 0
    %4901 = vmatpush1.bf16.msra.mxu0 0
    %4902 = vmatprep.subr.bf16.mxu0 0
    %4903 = vmatpush1.bf16.msra.mxu0 0
    %4904 = vmatprep.subr.bf16.mxu0 0
    %4905 = vmatpush1.bf16.msra.mxu0 0
    %4906 = vmatprep.mubr.bf16.mxu0 0
    %4907 = vmatmul.mubr.bf16.gmra.mrb[0].mxu0 %v4866
    %v4908 = vpop.f32.mrb[0].mxu0
    %v4909 = vadd.f32 0.0, %v4908
    %v4910 = vpop.f32.mrb[0].mxu0
    %v4911 = vpop.f32.mrb[0].mxu0
    %v4912 = vadd.f32 0.0, %v4911
    %v4913 = vpop.f32.mrb[0].mxu0
    %4914 = vmatprep.mubr.bf16.mxu0 0
    %4915 = vmatmul.mubr.bf16.gmra.mrb[0].mxu0 %v4869
    %v4916 = vpop.f32.mrb[0].mxu0
    %v4917 = vadd.f32 0.0, %v4916
    %v4918 = vpop.f32.mrb[0].mxu0
    %v4919 = vpop.f32.mrb[0].mxu0
    %v4920 = vadd.f32 0.0, %v4919
    %v4921 = vpop.f32.mrb[0].mxu0
    %4922 = vdwg.mxu0
    %4927 = vrot.lane.b32.xlu0 %v4909, 16
    %v4928 = vpop.permute.xlu0 %4927
    %4929 = vrot.lane.b32.xlu0 %v4912, 16
    %v4930 = vpop.permute.xlu0 %4929
    %4931 = vrot.lane.b32.xlu0 %v4917, 16
    %v4932 = vpop.permute.xlu0 %4931
    %4933 = vrot.lane.b32.xlu0 %v4920, 16
    %v4934 = vpop.permute.xlu0 %4933
    %v4939 = vadd.f32 %v4849, %v4928
    %v4940 = vadd.f32 %v4850, %v4930
    %v4941 = vadd.f32 %v4851, %v4932
    %v4942 = vadd.f32 %v4852, %v4934
    %4945 = vrot.lane.b32.xlu0 %v4581, 120
    %v4946 = vpop.permute.xlu0 %4945
    %4947 = vrot.lane.b32.xlu0 %v4582, 120
    %v4948 = vpop.permute.xlu0 %4947
    %s4951 = scalar_lea.vmem [#allocation7], 16
    %v4952 = vld [vmem:[%s4951] sm:$0xf]
    %v4953 = vpack.c.bf16 %v4582, %v4581
    %v4954 = vpack.c.bf16 %v4948, %v4946
    %v4956 = vsel %vm2564, %v4953, 0
    %v4959 = vsel %vm2564, %v4954, 0
    %v4962 = vsel %vm4600, %v4952, 0
    %4964 = vmatprep.subr.bf16.mxu0 0
    %4965 = vmatpush1.bf16.msra.mxu0 %v4962
    %4966 = vmatprep.subr.bf16.mxu0 0
    %4967 = vmatpush1.bf16.msra.mxu0 0
    %4968 = vmatprep.subr.bf16.mxu0 0
    %4969 = vmatpush1.bf16.msra.mxu0 0
    %4970 = vmatprep.subr.bf16.mxu0 0
    %4971 = vmatpush1.bf16.msra.mxu0 0
    %4972 = vmatprep.subr.bf16.mxu0 0
    %4973 = vmatpush1.bf16.msra.mxu0 0
    %4974 = vmatprep.subr.bf16.mxu0 0
    %4975 = vmatpush1.bf16.msra.mxu0 0
    %4976 = vmatprep.subr.bf16.mxu0 0
    %4977 = vmatpush1.bf16.msra.mxu0 0
    %4978 = vmatprep.subr.bf16.mxu0 0
    %4979 = vmatpush1.bf16.msra.mxu0 0
    %4980 = vmatprep.subr.bf16.mxu0 0
    %4981 = vmatpush1.bf16.msra.mxu0 0
    %4982 = vmatprep.subr.bf16.mxu0 0
    %4983 = vmatpush1.bf16.msra.mxu0 0
    %4984 = vmatprep.subr.bf16.mxu0 0
    %4985 = vmatpush1.bf16.msra.mxu0 0
    %4986 = vmatprep.subr.bf16.mxu0 0
    %4987 = vmatpush1.bf16.msra.mxu0 0
    %4988 = vmatprep.subr.bf16.mxu0 0
    %4989 = vmatpush1.bf16.msra.mxu0 0
    %4990 = vmatprep.subr.bf16.mxu0 0
    %4991 = vmatpush1.bf16.msra.mxu0 0
    %4992 = vmatprep.subr.bf16.mxu0 0
    %4993 = vmatpush1.bf16.msra.mxu0 0
    %4994 = vmatprep.subr.bf16.mxu0 0
    %4995 = vmatpush1.bf16.msra.mxu0 0
    %4996 = vmatprep.mubr.bf16.mxu0 0
    %4997 = vmatmul.mubr.bf16.gmra.mrb[0].mxu0 %v4956
    %v4998 = vpop.f32.mrb[0].mxu0
    %v4999 = vadd.f32 0.0, %v4998
    %v5000 = vpop.f32.mrb[0].mxu0
    %v5001 = vpop.f32.mrb[0].mxu0
    %v5002 = vadd.f32 0.0, %v5001
    %v5003 = vpop.f32.mrb[0].mxu0
    %5004 = vmatprep.mubr.bf16.mxu0 0
    %5005 = vmatmul.mubr.bf16.gmra.mrb[0].mxu0 %v4959
    %v5006 = vpop.f32.mrb[0].mxu0
    %v5007 = vadd.f32 0.0, %v5006
    %v5008 = vpop.f32.mrb[0].mxu0
    %v5009 = vpop.f32.mrb[0].mxu0
    %v5010 = vadd.f32 0.0, %v5009
    %v5011 = vpop.f32.mrb[0].mxu0
    %5012 = vdwg.mxu0
    %5017 = vrot.lane.b32.xlu0 %v4999, 16
    %v5018 = vpop.permute.xlu0 %5017
    %5019 = vrot.lane.b32.xlu0 %v5002, 16
    %v5020 = vpop.permute.xlu0 %5019
    %5021 = vrot.lane.b32.xlu0 %v5007, 16
    %v5022 = vpop.permute.xlu0 %5021
    %5023 = vrot.lane.b32.xlu0 %v5010, 16
    %v5024 = vpop.permute.xlu0 %5023
    %v5029 = vadd.f32 %v4939, %v5018
    %v5030 = vadd.f32 %v4940, %v5020
    %v5031 = vadd.f32 %v4941, %v5022
    %v5032 = vadd.f32 %v4942, %v5024
    %v5033 = vtanh.pop %v5029
    %v5034 = vtanh.pop %v5030
    %v5035 = vtanh.pop %v5031
    %v5036 = vtanh.pop %v5032
    %5037 = vrot.lane.b32.xlu0 %v76, 6
    %v5038 = vpop.permute.xlu0 %5037
    %5039 = vrot.lane.b32.xlu0 %v77, 6
    %v5040 = vpop.permute.xlu0 %5039
    %5041 = vrot.lane.b32.xlu0 %v2115, 6
    %v5042 = vpop.permute.xlu0 %5041
    %5043 = vrot.lane.b32.xlu0 %v2117, 6
    %v5044 = vpop.permute.xlu0 %5043
    %v5049 = vmul.f32 %v2533, %v5038
    %v5050 = vmul.f32 %v2535, %v5040
    %v5051 = vmul.f32 %v2537, %v5042
    %v5052 = vmul.f32 %v2539, %v5044
    %v5053 = vsub.f32 1.0, %v2533
    %v5054 = vsub.f32 1.0, %v2535
    %v5055 = vsub.f32 1.0, %v2537
    %v5056 = vsub.f32 1.0, %v2539
    %5061 = vrot.lane.b32.xlu0 %v5033, 120
    %v5062 = vpop.permute.xlu0 %5061
    %5063 = vrot.lane.b32.xlu0 %v5034, 120
    %v5064 = vpop.permute.xlu0 %5063
    %5065 = vrot.lane.b32.xlu0 %v5035, 120
    %v5066 = vpop.permute.xlu0 %5065
    %5067 = vrot.lane.b32.xlu0 %v5036, 120
    %v5068 = vpop.permute.xlu0 %5067
    %v5073 = vmul.f32 %v5053, %v5062
    %v5074 = vmul.f32 %v5054, %v5064
    %v5075 = vmul.f32 %v5055, %v5066
    %v5076 = vmul.f32 %v5056, %v5068
    %v5077 = vadd.f32 %v5049, %v5073
    %v5078 = vadd.f32 %v5050, %v5074
    %v5079 = vadd.f32 %v5051, %v5075
    %v5080 = vadd.f32 %v5052, %v5076
    %5085 = vrot.lane.b32.xlu0 %v5077, 120
    %v5086 = vpop.permute.xlu0 %5085
    %5087 = vrot.lane.b32.xlu0 %v5078, 120
    %v5088 = vpop.permute.xlu0 %5087
    %5089 = vrot.lane.b32.xlu0 %v5079, 120
    %v5090 = vpop.permute.xlu0 %5089
    %5091 = vrot.lane.b32.xlu0 %v5080, 120
    %v5092 = vpop.permute.xlu0 %5091
    %5097 = vst.msk [vmem:[%s5] sm:$0xff] %vm2564, %v5086
    %5098 = vst.msk [vmem:[%s5 + $0x8] sm:$0xff] %vm2564, %v5088
    %5099 = vst.msk [vmem:[%s5 + $0x10] sm:$0xff] %vm2564, %v5090
    %5100 = vst.msk [vmem:[%s5 + $0x18] sm:$0xff] %vm2564, %v5092
    // Predicated region
    $region38: #{tpu_custom_call.1} parent=1 // pred_check
      _
    $region39: #{tpu_custom_call.1} parent=1 // pred_check_branch
      %5102 = sbr.rel (0) target = $region41
    $region40: #{tpu_custom_call.1} parent=1 // pred_region
      _
    $region41: #{tpu_custom_call.1} parent=1 // pred_fallthru
      _
    // Predicated region
    $region42: #{tpu_custom_call.1} parent=1 // pred_check
      _
    $region43: #{tpu_custom_call.1} parent=1 // pred_check_branch
      %5104 = sbr.rel (0) target = $region45
    $region44: #{tpu_custom_call.1} parent=1 // pred_region
      _
    $region45: #{tpu_custom_call.1} parent=1 // pred_fallthru
      _
    %5105 = vsyncpa [#allocation3], 1
    %5106 = vsyncpa [#allocation5], 1
    %5107 = vsyncpa [#allocation8], 1

</llo_original>
